<compile_context>
chip_gen: v6e
topology: v6e:2x2x1
jax: 0.10.0
libtpu: 0.0.40
codegen_flags: <defaults>
</compile_context>

<pallas_src>
import functools

import jax
import jax.numpy as jnp
from jax import lax
from jax.experimental import pallas as pl
from jax.experimental.pallas import tpu as pltpu


# ----------------------------- Pallas kernels ------------------------------

def _rel_shift_rows(pos, S, T):
    """Exact Transformer-XL rel-shift (torch view trick) via static slices.

    pos: (S, T) position scores.  Returns (S, T).
    shifted[i, j] = pos[i, j + S-1-i]                        for j <= T-S+i
                  = 0                                        for j == T-S+i+1
                  = pos[i+1, j - (T-S+i) - 2]                otherwise
    """
    rows = []
    for i in range(S):
        k = S - 1 - i
        if k == 0:
            rows.append(pos[i:i + 1, :])
        else:
            segs = [pos[i:i + 1, k:], jnp.zeros((1, 1), pos.dtype)]
            if k > 1:
                segs.append(pos[i + 1:i + 2, :k - 1])
            rows.append(jnp.concatenate(segs, axis=1))
    return jnp.concatenate(rows, axis=0)


def _attention_kernel(x_ref, pos_ref, g_ref, beta_ref, wq_ref, wkv_ref, wp_ref,
                      u_ref, vb_ref, wout_ref, o_ref, *, S, P, H, dh, scale, eps):
    """Fused norm1 + QKV/P projections + XL attention + output projection.

    One grid step = one batch element.
      x_ref   : (1, T, D)   raw [mems; input] rows for this batch element
      pos_ref : (T, D)      positional embeddings
      o_ref   : (1, S, D)   attention block output (post w_out)
    """
    T = S + P
    x = x_ref[0]                                               # (T, D)

    # LayerNorm (only the trailing S "current" rows feed q / the kv-input rows).
    mu = jnp.mean(x, axis=-1, keepdims=True)
    var = jnp.mean((x - mu) ** 2, axis=-1, keepdims=True)
    xn = (x - mu) * lax.rsqrt(var + eps) * g_ref[...] + beta_ref[...]

    row = lax.broadcasted_iota(jnp.int32, (T, 1), 0)
    sel = jnp.where(row >= P, xn, x)                           # mems raw, input normed

    kv = jnp.dot(sel, wkv_ref[...], preferred_element_type=jnp.float32)      # (T, 2Hd)
    q = jnp.dot(xn[P:, :], wq_ref[...], preferred_element_type=jnp.float32)  # (S, Hd)
    p = jnp.dot(pos_ref[...], wp_ref[...], preferred_element_type=jnp.float32)  # (T, Hd)

    dims = (((1,), (1,)), ((), ()))                            # contract on d_head
    head_outs = []
    for h in range(H):
        qh = q[:, h * dh:(h + 1) * dh]                         # (S, dh)
        kh = kv[:, h * dh:(h + 1) * dh]                        # (T, dh)
        vh = kv[:, H * dh + h * dh: H * dh + (h + 1) * dh]     # (T, dh)
        ph = p[:, h * dh:(h + 1) * dh]                         # (T, dh)
        uh = u_ref[h:h + 1, :]                                 # (1, dh)
        vbh = vb_ref[h:h + 1, :]                               # (1, dh)

        cont = lax.dot_general(qh + uh, kh, dims,
                               preferred_element_type=jnp.float32)            # (S, T)
        poss = lax.dot_general(qh + vbh, ph, dims,
                               preferred_element_type=jnp.float32)            # (S, T)
        pshift = _rel_shift_rows(poss, S, T)

        a = (cont + pshift) * scale
        m = jnp.max(a, axis=-1, keepdims=True)
        e = jnp.exp(a - m)
        denom = jnp.sum(e, axis=-1, keepdims=True)
        attn = e * pl.reciprocal(denom, approx=True)           # softmax (EUP recip)

        head_outs.append(jnp.dot(attn, vh,
                                 preferred_element_type=jnp.float32))          # (S, dh)

    av = jnp.concatenate(head_outs, axis=1)                    # (S, H*dh)
    o_ref[0] = jnp.dot(av, wout_ref[...], preferred_element_type=jnp.float32)


def _block_kernel(x_ref, y_ref,
                  g1w_ref, g1bw_ref, g1u_ref, g1bu_ref, g1ug_ref, g1bug_ref,
                  ln2g_ref, ln2b_ref,
                  w1_ref, b1_ref, w2_ref, b2_ref,
                  g2w_ref, g2bw_ref, g2u_ref, g2bu_ref, g2ug_ref, g2bug_ref,
                  o_ref, *, D, bg, eps):
    """Fused gate1 + norm2 + position-wise FF + gate2 on a row tile of tokens."""
    x = x_ref[...]
    y = y_ref[...]

    def gate(xx, yy, w_ref, bw_ref, u_ref, bu_ref, ug_ref, bug_ref):
        # wy = yy @ [Wr|Wz|Wg], ux = xx @ [Ur|Uz]   (fused GEMMs)
        wy = jnp.dot(yy, w_ref[...], preferred_element_type=jnp.float32) + bw_ref[...]
        ux = jnp.dot(xx, u_ref[...], preferred_element_type=jnp.float32) + bu_ref[...]
        r = jax.nn.sigmoid(wy[:, :D] + ux[:, :D])
        z = jax.nn.sigmoid(wy[:, D:2 * D] + ux[:, D:] - bg)
        h = jnp.tanh(wy[:, 2 * D:]
                     + jnp.dot(r * xx, ug_ref[...], preferred_element_type=jnp.float32)
                     + bug_ref[...])
        return (1.0 - z) * xx + z * h

    src = gate(x, y, g1w_ref, g1bw_ref, g1u_ref, g1bu_ref, g1ug_ref, g1bug_ref)

    mu = jnp.mean(src, axis=-1, keepdims=True)
    var = jnp.mean((src - mu) ** 2, axis=-1, keepdims=True)
    srcn = (src - mu) * lax.rsqrt(var + eps) * ln2g_ref[...] + ln2b_ref[...]

    h = jnp.maximum(jnp.dot(srcn, w1_ref[...], preferred_element_type=jnp.float32)
                    + b1_ref[...], 0.0)
    ff = jnp.dot(h, w2_ref[...], preferred_element_type=jnp.float32) + b2_ref[...]

    o_ref[...] = gate(src, ff, g2w_ref, g2bw_ref, g2u_ref, g2bu_ref,
                      g2ug_ref, g2bug_ref)


# ------------------------------ wrappers ------------------------------------

def _whole(a):
    shp = a.shape
    return pl.BlockSpec(shp, lambda i, n=len(shp): (0,) * n)


def _row_tile(n, target=256):
    """Largest row-tile (multiple of 8, dividing n, <= target), >=2 grid steps."""
    if n % 8 != 0:
        return n                          # fall back to whole array (tiny case)
    t = min(target, n)
    t -= t % 8
    if t == n and n >= 16:
        t = n // 2
        t -= t % 8
    while t > 8 and n % t != 0:
        t -= 8
    if t <= 0 or n % t != 0:
        return n
    return t


def attention_forward(params, x_cat, pos2d, u, v, S, P, H, dh):
    B, T, D = x_cat.shape
    scale = 1.0 / (dh ** 0.5)
    kern = functools.partial(_attention_kernel, S=S, P=P, H=H, dh=dh,
                             scale=scale, eps=1e-5)
    in_specs = [
        pl.BlockSpec((1, T, D), lambda b: (b, 0, 0)),   # x_cat, per-batch block
        _whole(pos2d),
        _whole(params['ln1_g']), _whole(params['ln1_b']),
        _whole(params['w_q']), _whole(params['w_kv']), _whole(params['w_p']),
        _whole(u), _whole(v),
        _whole(params['w_out']),
    ]
    return pl.pallas_call(
        kern,
        grid=(B,),
        in_specs=in_specs,
        out_specs=pl.BlockSpec((1, S, D), lambda b: (b, 0, 0)),
        out_shape=jax.ShapeDtypeStruct((B, S, D), jnp.float32),
        compiler_params=pltpu.CompilerParams(dimension_semantics=("parallel",)),
    )(x_cat, pos2d, params['ln1_g'], params['ln1_b'],
      params['w_q'], params['w_kv'], params['w_p'], u, v, params['w_out'])


def _fuse_gate(p):
    w = jnp.concatenate([p['wr'], p['wz'], p['wg']], axis=1)     # (D, 3D)
    bw = jnp.concatenate([p['br'], p['bz'], p['bg']], axis=1)    # (1, 3D)
    uu = jnp.concatenate([p['ur'], p['uz']], axis=1)             # (D, 2D)
    bu = jnp.concatenate([p['bur'], p['buz']], axis=1)           # (1, 2D)
    return w, bw, uu, bu, p['ug'], p['bug']


def block_forward(params, x_tok, y_tok):
    N, D = x_tok.shape
    g1 = _fuse_gate(params['gate1'])
    g2 = _fuse_gate(params['gate2'])
    ffp = params['ff']
    tile = _row_tile(N)
    kern = functools.partial(_block_kernel, D=D, bg=0.1, eps=1e-5)

    row_spec = pl.BlockSpec((tile, D), lambda i: (i, 0))
    args = (x_tok, y_tok,
            *g1,
            params['ln2_g'], params['ln2_b'],
            ffp['w1'], ffp['b1'], ffp['w2'], ffp['b2'],
            *g2)
    in_specs = [row_spec, row_spec] + [_whole(a) for a in args[2:]]
    return pl.pallas_call(
        kern,
        grid=(N // tile,),
        in_specs=in_specs,
        out_specs=row_spec,
        out_shape=jax.ShapeDtypeStruct((N, D), jnp.float32),
        compiler_params=pltpu.CompilerParams(dimension_semantics=("parallel",)),
    )(*args)


# ------------------------- full layer forward -------------------------------

def stable_transformer_layer(params, input_, pos_embs, u, v, mems,
                             n_heads, d_head_inner):
    S, B, D = input_.shape
    P = mems.shape[0]
    T = S + P

    # batch-major activations so the attention kernel slices per-batch blocks.
    x_cat = jnp.transpose(jnp.concatenate([mems, input_], axis=0), (1, 0, 2))  # (B,T,D)
    pos2d = pos_embs.reshape(T, D)

    mha = attention_forward(params, x_cat, pos2d, u, v,
                            S, P, n_heads, d_head_inner)        # (B, S, D)

    x_tok = x_cat[:, P:, :].reshape(B * S, D)                   # raw input tokens
    y_tok = mha.reshape(B * S, D)
    out_tok = block_forward(params, x_tok, y_tok)               # (B*S, D)

    return jnp.transpose(out_tok.reshape(B, S, D), (1, 0, 2))   # (S, B, D)


# ------------------------- deterministic parameters -------------------------

def init_params(key, d_input, n_heads, d_head_inner, d_ff_inner):
    keys = iter(jax.random.split(key, 64))

    def w(shape, scale=0.05):
        return (scale * jax.random.normal(next(keys), shape)).astype(jnp.float32)

    def gate_params():
        p = {}
        for name in ('r', 'z', 'g'):
            p['w' + name] = w((d_input, d_input))
            p['b' + name] = w((1, d_input))
            p['u' + name] = w((d_input, d_input))
            p['bu' + name] = w((1, d_input))
        return p

    D, H, dh, dff = d_input, n_heads, d_head_inner, d_ff_inner
    return {
        'ln1_g': jnp.ones((1, D), jnp.float32),
        'ln1_b': jnp.zeros((1, D), jnp.float32),
        'ln2_g': jnp.ones((1, D), jnp.float32),
        'ln2_b': jnp.zeros((1, D), jnp.float32),
        'w_kv': w((D, 2 * H * dh)),
        'w_q': w((D, H * dh)),
        'w_p': w((D, H * dh)),
        'w_out': w((H * dh, D)),
        'ff': {'w1': w((D, dff)), 'b1': w((1, dff)),
               'w2': w((dff, D)), 'b2': w((1, D))},
        'gate1': gate_params(),
        'gate2': gate_params(),
    }


# ------------------------- pure-JAX reference (check) ------------------------

def reference_forward(params, input_, pos_embs, u, v, mems, n_heads, d_head_inner):
    hp = lax.Precision.HIGHEST

    def lin(x, w, b=None):
        y = jnp.dot(x, w, precision=hp)
        return y if b is None else y + b

    def ln(x, g, b):
        mu = jnp.mean(x, -1, keepdims=True)
        var = jnp.mean((x - mu) ** 2, -1, keepdims=True)
        return (x - mu) / jnp.sqrt(var + 1e-5) * g + b

    def gate(x, y, p, bg=0.1):
        r = jax.nn.sigmoid(lin(y, p['wr'], p['br']) + lin(x, p['ur'], p['bur']))
        z = jax.nn.sigmoid(lin(y, p['wz'], p['bz']) + lin(x, p['uz'], p['buz']) - bg)
        h = jnp.tanh(lin(y, p['wg'], p['bg']) + lin(r * x, p['ug'], p['bug']))
        return (1 - z) * x + z * h

    S, B, D = input_.shape
    P = mems.shape[0]
    T = S + P
    H, dh = n_heads, d_head_inner
    scale = 1.0 / (dh ** 0.5)

    src2 = ln(input_, params['ln1_g'], params['ln1_b'])
    cat = jnp.concatenate([mems, src2], axis=0)
    kv = lin(cat, params['w_kv'])
    k_t, v_t = jnp.split(kv, 2, axis=-1)
    q_t = lin(src2, params['w_q'])
    p_t = lin(pos_embs, params['w_p'])
    q4 = q_t.reshape(S, B, H, dh)
    k4 = k_t.reshape(T, B, H, dh)
    v4 = v_t.reshape(T, B, H, dh)
    p3 = p_t.reshape(T, H, dh)
    content = jnp.einsum('ibhd,jbhd->ijbh', q4 + u, k4, precision=hp)
    position = jnp.einsum('ibhd,jhd->ijbh', q4 + v, p3, precision=hp)
    zp = jnp.zeros((S, 1, B, H), position.dtype)
    padded = jnp.concatenate([zp, position], axis=1)
    position = padded.reshape((S * (T + 1), B, H))[S:].reshape(S, T, B, H)
    attn = jax.nn.softmax((content + position) * scale, axis=1)
    awv = jnp.einsum('ijbh,jbhd->ibhd', attn, v4, precision=hp).reshape(S, B, H * dh)
    mha_out = lin(awv, params['w_out'])
    src = gate(input_, mha_out, params['gate1'])
    src_n = ln(src, params['ln2_g'], params['ln2_b'])
    ff = lin(jnp.maximum(lin(src_n, params['ff']['w1'], params['ff']['b1']), 0.0),
             params['ff']['w2'], params['ff']['b2'])
    return gate(src, ff, params['gate2'])


# ---------------------------------- main -------------------------------------

if __name__ == "__main__":
    n_heads, d_input, d_head_inner, d_ff_inner = 4, 32, 8, 64
    seq, prev_seq, batch = 8, 4, 2

    key = jax.random.PRNGKey(0)
    kp, k1, k2, k3, k4, k5 = jax.random.split(key, 6)
    params = init_params(kp, d_input, n_heads, d_head_inner, d_ff_inner)

    input_ = jax.random.normal(k1, (seq, batch, d_input), jnp.float32)
    pos_embs = jax.random.normal(k2, (seq + prev_seq, 1, d_input), jnp.float32)
    mems = jax.random.normal(k3, (prev_seq, batch, d_input), jnp.float32)
    u = (0.05 * jax.random.normal(k4, (n_heads, d_head_inner))).astype(jnp.float32)
    v = (0.05 * jax.random.normal(k5, (n_heads, d_head_inner))).astype(jnp.float32)

    fwd = jax.jit(stable_transformer_layer, static_argnums=(6, 7))
    out = fwd(params, input_, pos_embs, u, v, mems, n_heads, d_head_inner)
    out = jax.block_until_ready(out)

    ref = reference_forward(params, input_, pos_embs, u, v, mems,
                            n_heads, d_head_inner)
    assert out.shape == (seq, batch, d_input)
    err = float(jnp.max(jnp.abs(out - ref)))
    assert jnp.allclose(out, ref, atol=2e-2, rtol=2e-2), f"max abs err {err}"
    print("KERNEL_OK")
</pallas_src>

<mosaic_0001>
module attributes {stable_mosaic.version = 11 : i64} {
  func.func @_attention_kernel(%arg0: i32, %arg1: memref<1x12x32xf32, #tpu.memory_space<vmem>>, %arg2: memref<12x32xf32, #tpu.memory_space<vmem>>, %arg3: memref<1x32xf32, #tpu.memory_space<vmem>>, %arg4: memref<1x32xf32, #tpu.memory_space<vmem>>, %arg5: memref<32x32xf32, #tpu.memory_space<vmem>>, %arg6: memref<32x64xf32, #tpu.memory_space<vmem>>, %arg7: memref<32x32xf32, #tpu.memory_space<vmem>>, %arg8: memref<4x8xf32, #tpu.memory_space<vmem>>, %arg9: memref<4x8xf32, #tpu.memory_space<vmem>>, %arg10: memref<32x32xf32, #tpu.memory_space<vmem>>, %arg11: memref<1x8x32xf32, #tpu.memory_space<vmem>>) attributes {dimension_semantics = [#tpu.dimension_semantics<parallel>], iteration_bounds = array<i64: 2>, scalar_prefetch = 0 : i64, scratch_operands = 0 : i64, tpu.core_type = #tpu.core_type<tc>, window_params = [{transform_indices = @transform_0, window_bounds = array<i64: 1, 12, 32>}, {pipeline_mode = #tpu.pipeline_mode<synchronous>, transform_indices = @transform_1, window_bounds = array<i64: 12, 32>}, {pipeline_mode = #tpu.pipeline_mode<synchronous>, transform_indices = @transform_2, window_bounds = array<i64: 1, 32>}, {pipeline_mode = #tpu.pipeline_mode<synchronous>, transform_indices = @transform_3, window_bounds = array<i64: 1, 32>}, {pipeline_mode = #tpu.pipeline_mode<synchronous>, transform_indices = @transform_4, window_bounds = array<i64: 32, 32>}, {pipeline_mode = #tpu.pipeline_mode<synchronous>, transform_indices = @transform_5, window_bounds = array<i64: 32, 64>}, {pipeline_mode = #tpu.pipeline_mode<synchronous>, transform_indices = @transform_6, window_bounds = array<i64: 32, 32>}, {pipeline_mode = #tpu.pipeline_mode<synchronous>, transform_indices = @transform_7, window_bounds = array<i64: 4, 8>}, {pipeline_mode = #tpu.pipeline_mode<synchronous>, transform_indices = @transform_8, window_bounds = array<i64: 4, 8>}, {pipeline_mode = #tpu.pipeline_mode<synchronous>, transform_indices = @transform_9, window_bounds = array<i64: 32, 32>}, {transform_indices = @transform_10, window_bounds = array<i64: 1, 8, 32>}]} {
    %c0 = arith.constant 0 : index
    %c0_0 = arith.constant 0 : index
    %c0_1 = arith.constant 0 : index
    %0 = vector.load %arg1[%c0, %c0_0, %c0_1] : memref<1x12x32xf32, #tpu.memory_space<vmem>>, vector<1x12x32xf32>
    %1 = vector.shape_cast %0 : vector<1x12x32xf32> to vector<12x32xf32>
    %cst = arith.constant dense<0.000000e+00> : vector<12xf32>
    %2 = vector.multi_reduction <add>, %1, %cst [1] : vector<12x32xf32> to vector<12xf32>
    %3 = vector.shape_cast %2 : vector<12xf32> to vector<12x1xf32>
    %cst_2 = arith.constant 3.200000e+01 : f32
    %4 = vector.broadcast %cst_2 : f32 to vector<12x1xf32>
    %5 = arith.divf %3, %4 : vector<12x1xf32>
    %6 = vector.broadcast %5 : vector<12x1xf32> to vector<12x32xf32>
    %7 = arith.subf %1, %6 : vector<12x32xf32>
    %8 = arith.mulf %7, %7 : vector<12x32xf32>
    %cst_3 = arith.constant dense<0.000000e+00> : vector<12xf32>
    %9 = vector.multi_reduction <add>, %8, %cst_3 [1] : vector<12x32xf32> to vector<12xf32>
    %10 = vector.shape_cast %9 : vector<12xf32> to vector<12x1xf32>
    %cst_4 = arith.constant 3.200000e+01 : f32
    %11 = vector.broadcast %cst_4 : f32 to vector<12x1xf32>
    %12 = arith.divf %10, %11 : vector<12x1xf32>
    %13 = vector.broadcast %5 : vector<12x1xf32> to vector<12x32xf32>
    %14 = arith.subf %1, %13 : vector<12x32xf32>
    %cst_5 = arith.constant 9.99999974E-6 : f32
    %15 = vector.broadcast %cst_5 : f32 to vector<12x1xf32>
    %16 = arith.addf %12, %15 : vector<12x1xf32>
    %17 = math.rsqrt %16 : vector<12x1xf32>
    %18 = vector.broadcast %17 : vector<12x1xf32> to vector<12x32xf32>
    %19 = arith.mulf %14, %18 : vector<12x32xf32>
    %c0_6 = arith.constant 0 : index
    %c0_7 = arith.constant 0 : index
    %20 = vector.load %arg3[%c0_6, %c0_7] : memref<1x32xf32, #tpu.memory_space<vmem>>, vector<1x32xf32>
    %21 = vector.broadcast %20 : vector<1x32xf32> to vector<12x32xf32>
    %22 = arith.mulf %19, %21 : vector<12x32xf32>
    %c0_8 = arith.constant 0 : index
    %c0_9 = arith.constant 0 : index
    %23 = vector.load %arg4[%c0_8, %c0_9] : memref<1x32xf32, #tpu.memory_space<vmem>>, vector<1x32xf32>
    %24 = vector.broadcast %23 : vector<1x32xf32> to vector<12x32xf32>
    %25 = arith.addf %22, %24 : vector<12x32xf32>
    %26 = tpu.iota {dimensions = array<i32: 0>} : vector<12x1xi32>
    %c4_i32 = arith.constant 4 : i32
    %27 = vector.broadcast %c4_i32 : i32 to vector<12x1xi32>
    %28 = arith.cmpi sge, %26, %27 : vector<12x1xi32>
    %29 = vector.shape_cast %28 : vector<12x1xi1> to vector<12x1xi1>
    %30 = vector.broadcast %29 : vector<12x1xi1> to vector<12x32xi1>
    %31 = arith.select %30, %25, %1 : vector<12x32xi1>, vector<12x32xf32>
    %c0_10 = arith.constant 0 : index
    %c0_11 = arith.constant 0 : index
    %32 = vector.load %arg6[%c0_10, %c0_11] : memref<32x64xf32, #tpu.memory_space<vmem>>, vector<32x64xf32>
    %cst_12 = arith.constant dense<0.000000e+00> : vector<12x64xf32>
    %33 = tpu.matmul %31, %32, %cst_12 {dimension_numbers = #tpu.dot_dimension_numbers<[1], [0], [0], [1], [0, 0, 1, 1], [], []>} : vector<12x32xf32>, vector<32x64xf32>, vector<12x64xf32> -> vector<12x64xf32>
    %34 = vector.extract_strided_slice %25 {offsets = [4, 0], sizes = [8, 32], strides = [1, 1]} : vector<12x32xf32> to vector<8x32xf32>
    %c0_13 = arith.constant 0 : index
    %c0_14 = arith.constant 0 : index
    %35 = vector.load %arg5[%c0_13, %c0_14] : memref<32x32xf32, #tpu.memory_space<vmem>>, vector<32x32xf32>
    %cst_15 = arith.constant dense<0.000000e+00> : vector<8x32xf32>
    %36 = tpu.matmul %34, %35, %cst_15 {dimension_numbers = #tpu.dot_dimension_numbers<[1], [0], [0], [1], [0, 0, 1, 1], [], []>} : vector<8x32xf32>, vector<32x32xf32>, vector<8x32xf32> -> vector<8x32xf32>
    %c0_16 = arith.constant 0 : index
    %c0_17 = arith.constant 0 : index
    %37 = vector.load %arg2[%c0_16, %c0_17] : memref<12x32xf32, #tpu.memory_space<vmem>>, vector<12x32xf32>
    %c0_18 = arith.constant 0 : index
    %c0_19 = arith.constant 0 : index
    %38 = vector.load %arg7[%c0_18, %c0_19] : memref<32x32xf32, #tpu.memory_space<vmem>>, vector<32x32xf32>
    %cst_20 = arith.constant dense<0.000000e+00> : vector<12x32xf32>
    %39 = tpu.matmul %37, %38, %cst_20 {dimension_numbers = #tpu.dot_dimension_numbers<[1], [0], [0], [1], [0, 0, 1, 1], [], []>} : vector<12x32xf32>, vector<32x32xf32>, vector<12x32xf32> -> vector<12x32xf32>
    %40 = vector.extract_strided_slice %36 {offsets = [0, 0], sizes = [8, 8], strides = [1, 1]} : vector<8x32xf32> to vector<8x8xf32>
    %41 = vector.extract_strided_slice %33 {offsets = [0, 0], sizes = [12, 8], strides = [1, 1]} : vector<12x64xf32> to vector<12x8xf32>
    %42 = vector.extract_strided_slice %33 {offsets = [0, 32], sizes = [12, 8], strides = [1, 1]} : vector<12x64xf32> to vector<12x8xf32>
    %43 = vector.extract_strided_slice %39 {offsets = [0, 0], sizes = [12, 8], strides = [1, 1]} : vector<12x32xf32> to vector<12x8xf32>
    %c0_21 = arith.constant 0 : index
    %c0_22 = arith.constant 0 : index
    %44 = vector.load %arg8[%c0_21, %c0_22] : memref<4x8xf32, #tpu.memory_space<vmem>>, vector<1x8xf32>
    %c0_23 = arith.constant 0 : index
    %c0_24 = arith.constant 0 : index
    %45 = vector.load %arg9[%c0_23, %c0_24] : memref<4x8xf32, #tpu.memory_space<vmem>>, vector<1x8xf32>
    %46 = vector.broadcast %44 : vector<1x8xf32> to vector<8x8xf32>
    %47 = arith.addf %40, %46 : vector<8x8xf32>
    %cst_25 = arith.constant dense<0.000000e+00> : vector<8x12xf32>
    %48 = tpu.matmul %47, %41, %cst_25 {dimension_numbers = #tpu.dot_dimension_numbers<[1], [1], [0], [0], [0, 0, 1, 0], [], []>} : vector<8x8xf32>, vector<12x8xf32>, vector<8x12xf32> -> vector<8x12xf32>
    %49 = vector.broadcast %45 : vector<1x8xf32> to vector<8x8xf32>
    %50 = arith.addf %40, %49 : vector<8x8xf32>
    %cst_26 = arith.constant dense<0.000000e+00> : vector<8x12xf32>
    %51 = tpu.matmul %50, %43, %cst_26 {dimension_numbers = #tpu.dot_dimension_numbers<[1], [1], [0], [0], [0, 0, 1, 0], [], []>} : vector<8x8xf32>, vector<12x8xf32>, vector<8x12xf32> -> vector<8x12xf32>
    %52 = vector.extract_strided_slice %51 {offsets = [0, 7], sizes = [1, 5], strides = [1, 1]} : vector<8x12xf32> to vector<1x5xf32>
    %cst_27 = arith.constant 0.000000e+00 : f32
    %53 = vector.broadcast %cst_27 : f32 to vector<1x1xf32>
    %54 = vector.extract_strided_slice %51 {offsets = [1, 0], sizes = [1, 6], strides = [1, 1]} : vector<8x12xf32> to vector<1x6xf32>
    %55 = tpu.concatenate %52, %53, %54 in 1 : vector<1x5xf32>, vector<1x1xf32>, vector<1x6xf32> -> vector<1x12xf32>
    %56 = vector.extract_strided_slice %51 {offsets = [1, 6], sizes = [1, 6], strides = [1, 1]} : vector<8x12xf32> to vector<1x6xf32>
    %cst_28 = arith.constant 0.000000e+00 : f32
    %57 = vector.broadcast %cst_28 : f32 to vector<1x1xf32>
    %58 = vector.extract_strided_slice %51 {offsets = [2, 0], sizes = [1, 5], strides = [1, 1]} : vector<8x12xf32> to vector<1x5xf32>
    %59 = tpu.concatenate %56, %57, %58 in 1 : vector<1x6xf32>, vector<1x1xf32>, vector<1x5xf32> -> vector<1x12xf32>
    %60 = vector.extract_strided_slice %51 {offsets = [2, 5], sizes = [1, 7], strides = [1, 1]} : vector<8x12xf32> to vector<1x7xf32>
    %cst_29 = arith.constant 0.000000e+00 : f32
    %61 = vector.broadcast %cst_29 : f32 to vector<1x1xf32>
    %62 = vector.extract_strided_slice %51 {offsets = [3, 0], sizes = [1, 4], strides = [1, 1]} : vector<8x12xf32> to vector<1x4xf32>
    %63 = tpu.concatenate %60, %61, %62 in 1 : vector<1x7xf32>, vector<1x1xf32>, vector<1x4xf32> -> vector<1x12xf32>
    %64 = vector.extract_strided_slice %51 {offsets = [3, 4], sizes = [1, 8], strides = [1, 1]} : vector<8x12xf32> to vector<1x8xf32>
    %cst_30 = arith.constant 0.000000e+00 : f32
    %65 = vector.broadcast %cst_30 : f32 to vector<1x1xf32>
    %66 = vector.extract_strided_slice %51 {offsets = [4, 0], sizes = [1, 3], strides = [1, 1]} : vector<8x12xf32> to vector<1x3xf32>
    %67 = tpu.concatenate %64, %65, %66 in 1 : vector<1x8xf32>, vector<1x1xf32>, vector<1x3xf32> -> vector<1x12xf32>
    %68 = vector.extract_strided_slice %51 {offsets = [4, 3], sizes = [1, 9], strides = [1, 1]} : vector<8x12xf32> to vector<1x9xf32>
    %cst_31 = arith.constant 0.000000e+00 : f32
    %69 = vector.broadcast %cst_31 : f32 to vector<1x1xf32>
    %70 = vector.extract_strided_slice %51 {offsets = [5, 0], sizes = [1, 2], strides = [1, 1]} : vector<8x12xf32> to vector<1x2xf32>
    %71 = tpu.concatenate %68, %69, %70 in 1 : vector<1x9xf32>, vector<1x1xf32>, vector<1x2xf32> -> vector<1x12xf32>
    %72 = vector.extract_strided_slice %51 {offsets = [5, 2], sizes = [1, 10], strides = [1, 1]} : vector<8x12xf32> to vector<1x10xf32>
    %cst_32 = arith.constant 0.000000e+00 : f32
    %73 = vector.broadcast %cst_32 : f32 to vector<1x1xf32>
    %74 = vector.extract_strided_slice %51 {offsets = [6, 0], sizes = [1, 1], strides = [1, 1]} : vector<8x12xf32> to vector<1x1xf32>
    %75 = tpu.concatenate %72, %73, %74 in 1 : vector<1x10xf32>, vector<1x1xf32>, vector<1x1xf32> -> vector<1x12xf32>
    %76 = vector.extract_strided_slice %51 {offsets = [6, 1], sizes = [1, 11], strides = [1, 1]} : vector<8x12xf32> to vector<1x11xf32>
    %cst_33 = arith.constant 0.000000e+00 : f32
    %77 = vector.broadcast %cst_33 : f32 to vector<1x1xf32>
    %78 = tpu.concatenate %76, %77 in 1 : vector<1x11xf32>, vector<1x1xf32> -> vector<1x12xf32>
    %79 = vector.extract_strided_slice %51 {offsets = [7, 0], sizes = [1, 12], strides = [1, 1]} : vector<8x12xf32> to vector<1x12xf32>
    %80 = tpu.concatenate %55, %59, %63, %67, %71, %75, %78, %79 in 0 : vector<1x12xf32>, vector<1x12xf32>, vector<1x12xf32>, vector<1x12xf32>, vector<1x12xf32>, vector<1x12xf32>, vector<1x12xf32>, vector<1x12xf32> -> vector<8x12xf32>
    %81 = arith.addf %48, %80 : vector<8x12xf32>
    %cst_34 = arith.constant 0.353553385 : f32
    %82 = vector.broadcast %cst_34 : f32 to vector<8x12xf32>
    %83 = arith.mulf %81, %82 : vector<8x12xf32>
    %cst_35 = arith.constant dense<0xFF800000> : vector<8xf32>
    %84 = vector.multi_reduction <maximumf>, %83, %cst_35 [1] : vector<8x12xf32> to vector<8xf32>
    %85 = vector.shape_cast %84 : vector<8xf32> to vector<8x1xf32>
    %86 = vector.broadcast %85 : vector<8x1xf32> to vector<8x12xf32>
    %87 = arith.subf %83, %86 : vector<8x12xf32>
    %88 = math.exp %87 : vector<8x12xf32>
    %cst_36 = arith.constant dense<0.000000e+00> : vector<8xf32>
    %89 = vector.multi_reduction <add>, %88, %cst_36 [1] : vector<8x12xf32> to vector<8xf32>
    %90 = vector.shape_cast %89 : vector<8xf32> to vector<8x1xf32>
    %91 = tpu.reciprocal %90 {approx = true} : vector<8x1xf32> -> vector<8x1xf32>
    %92 = vector.broadcast %91 : vector<8x1xf32> to vector<8x12xf32>
    %93 = arith.mulf %88, %92 : vector<8x12xf32>
    %cst_37 = arith.constant dense<0.000000e+00> : vector<8x8xf32>
    %94 = tpu.matmul %93, %42, %cst_37 {dimension_numbers = #tpu.dot_dimension_numbers<[1], [0], [0], [1], [0, 0, 1, 1], [], []>} : vector<8x12xf32>, vector<12x8xf32>, vector<8x8xf32> -> vector<8x8xf32>
    %95 = vector.extract_strided_slice %36 {offsets = [0, 8], sizes = [8, 8], strides = [1, 1]} : vector<8x32xf32> to vector<8x8xf32>
    %96 = vector.extract_strided_slice %33 {offsets = [0, 8], sizes = [12, 8], strides = [1, 1]} : vector<12x64xf32> to vector<12x8xf32>
    %97 = vector.extract_strided_slice %33 {offsets = [0, 40], sizes = [12, 8], strides = [1, 1]} : vector<12x64xf32> to vector<12x8xf32>
    %98 = vector.extract_strided_slice %39 {offsets = [0, 8], sizes = [12, 8], strides = [1, 1]} : vector<12x32xf32> to vector<12x8xf32>
    %c1 = arith.constant 1 : index
    %c0_38 = arith.constant 0 : index
    %99 = vector.load %arg8[%c1, %c0_38] : memref<4x8xf32, #tpu.memory_space<vmem>>, vector<1x8xf32>
    %c1_39 = arith.constant 1 : index
    %c0_40 = arith.constant 0 : index
    %100 = vector.load %arg9[%c1_39, %c0_40] : memref<4x8xf32, #tpu.memory_space<vmem>>, vector<1x8xf32>
    %101 = vector.broadcast %99 : vector<1x8xf32> to vector<8x8xf32>
    %102 = arith.addf %95, %101 : vector<8x8xf32>
    %cst_41 = arith.constant dense<0.000000e+00> : vector<8x12xf32>
    %103 = tpu.matmul %102, %96, %cst_41 {dimension_numbers = #tpu.dot_dimension_numbers<[1], [1], [0], [0], [0, 0, 1, 0], [], []>} : vector<8x8xf32>, vector<12x8xf32>, vector<8x12xf32> -> vector<8x12xf32>
    %104 = vector.broadcast %100 : vector<1x8xf32> to vector<8x8xf32>
    %105 = arith.addf %95, %104 : vector<8x8xf32>
    %cst_42 = arith.constant dense<0.000000e+00> : vector<8x12xf32>
    %106 = tpu.matmul %105, %98, %cst_42 {dimension_numbers = #tpu.dot_dimension_numbers<[1], [1], [0], [0], [0, 0, 1, 0], [], []>} : vector<8x8xf32>, vector<12x8xf32>, vector<8x12xf32> -> vector<8x12xf32>
    %107 = vector.extract_strided_slice %106 {offsets = [0, 7], sizes = [1, 5], strides = [1, 1]} : vector<8x12xf32> to vector<1x5xf32>
    %cst_43 = arith.constant 0.000000e+00 : f32
    %108 = vector.broadcast %cst_43 : f32 to vector<1x1xf32>
    %109 = vector.extract_strided_slice %106 {offsets = [1, 0], sizes = [1, 6], strides = [1, 1]} : vector<8x12xf32> to vector<1x6xf32>
    %110 = tpu.concatenate %107, %108, %109 in 1 : vector<1x5xf32>, vector<1x1xf32>, vector<1x6xf32> -> vector<1x12xf32>
    %111 = vector.extract_strided_slice %106 {offsets = [1, 6], sizes = [1, 6], strides = [1, 1]} : vector<8x12xf32> to vector<1x6xf32>
    %cst_44 = arith.constant 0.000000e+00 : f32
    %112 = vector.broadcast %cst_44 : f32 to vector<1x1xf32>
    %113 = vector.extract_strided_slice %106 {offsets = [2, 0], sizes = [1, 5], strides = [1, 1]} : vector<8x12xf32> to vector<1x5xf32>
    %114 = tpu.concatenate %111, %112, %113 in 1 : vector<1x6xf32>, vector<1x1xf32>, vector<1x5xf32> -> vector<1x12xf32>
    %115 = vector.extract_strided_slice %106 {offsets = [2, 5], sizes = [1, 7], strides = [1, 1]} : vector<8x12xf32> to vector<1x7xf32>
    %cst_45 = arith.constant 0.000000e+00 : f32
    %116 = vector.broadcast %cst_45 : f32 to vector<1x1xf32>
    %117 = vector.extract_strided_slice %106 {offsets = [3, 0], sizes = [1, 4], strides = [1, 1]} : vector<8x12xf32> to vector<1x4xf32>
    %118 = tpu.concatenate %115, %116, %117 in 1 : vector<1x7xf32>, vector<1x1xf32>, vector<1x4xf32> -> vector<1x12xf32>
    %119 = vector.extract_strided_slice %106 {offsets = [3, 4], sizes = [1, 8], strides = [1, 1]} : vector<8x12xf32> to vector<1x8xf32>
    %cst_46 = arith.constant 0.000000e+00 : f32
    %120 = vector.broadcast %cst_46 : f32 to vector<1x1xf32>
    %121 = vector.extract_strided_slice %106 {offsets = [4, 0], sizes = [1, 3], strides = [1, 1]} : vector<8x12xf32> to vector<1x3xf32>
    %122 = tpu.concatenate %119, %120, %121 in 1 : vector<1x8xf32>, vector<1x1xf32>, vector<1x3xf32> -> vector<1x12xf32>
    %123 = vector.extract_strided_slice %106 {offsets = [4, 3], sizes = [1, 9], strides = [1, 1]} : vector<8x12xf32> to vector<1x9xf32>
    %cst_47 = arith.constant 0.000000e+00 : f32
    %124 = vector.broadcast %cst_47 : f32 to vector<1x1xf32>
    %125 = vector.extract_strided_slice %106 {offsets = [5, 0], sizes = [1, 2], strides = [1, 1]} : vector<8x12xf32> to vector<1x2xf32>
    %126 = tpu.concatenate %123, %124, %125 in 1 : vector<1x9xf32>, vector<1x1xf32>, vector<1x2xf32> -> vector<1x12xf32>
    %127 = vector.extract_strided_slice %106 {offsets = [5, 2], sizes = [1, 10], strides = [1, 1]} : vector<8x12xf32> to vector<1x10xf32>
    %cst_48 = arith.constant 0.000000e+00 : f32
    %128 = vector.broadcast %cst_48 : f32 to vector<1x1xf32>
    %129 = vector.extract_strided_slice %106 {offsets = [6, 0], sizes = [1, 1], strides = [1, 1]} : vector<8x12xf32> to vector<1x1xf32>
    %130 = tpu.concatenate %127, %128, %129 in 1 : vector<1x10xf32>, vector<1x1xf32>, vector<1x1xf32> -> vector<1x12xf32>
    %131 = vector.extract_strided_slice %106 {offsets = [6, 1], sizes = [1, 11], strides = [1, 1]} : vector<8x12xf32> to vector<1x11xf32>
    %cst_49 = arith.constant 0.000000e+00 : f32
    %132 = vector.broadcast %cst_49 : f32 to vector<1x1xf32>
    %133 = tpu.concatenate %131, %132 in 1 : vector<1x11xf32>, vector<1x1xf32> -> vector<1x12xf32>
    %134 = vector.extract_strided_slice %106 {offsets = [7, 0], sizes = [1, 12], strides = [1, 1]} : vector<8x12xf32> to vector<1x12xf32>
    %135 = tpu.concatenate %110, %114, %118, %122, %126, %130, %133, %134 in 0 : vector<1x12xf32>, vector<1x12xf32>, vector<1x12xf32>, vector<1x12xf32>, vector<1x12xf32>, vector<1x12xf32>, vector<1x12xf32>, vector<1x12xf32> -> vector<8x12xf32>
    %136 = arith.addf %103, %135 : vector<8x12xf32>
    %cst_50 = arith.constant 0.353553385 : f32
    %137 = vector.broadcast %cst_50 : f32 to vector<8x12xf32>
    %138 = arith.mulf %136, %137 : vector<8x12xf32>
    %cst_51 = arith.constant dense<0xFF800000> : vector<8xf32>
    %139 = vector.multi_reduction <maximumf>, %138, %cst_51 [1] : vector<8x12xf32> to vector<8xf32>
    %140 = vector.shape_cast %139 : vector<8xf32> to vector<8x1xf32>
    %141 = vector.broadcast %140 : vector<8x1xf32> to vector<8x12xf32>
    %142 = arith.subf %138, %141 : vector<8x12xf32>
    %143 = math.exp %142 : vector<8x12xf32>
    %cst_52 = arith.constant dense<0.000000e+00> : vector<8xf32>
    %144 = vector.multi_reduction <add>, %143, %cst_52 [1] : vector<8x12xf32> to vector<8xf32>
    %145 = vector.shape_cast %144 : vector<8xf32> to vector<8x1xf32>
    %146 = tpu.reciprocal %145 {approx = true} : vector<8x1xf32> -> vector<8x1xf32>
    %147 = vector.broadcast %146 : vector<8x1xf32> to vector<8x12xf32>
    %148 = arith.mulf %143, %147 : vector<8x12xf32>
    %cst_53 = arith.constant dense<0.000000e+00> : vector<8x8xf32>
    %149 = tpu.matmul %148, %97, %cst_53 {dimension_numbers = #tpu.dot_dimension_numbers<[1], [0], [0], [1], [0, 0, 1, 1], [], []>} : vector<8x12xf32>, vector<12x8xf32>, vector<8x8xf32> -> vector<8x8xf32>
    %150 = vector.extract_strided_slice %36 {offsets = [0, 16], sizes = [8, 8], strides = [1, 1]} : vector<8x32xf32> to vector<8x8xf32>
    %151 = vector.extract_strided_slice %33 {offsets = [0, 16], sizes = [12, 8], strides = [1, 1]} : vector<12x64xf32> to vector<12x8xf32>
    %152 = vector.extract_strided_slice %33 {offsets = [0, 48], sizes = [12, 8], strides = [1, 1]} : vector<12x64xf32> to vector<12x8xf32>
    %153 = vector.extract_strided_slice %39 {offsets = [0, 16], sizes = [12, 8], strides = [1, 1]} : vector<12x32xf32> to vector<12x8xf32>
    %c2 = arith.constant 2 : index
    %c0_54 = arith.constant 0 : index
    %154 = vector.load %arg8[%c2, %c0_54] : memref<4x8xf32, #tpu.memory_space<vmem>>, vector<1x8xf32>
    %c2_55 = arith.constant 2 : index
    %c0_56 = arith.constant 0 : index
    %155 = vector.load %arg9[%c2_55, %c0_56] : memref<4x8xf32, #tpu.memory_space<vmem>>, vector<1x8xf32>
    %156 = vector.broadcast %154 : vector<1x8xf32> to vector<8x8xf32>
    %157 = arith.addf %150, %156 : vector<8x8xf32>
    %cst_57 = arith.constant dense<0.000000e+00> : vector<8x12xf32>
    %158 = tpu.matmul %157, %151, %cst_57 {dimension_numbers = #tpu.dot_dimension_numbers<[1], [1], [0], [0], [0, 0, 1, 0], [], []>} : vector<8x8xf32>, vector<12x8xf32>, vector<8x12xf32> -> vector<8x12xf32>
    %159 = vector.broadcast %155 : vector<1x8xf32> to vector<8x8xf32>
    %160 = arith.addf %150, %159 : vector<8x8xf32>
    %cst_58 = arith.constant dense<0.000000e+00> : vector<8x12xf32>
    %161 = tpu.matmul %160, %153, %cst_58 {dimension_numbers = #tpu.dot_dimension_numbers<[1], [1], [0], [0], [0, 0, 1, 0], [], []>} : vector<8x8xf32>, vector<12x8xf32>, vector<8x12xf32> -> vector<8x12xf32>
    %162 = vector.extract_strided_slice %161 {offsets = [0, 7], sizes = [1, 5], strides = [1, 1]} : vector<8x12xf32> to vector<1x5xf32>
    %cst_59 = arith.constant 0.000000e+00 : f32
    %163 = vector.broadcast %cst_59 : f32 to vector<1x1xf32>
    %164 = vector.extract_strided_slice %161 {offsets = [1, 0], sizes = [1, 6], strides = [1, 1]} : vector<8x12xf32> to vector<1x6xf32>
    %165 = tpu.concatenate %162, %163, %164 in 1 : vector<1x5xf32>, vector<1x1xf32>, vector<1x6xf32> -> vector<1x12xf32>
    %166 = vector.extract_strided_slice %161 {offsets = [1, 6], sizes = [1, 6], strides = [1, 1]} : vector<8x12xf32> to vector<1x6xf32>
    %cst_60 = arith.constant 0.000000e+00 : f32
    %167 = vector.broadcast %cst_60 : f32 to vector<1x1xf32>
    %168 = vector.extract_strided_slice %161 {offsets = [2, 0], sizes = [1, 5], strides = [1, 1]} : vector<8x12xf32> to vector<1x5xf32>
    %169 = tpu.concatenate %166, %167, %168 in 1 : vector<1x6xf32>, vector<1x1xf32>, vector<1x5xf32> -> vector<1x12xf32>
    %170 = vector.extract_strided_slice %161 {offsets = [2, 5], sizes = [1, 7], strides = [1, 1]} : vector<8x12xf32> to vector<1x7xf32>
    %cst_61 = arith.constant 0.000000e+00 : f32
    %171 = vector.broadcast %cst_61 : f32 to vector<1x1xf32>
    %172 = vector.extract_strided_slice %161 {offsets = [3, 0], sizes = [1, 4], strides = [1, 1]} : vector<8x12xf32> to vector<1x4xf32>
    %173 = tpu.concatenate %170, %171, %172 in 1 : vector<1x7xf32>, vector<1x1xf32>, vector<1x4xf32> -> vector<1x12xf32>
    %174 = vector.extract_strided_slice %161 {offsets = [3, 4], sizes = [1, 8], strides = [1, 1]} : vector<8x12xf32> to vector<1x8xf32>
    %cst_62 = arith.constant 0.000000e+00 : f32
    %175 = vector.broadcast %cst_62 : f32 to vector<1x1xf32>
    %176 = vector.extract_strided_slice %161 {offsets = [4, 0], sizes = [1, 3], strides = [1, 1]} : vector<8x12xf32> to vector<1x3xf32>
    %177 = tpu.concatenate %174, %175, %176 in 1 : vector<1x8xf32>, vector<1x1xf32>, vector<1x3xf32> -> vector<1x12xf32>
    %178 = vector.extract_strided_slice %161 {offsets = [4, 3], sizes = [1, 9], strides = [1, 1]} : vector<8x12xf32> to vector<1x9xf32>
    %cst_63 = arith.constant 0.000000e+00 : f32
    %179 = vector.broadcast %cst_63 : f32 to vector<1x1xf32>
    %180 = vector.extract_strided_slice %161 {offsets = [5, 0], sizes = [1, 2], strides = [1, 1]} : vector<8x12xf32> to vector<1x2xf32>
    %181 = tpu.concatenate %178, %179, %180 in 1 : vector<1x9xf32>, vector<1x1xf32>, vector<1x2xf32> -> vector<1x12xf32>
    %182 = vector.extract_strided_slice %161 {offsets = [5, 2], sizes = [1, 10], strides = [1, 1]} : vector<8x12xf32> to vector<1x10xf32>
    %cst_64 = arith.constant 0.000000e+00 : f32
    %183 = vector.broadcast %cst_64 : f32 to vector<1x1xf32>
    %184 = vector.extract_strided_slice %161 {offsets = [6, 0], sizes = [1, 1], strides = [1, 1]} : vector<8x12xf32> to vector<1x1xf32>
    %185 = tpu.concatenate %182, %183, %184 in 1 : vector<1x10xf32>, vector<1x1xf32>, vector<1x1xf32> -> vector<1x12xf32>
    %186 = vector.extract_strided_slice %161 {offsets = [6, 1], sizes = [1, 11], strides = [1, 1]} : vector<8x12xf32> to vector<1x11xf32>
    %cst_65 = arith.constant 0.000000e+00 : f32
    %187 = vector.broadcast %cst_65 : f32 to vector<1x1xf32>
    %188 = tpu.concatenate %186, %187 in 1 : vector<1x11xf32>, vector<1x1xf32> -> vector<1x12xf32>
    %189 = vector.extract_strided_slice %161 {offsets = [7, 0], sizes = [1, 12], strides = [1, 1]} : vector<8x12xf32> to vector<1x12xf32>
    %190 = tpu.concatenate %165, %169, %173, %177, %181, %185, %188, %189 in 0 : vector<1x12xf32>, vector<1x12xf32>, vector<1x12xf32>, vector<1x12xf32>, vector<1x12xf32>, vector<1x12xf32>, vector<1x12xf32>, vector<1x12xf32> -> vector<8x12xf32>
    %191 = arith.addf %158, %190 : vector<8x12xf32>
    %cst_66 = arith.constant 0.353553385 : f32
    %192 = vector.broadcast %cst_66 : f32 to vector<8x12xf32>
    %193 = arith.mulf %191, %192 : vector<8x12xf32>
    %cst_67 = arith.constant dense<0xFF800000> : vector<8xf32>
    %194 = vector.multi_reduction <maximumf>, %193, %cst_67 [1] : vector<8x12xf32> to vector<8xf32>
    %195 = vector.shape_cast %194 : vector<8xf32> to vector<8x1xf32>
    %196 = vector.broadcast %195 : vector<8x1xf32> to vector<8x12xf32>
    %197 = arith.subf %193, %196 : vector<8x12xf32>
    %198 = math.exp %197 : vector<8x12xf32>
    %cst_68 = arith.constant dense<0.000000e+00> : vector<8xf32>
    %199 = vector.multi_reduction <add>, %198, %cst_68 [1] : vector<8x12xf32> to vector<8xf32>
    %200 = vector.shape_cast %199 : vector<8xf32> to vector<8x1xf32>
    %201 = tpu.reciprocal %200 {approx = true} : vector<8x1xf32> -> vector<8x1xf32>
    %202 = vector.broadcast %201 : vector<8x1xf32> to vector<8x12xf32>
    %203 = arith.mulf %198, %202 : vector<8x12xf32>
    %cst_69 = arith.constant dense<0.000000e+00> : vector<8x8xf32>
    %204 = tpu.matmul %203, %152, %cst_69 {dimension_numbers = #tpu.dot_dimension_numbers<[1], [0], [0], [1], [0, 0, 1, 1], [], []>} : vector<8x12xf32>, vector<12x8xf32>, vector<8x8xf32> -> vector<8x8xf32>
    %205 = vector.extract_strided_slice %36 {offsets = [0, 24], sizes = [8, 8], strides = [1, 1]} : vector<8x32xf32> to vector<8x8xf32>
    %206 = vector.extract_strided_slice %33 {offsets = [0, 24], sizes = [12, 8], strides = [1, 1]} : vector<12x64xf32> to vector<12x8xf32>
    %207 = vector.extract_strided_slice %33 {offsets = [0, 56], sizes = [12, 8], strides = [1, 1]} : vector<12x64xf32> to vector<12x8xf32>
    %208 = vector.extract_strided_slice %39 {offsets = [0, 24], sizes = [12, 8], strides = [1, 1]} : vector<12x32xf32> to vector<12x8xf32>
    %c3 = arith.constant 3 : index
    %c0_70 = arith.constant 0 : index
    %209 = vector.load %arg8[%c3, %c0_70] : memref<4x8xf32, #tpu.memory_space<vmem>>, vector<1x8xf32>
    %c3_71 = arith.constant 3 : index
    %c0_72 = arith.constant 0 : index
    %210 = vector.load %arg9[%c3_71, %c0_72] : memref<4x8xf32, #tpu.memory_space<vmem>>, vector<1x8xf32>
    %211 = vector.broadcast %209 : vector<1x8xf32> to vector<8x8xf32>
    %212 = arith.addf %205, %211 : vector<8x8xf32>
    %cst_73 = arith.constant dense<0.000000e+00> : vector<8x12xf32>
    %213 = tpu.matmul %212, %206, %cst_73 {dimension_numbers = #tpu.dot_dimension_numbers<[1], [1], [0], [0], [0, 0, 1, 0], [], []>} : vector<8x8xf32>, vector<12x8xf32>, vector<8x12xf32> -> vector<8x12xf32>
    %214 = vector.broadcast %210 : vector<1x8xf32> to vector<8x8xf32>
    %215 = arith.addf %205, %214 : vector<8x8xf32>
    %cst_74 = arith.constant dense<0.000000e+00> : vector<8x12xf32>
    %216 = tpu.matmul %215, %208, %cst_74 {dimension_numbers = #tpu.dot_dimension_numbers<[1], [1], [0], [0], [0, 0, 1, 0], [], []>} : vector<8x8xf32>, vector<12x8xf32>, vector<8x12xf32> -> vector<8x12xf32>
    %217 = vector.extract_strided_slice %216 {offsets = [0, 7], sizes = [1, 5], strides = [1, 1]} : vector<8x12xf32> to vector<1x5xf32>
    %cst_75 = arith.constant 0.000000e+00 : f32
    %218 = vector.broadcast %cst_75 : f32 to vector<1x1xf32>
    %219 = vector.extract_strided_slice %216 {offsets = [1, 0], sizes = [1, 6], strides = [1, 1]} : vector<8x12xf32> to vector<1x6xf32>
    %220 = tpu.concatenate %217, %218, %219 in 1 : vector<1x5xf32>, vector<1x1xf32>, vector<1x6xf32> -> vector<1x12xf32>
    %221 = vector.extract_strided_slice %216 {offsets = [1, 6], sizes = [1, 6], strides = [1, 1]} : vector<8x12xf32> to vector<1x6xf32>
    %cst_76 = arith.constant 0.000000e+00 : f32
    %222 = vector.broadcast %cst_76 : f32 to vector<1x1xf32>
    %223 = vector.extract_strided_slice %216 {offsets = [2, 0], sizes = [1, 5], strides = [1, 1]} : vector<8x12xf32> to vector<1x5xf32>
    %224 = tpu.concatenate %221, %222, %223 in 1 : vector<1x6xf32>, vector<1x1xf32>, vector<1x5xf32> -> vector<1x12xf32>
    %225 = vector.extract_strided_slice %216 {offsets = [2, 5], sizes = [1, 7], strides = [1, 1]} : vector<8x12xf32> to vector<1x7xf32>
    %cst_77 = arith.constant 0.000000e+00 : f32
    %226 = vector.broadcast %cst_77 : f32 to vector<1x1xf32>
    %227 = vector.extract_strided_slice %216 {offsets = [3, 0], sizes = [1, 4], strides = [1, 1]} : vector<8x12xf32> to vector<1x4xf32>
    %228 = tpu.concatenate %225, %226, %227 in 1 : vector<1x7xf32>, vector<1x1xf32>, vector<1x4xf32> -> vector<1x12xf32>
    %229 = vector.extract_strided_slice %216 {offsets = [3, 4], sizes = [1, 8], strides = [1, 1]} : vector<8x12xf32> to vector<1x8xf32>
    %cst_78 = arith.constant 0.000000e+00 : f32
    %230 = vector.broadcast %cst_78 : f32 to vector<1x1xf32>
    %231 = vector.extract_strided_slice %216 {offsets = [4, 0], sizes = [1, 3], strides = [1, 1]} : vector<8x12xf32> to vector<1x3xf32>
    %232 = tpu.concatenate %229, %230, %231 in 1 : vector<1x8xf32>, vector<1x1xf32>, vector<1x3xf32> -> vector<1x12xf32>
    %233 = vector.extract_strided_slice %216 {offsets = [4, 3], sizes = [1, 9], strides = [1, 1]} : vector<8x12xf32> to vector<1x9xf32>
    %cst_79 = arith.constant 0.000000e+00 : f32
    %234 = vector.broadcast %cst_79 : f32 to vector<1x1xf32>
    %235 = vector.extract_strided_slice %216 {offsets = [5, 0], sizes = [1, 2], strides = [1, 1]} : vector<8x12xf32> to vector<1x2xf32>
    %236 = tpu.concatenate %233, %234, %235 in 1 : vector<1x9xf32>, vector<1x1xf32>, vector<1x2xf32> -> vector<1x12xf32>
    %237 = vector.extract_strided_slice %216 {offsets = [5, 2], sizes = [1, 10], strides = [1, 1]} : vector<8x12xf32> to vector<1x10xf32>
    %cst_80 = arith.constant 0.000000e+00 : f32
    %238 = vector.broadcast %cst_80 : f32 to vector<1x1xf32>
    %239 = vector.extract_strided_slice %216 {offsets = [6, 0], sizes = [1, 1], strides = [1, 1]} : vector<8x12xf32> to vector<1x1xf32>
    %240 = tpu.concatenate %237, %238, %239 in 1 : vector<1x10xf32>, vector<1x1xf32>, vector<1x1xf32> -> vector<1x12xf32>
    %241 = vector.extract_strided_slice %216 {offsets = [6, 1], sizes = [1, 11], strides = [1, 1]} : vector<8x12xf32> to vector<1x11xf32>
    %cst_81 = arith.constant 0.000000e+00 : f32
    %242 = vector.broadcast %cst_81 : f32 to vector<1x1xf32>
    %243 = tpu.concatenate %241, %242 in 1 : vector<1x11xf32>, vector<1x1xf32> -> vector<1x12xf32>
    %244 = vector.extract_strided_slice %216 {offsets = [7, 0], sizes = [1, 12], strides = [1, 1]} : vector<8x12xf32> to vector<1x12xf32>
    %245 = tpu.concatenate %220, %224, %228, %232, %236, %240, %243, %244 in 0 : vector<1x12xf32>, vector<1x12xf32>, vector<1x12xf32>, vector<1x12xf32>, vector<1x12xf32>, vector<1x12xf32>, vector<1x12xf32>, vector<1x12xf32> -> vector<8x12xf32>
    %246 = arith.addf %213, %245 : vector<8x12xf32>
    %cst_82 = arith.constant 0.353553385 : f32
    %247 = vector.broadcast %cst_82 : f32 to vector<8x12xf32>
    %248 = arith.mulf %246, %247 : vector<8x12xf32>
    %cst_83 = arith.constant dense<0xFF800000> : vector<8xf32>
    %249 = vector.multi_reduction <maximumf>, %248, %cst_83 [1] : vector<8x12xf32> to vector<8xf32>
    %250 = vector.shape_cast %249 : vector<8xf32> to vector<8x1xf32>
    %251 = vector.broadcast %250 : vector<8x1xf32> to vector<8x12xf32>
    %252 = arith.subf %248, %251 : vector<8x12xf32>
    %253 = math.exp %252 : vector<8x12xf32>
    %cst_84 = arith.constant dense<0.000000e+00> : vector<8xf32>
    %254 = vector.multi_reduction <add>, %253, %cst_84 [1] : vector<8x12xf32> to vector<8xf32>
    %255 = vector.shape_cast %254 : vector<8xf32> to vector<8x1xf32>
    %256 = tpu.reciprocal %255 {approx = true} : vector<8x1xf32> -> vector<8x1xf32>
    %257 = vector.broadcast %256 : vector<8x1xf32> to vector<8x12xf32>
    %258 = arith.mulf %253, %257 : vector<8x12xf32>
    %cst_85 = arith.constant dense<0.000000e+00> : vector<8x8xf32>
    %259 = tpu.matmul %258, %207, %cst_85 {dimension_numbers = #tpu.dot_dimension_numbers<[1], [0], [0], [1], [0, 0, 1, 1], [], []>} : vector<8x12xf32>, vector<12x8xf32>, vector<8x8xf32> -> vector<8x8xf32>
    %260 = tpu.concatenate %94, %149, %204, %259 in 1 : vector<8x8xf32>, vector<8x8xf32>, vector<8x8xf32>, vector<8x8xf32> -> vector<8x32xf32>
    %c0_86 = arith.constant 0 : index
    %c0_87 = arith.constant 0 : index
    %261 = vector.load %arg10[%c0_86, %c0_87] : memref<32x32xf32, #tpu.memory_space<vmem>>, vector<32x32xf32>
    %cst_88 = arith.constant dense<0.000000e+00> : vector<8x32xf32>
    %262 = tpu.matmul %260, %261, %cst_88 {dimension_numbers = #tpu.dot_dimension_numbers<[1], [0], [0], [1], [0, 0, 1, 1], [], []>} : vector<8x32xf32>, vector<32x32xf32>, vector<8x32xf32> -> vector<8x32xf32>
    %c0_89 = arith.constant 0 : index
    %c0_90 = arith.constant 0 : index
    %c0_91 = arith.constant 0 : index
    %263 = vector.load %arg11[%c0_89, %c0_90, %c0_91] : memref<1x8x32xf32, #tpu.memory_space<vmem>>, vector<1x8x32xf32>
    %264 = vector.shape_cast %263 : vector<1x8x32xf32> to vector<8x32xf32>
    %265 = vector.shape_cast %262 : vector<8x32xf32> to vector<1x8x32xf32>
    tpu.vector_store %arg11[%c0_89, %c0_90, %c0_91], %265 {strides = array<i32>} : memref<1x8x32xf32, #tpu.memory_space<vmem>>, vector<1x8x32xf32>,
    return
  }
  func.func @transform_0(%arg0: i32) -> (i32, i32, i32) {
    %c0_i32 = arith.constant 0 : i32
    %c0_i32_0 = arith.constant 0 : i32
    %c0_i32_1 = arith.constant 0 : i32
    return %arg0, %c0_i32, %c0_i32_0 : i32, i32, i32
  }
  func.func @transform_1(%arg0: i32) -> (i32, i32) {
    %c0_i32 = arith.constant 0 : i32
    %c0_i32_0 = arith.constant 0 : i32
    %c0_i32_1 = arith.constant 0 : i32
    return %c0_i32, %c0_i32_0 : i32, i32
  }
  func.func @transform_2(%arg0: i32) -> (i32, i32) {
    %c0_i32 = arith.constant 0 : i32
    %c0_i32_0 = arith.constant 0 : i32
    %c0_i32_1 = arith.constant 0 : i32
    return %c0_i32, %c0_i32_0 : i32, i32
  }
  func.func @transform_3(%arg0: i32) -> (i32, i32) {
    %c0_i32 = arith.constant 0 : i32
    %c0_i32_0 = arith.constant 0 : i32
    %c0_i32_1 = arith.constant 0 : i32
    return %c0_i32, %c0_i32_0 : i32, i32
  }
  func.func @transform_4(%arg0: i32) -> (i32, i32) {
    %c0_i32 = arith.constant 0 : i32
    %c0_i32_0 = arith.constant 0 : i32
    %c0_i32_1 = arith.constant 0 : i32
    return %c0_i32, %c0_i32_0 : i32, i32
  }
  func.func @transform_5(%arg0: i32) -> (i32, i32) {
    %c0_i32 = arith.constant 0 : i32
    %c0_i32_0 = arith.constant 0 : i32
    %c0_i32_1 = arith.constant 0 : i32
    return %c0_i32, %c0_i32_0 : i32, i32
  }
  func.func @transform_6(%arg0: i32) -> (i32, i32) {
    %c0_i32 = arith.constant 0 : i32
    %c0_i32_0 = arith.constant 0 : i32
    %c0_i32_1 = arith.constant 0 : i32
    return %c0_i32, %c0_i32_0 : i32, i32
  }
  func.func @transform_7(%arg0: i32) -> (i32, i32) {
    %c0_i32 = arith.constant 0 : i32
    %c0_i32_0 = arith.constant 0 : i32
    %c0_i32_1 = arith.constant 0 : i32
    return %c0_i32, %c0_i32_0 : i32, i32
  }
  func.func @transform_8(%arg0: i32) -> (i32, i32) {
    %c0_i32 = arith.constant 0 : i32
    %c0_i32_0 = arith.constant 0 : i32
    %c0_i32_1 = arith.constant 0 : i32
    return %c0_i32, %c0_i32_0 : i32, i32
  }
  func.func @transform_9(%arg0: i32) -> (i32, i32) {
    %c0_i32 = arith.constant 0 : i32
    %c0_i32_0 = arith.constant 0 : i32
    %c0_i32_1 = arith.constant 0 : i32
    return %c0_i32, %c0_i32_0 : i32, i32
  }
  func.func @transform_10(%arg0: i32) -> (i32, i32, i32) {
    %c0_i32 = arith.constant 0 : i32
    %c0_i32_0 = arith.constant 0 : i32
    %c0_i32_1 = arith.constant 0 : i32
    return %arg0, %c0_i32, %c0_i32_0 : i32, i32, i32
  }
}

module attributes {stable_mosaic.version = 11 : i64} {
  func.func @_block_kernel(%arg0: i32, %arg1: memref<8x32xf32, #tpu.memory_space<vmem>>, %arg2: memref<8x32xf32, #tpu.memory_space<vmem>>, %arg3: memref<32x96xf32, #tpu.memory_space<vmem>>, %arg4: memref<1x96xf32, #tpu.memory_space<vmem>>, %arg5: memref<32x64xf32, #tpu.memory_space<vmem>>, %arg6: memref<1x64xf32, #tpu.memory_space<vmem>>, %arg7: memref<32x32xf32, #tpu.memory_space<vmem>>, %arg8: memref<1x32xf32, #tpu.memory_space<vmem>>, %arg9: memref<1x32xf32, #tpu.memory_space<vmem>>, %arg10: memref<1x32xf32, #tpu.memory_space<vmem>>, %arg11: memref<32x64xf32, #tpu.memory_space<vmem>>, %arg12: memref<1x64xf32, #tpu.memory_space<vmem>>, %arg13: memref<64x32xf32, #tpu.memory_space<vmem>>, %arg14: memref<1x32xf32, #tpu.memory_space<vmem>>, %arg15: memref<32x96xf32, #tpu.memory_space<vmem>>, %arg16: memref<1x96xf32, #tpu.memory_space<vmem>>, %arg17: memref<32x64xf32, #tpu.memory_space<vmem>>, %arg18: memref<1x64xf32, #tpu.memory_space<vmem>>, %arg19: memref<32x32xf32, #tpu.memory_space<vmem>>, %arg20: memref<1x32xf32, #tpu.memory_space<vmem>>, %arg21: memref<8x32xf32, #tpu.memory_space<vmem>>) attributes {dimension_semantics = [#tpu.dimension_semantics<parallel>], iteration_bounds = array<i64: 2>, scalar_prefetch = 0 : i64, scratch_operands = 0 : i64, tpu.core_type = #tpu.core_type<tc>, window_params = [{transform_indices = @transform_0, window_bounds = array<i64: 8, 32>}, {transform_indices = @transform_1, window_bounds = array<i64: 8, 32>}, {pipeline_mode = #tpu.pipeline_mode<synchronous>, transform_indices = @transform_2, window_bounds = array<i64: 32, 96>}, {pipeline_mode = #tpu.pipeline_mode<synchronous>, transform_indices = @transform_3, window_bounds = array<i64: 1, 96>}, {pipeline_mode = #tpu.pipeline_mode<synchronous>, transform_indices = @transform_4, window_bounds = array<i64: 32, 64>}, {pipeline_mode = #tpu.pipeline_mode<synchronous>, transform_indices = @transform_5, window_bounds = array<i64: 1, 64>}, {pipeline_mode = #tpu.pipeline_mode<synchronous>, transform_indices = @transform_6, window_bounds = array<i64: 32, 32>}, {pipeline_mode = #tpu.pipeline_mode<synchronous>, transform_indices = @transform_7, window_bounds = array<i64: 1, 32>}, {pipeline_mode = #tpu.pipeline_mode<synchronous>, transform_indices = @transform_8, window_bounds = array<i64: 1, 32>}, {pipeline_mode = #tpu.pipeline_mode<synchronous>, transform_indices = @transform_9, window_bounds = array<i64: 1, 32>}, {pipeline_mode = #tpu.pipeline_mode<synchronous>, transform_indices = @transform_10, window_bounds = array<i64: 32, 64>}, {pipeline_mode = #tpu.pipeline_mode<synchronous>, transform_indices = @transform_11, window_bounds = array<i64: 1, 64>}, {pipeline_mode = #tpu.pipeline_mode<synchronous>, transform_indices = @transform_12, window_bounds = array<i64: 64, 32>}, {pipeline_mode = #tpu.pipeline_mode<synchronous>, transform_indices = @transform_13, window_bounds = array<i64: 1, 32>}, {pipeline_mode = #tpu.pipeline_mode<synchronous>, transform_indices = @transform_14, window_bounds = array<i64: 32, 96>}, {pipeline_mode = #tpu.pipeline_mode<synchronous>, transform_indices = @transform_15, window_bounds = array<i64: 1, 96>}, {pipeline_mode = #tpu.pipeline_mode<synchronous>, transform_indices = @transform_16, window_bounds = array<i64: 32, 64>}, {pipeline_mode = #tpu.pipeline_mode<synchronous>, transform_indices = @transform_17, window_bounds = array<i64: 1, 64>}, {pipeline_mode = #tpu.pipeline_mode<synchronous>, transform_indices = @transform_18, window_bounds = array<i64: 32, 32>}, {pipeline_mode = #tpu.pipeline_mode<synchronous>, transform_indices = @transform_19, window_bounds = array<i64: 1, 32>}, {transform_indices = @transform_20, window_bounds = array<i64: 8, 32>}]} {
    %c0 = arith.constant 0 : index
    %c0_0 = arith.constant 0 : index
    %0 = vector.load %arg1[%c0, %c0_0] : memref<8x32xf32, #tpu.memory_space<vmem>>, vector<8x32xf32>
    %c0_1 = arith.constant 0 : index
    %c0_2 = arith.constant 0 : index
    %1 = vector.load %arg2[%c0_1, %c0_2] : memref<8x32xf32, #tpu.memory_space<vmem>>, vector<8x32xf32>
    %c0_3 = arith.constant 0 : index
    %c0_4 = arith.constant 0 : index
    %2 = vector.load %arg3[%c0_3, %c0_4] : memref<32x96xf32, #tpu.memory_space<vmem>>, vector<32x96xf32>
    %cst = arith.constant dense<0.000000e+00> : vector<8x96xf32>
    %3 = tpu.matmul %1, %2, %cst {dimension_numbers = #tpu.dot_dimension_numbers<[1], [0], [0], [1], [0, 0, 1, 1], [], []>} : vector<8x32xf32>, vector<32x96xf32>, vector<8x96xf32> -> vector<8x96xf32>
    %c0_5 = arith.constant 0 : index
    %c0_6 = arith.constant 0 : index
    %4 = vector.load %arg4[%c0_5, %c0_6] : memref<1x96xf32, #tpu.memory_space<vmem>>, vector<1x96xf32>
    %5 = vector.broadcast %4 : vector<1x96xf32> to vector<8x96xf32>
    %6 = arith.addf %3, %5 : vector<8x96xf32>
    %c0_7 = arith.constant 0 : index
    %c0_8 = arith.constant 0 : index
    %7 = vector.load %arg5[%c0_7, %c0_8] : memref<32x64xf32, #tpu.memory_space<vmem>>, vector<32x64xf32>
    %cst_9 = arith.constant dense<0.000000e+00> : vector<8x64xf32>
    %8 = tpu.matmul %0, %7, %cst_9 {dimension_numbers = #tpu.dot_dimension_numbers<[1], [0], [0], [1], [0, 0, 1, 1], [], []>} : vector<8x32xf32>, vector<32x64xf32>, vector<8x64xf32> -> vector<8x64xf32>
    %c0_10 = arith.constant 0 : index
    %c0_11 = arith.constant 0 : index
    %9 = vector.load %arg6[%c0_10, %c0_11] : memref<1x64xf32, #tpu.memory_space<vmem>>, vector<1x64xf32>
    %10 = vector.broadcast %9 : vector<1x64xf32> to vector<8x64xf32>
    %11 = arith.addf %8, %10 : vector<8x64xf32>
    %12 = vector.extract_strided_slice %6 {offsets = [0, 0], sizes = [8, 32], strides = [1, 1]} : vector<8x96xf32> to vector<8x32xf32>
    %13 = vector.extract_strided_slice %11 {offsets = [0, 0], sizes = [8, 32], strides = [1, 1]} : vector<8x64xf32> to vector<8x32xf32>
    %14 = arith.addf %12, %13 : vector<8x32xf32>
    %15 = arith.negf %14 : vector<8x32xf32>
    %16 = math.exp %15 : vector<8x32xf32>
    %cst_12 = arith.constant 1.000000e+00 : f32
    %17 = vector.broadcast %cst_12 : f32 to vector<8x32xf32>
    %18 = arith.addf %17, %16 : vector<8x32xf32>
    %19 = arith.divf %17, %18 : vector<8x32xf32>
    %20 = vector.extract_strided_slice %6 {offsets = [0, 32], sizes = [8, 32], strides = [1, 1]} : vector<8x96xf32> to vector<8x32xf32>
    %21 = vector.extract_strided_slice %11 {offsets = [0, 32], sizes = [8, 32], strides = [1, 1]} : vector<8x64xf32> to vector<8x32xf32>
    %22 = arith.addf %20, %21 : vector<8x32xf32>
    %cst_13 = arith.constant 1.000000e-01 : f32
    %23 = vector.broadcast %cst_13 : f32 to vector<8x32xf32>
    %24 = arith.subf %22, %23 : vector<8x32xf32>
    %25 = arith.negf %24 : vector<8x32xf32>
    %26 = math.exp %25 : vector<8x32xf32>
    %cst_14 = arith.constant 1.000000e+00 : f32
    %27 = vector.broadcast %cst_14 : f32 to vector<8x32xf32>
    %28 = arith.addf %27, %26 : vector<8x32xf32>
    %29 = arith.divf %27, %28 : vector<8x32xf32>
    %30 = vector.extract_strided_slice %6 {offsets = [0, 64], sizes = [8, 32], strides = [1, 1]} : vector<8x96xf32> to vector<8x32xf32>
    %31 = arith.mulf %19, %0 : vector<8x32xf32>
    %c0_15 = arith.constant 0 : index
    %c0_16 = arith.constant 0 : index
    %32 = vector.load %arg7[%c0_15, %c0_16] : memref<32x32xf32, #tpu.memory_space<vmem>>, vector<32x32xf32>
    %cst_17 = arith.constant dense<0.000000e+00> : vector<8x32xf32>
    %33 = tpu.matmul %31, %32, %cst_17 {dimension_numbers = #tpu.dot_dimension_numbers<[1], [0], [0], [1], [0, 0, 1, 1], [], []>} : vector<8x32xf32>, vector<32x32xf32>, vector<8x32xf32> -> vector<8x32xf32>
    %34 = arith.addf %30, %33 : vector<8x32xf32>
    %c0_18 = arith.constant 0 : index
    %c0_19 = arith.constant 0 : index
    %35 = vector.load %arg8[%c0_18, %c0_19] : memref<1x32xf32, #tpu.memory_space<vmem>>, vector<1x32xf32>
    %36 = vector.broadcast %35 : vector<1x32xf32> to vector<8x32xf32>
    %37 = arith.addf %34, %36 : vector<8x32xf32>
    %38 = math.tanh %37 : vector<8x32xf32>
    %cst_20 = arith.constant 1.000000e+00 : f32
    %39 = vector.broadcast %cst_20 : f32 to vector<8x32xf32>
    %40 = arith.subf %39, %29 : vector<8x32xf32>
    %41 = arith.mulf %40, %0 : vector<8x32xf32>
    %42 = arith.mulf %29, %38 : vector<8x32xf32>
    %43 = arith.addf %41, %42 : vector<8x32xf32>
    %cst_21 = arith.constant dense<0.000000e+00> : vector<8xf32>
    %44 = vector.multi_reduction <add>, %43, %cst_21 [1] : vector<8x32xf32> to vector<8xf32>
    %45 = vector.shape_cast %44 : vector<8xf32> to vector<8x1xf32>
    %cst_22 = arith.constant 3.200000e+01 : f32
    %46 = vector.broadcast %cst_22 : f32 to vector<8x1xf32>
    %47 = arith.divf %45, %46 : vector<8x1xf32>
    %48 = vector.broadcast %47 : vector<8x1xf32> to vector<8x32xf32>
    %49 = arith.subf %43, %48 : vector<8x32xf32>
    %50 = arith.mulf %49, %49 : vector<8x32xf32>
    %cst_23 = arith.constant dense<0.000000e+00> : vector<8xf32>
    %51 = vector.multi_reduction <add>, %50, %cst_23 [1] : vector<8x32xf32> to vector<8xf32>
    %52 = vector.shape_cast %51 : vector<8xf32> to vector<8x1xf32>
    %cst_24 = arith.constant 3.200000e+01 : f32
    %53 = vector.broadcast %cst_24 : f32 to vector<8x1xf32>
    %54 = arith.divf %52, %53 : vector<8x1xf32>
    %55 = vector.broadcast %47 : vector<8x1xf32> to vector<8x32xf32>
    %56 = arith.subf %43, %55 : vector<8x32xf32>
    %cst_25 = arith.constant 9.99999974E-6 : f32
    %57 = vector.broadcast %cst_25 : f32 to vector<8x1xf32>
    %58 = arith.addf %54, %57 : vector<8x1xf32>
    %59 = math.rsqrt %58 : vector<8x1xf32>
    %60 = vector.broadcast %59 : vector<8x1xf32> to vector<8x32xf32>
    %61 = arith.mulf %56, %60 : vector<8x32xf32>
    %c0_26 = arith.constant 0 : index
    %c0_27 = arith.constant 0 : index
    %62 = vector.load %arg9[%c0_26, %c0_27] : memref<1x32xf32, #tpu.memory_space<vmem>>, vector<1x32xf32>
    %63 = vector.broadcast %62 : vector<1x32xf32> to vector<8x32xf32>
    %64 = arith.mulf %61, %63 : vector<8x32xf32>
    %c0_28 = arith.constant 0 : index
    %c0_29 = arith.constant 0 : index
    %65 = vector.load %arg10[%c0_28, %c0_29] : memref<1x32xf32, #tpu.memory_space<vmem>>, vector<1x32xf32>
    %66 = vector.broadcast %65 : vector<1x32xf32> to vector<8x32xf32>
    %67 = arith.addf %64, %66 : vector<8x32xf32>
    %c0_30 = arith.constant 0 : index
    %c0_31 = arith.constant 0 : index
    %68 = vector.load %arg11[%c0_30, %c0_31] : memref<32x64xf32, #tpu.memory_space<vmem>>, vector<32x64xf32>
    %cst_32 = arith.constant dense<0.000000e+00> : vector<8x64xf32>
    %69 = tpu.matmul %67, %68, %cst_32 {dimension_numbers = #tpu.dot_dimension_numbers<[1], [0], [0], [1], [0, 0, 1, 1], [], []>} : vector<8x32xf32>, vector<32x64xf32>, vector<8x64xf32> -> vector<8x64xf32>
    %c0_33 = arith.constant 0 : index
    %c0_34 = arith.constant 0 : index
    %70 = vector.load %arg12[%c0_33, %c0_34] : memref<1x64xf32, #tpu.memory_space<vmem>>, vector<1x64xf32>
    %71 = vector.broadcast %70 : vector<1x64xf32> to vector<8x64xf32>
    %72 = arith.addf %69, %71 : vector<8x64xf32>
    %cst_35 = arith.constant 0.000000e+00 : f32
    %73 = vector.broadcast %cst_35 : f32 to vector<8x64xf32>
    %74 = arith.maximumf %72, %73 : vector<8x64xf32>
    %c0_36 = arith.constant 0 : index
    %c0_37 = arith.constant 0 : index
    %75 = vector.load %arg13[%c0_36, %c0_37] : memref<64x32xf32, #tpu.memory_space<vmem>>, vector<64x32xf32>
    %cst_38 = arith.constant dense<0.000000e+00> : vector<8x32xf32>
    %76 = tpu.matmul %74, %75, %cst_38 {dimension_numbers = #tpu.dot_dimension_numbers<[1], [0], [0], [1], [0, 0, 1, 1], [], []>} : vector<8x64xf32>, vector<64x32xf32>, vector<8x32xf32> -> vector<8x32xf32>
    %c0_39 = arith.constant 0 : index
    %c0_40 = arith.constant 0 : index
    %77 = vector.load %arg14[%c0_39, %c0_40] : memref<1x32xf32, #tpu.memory_space<vmem>>, vector<1x32xf32>
    %78 = vector.broadcast %77 : vector<1x32xf32> to vector<8x32xf32>
    %79 = arith.addf %76, %78 : vector<8x32xf32>
    %c0_41 = arith.constant 0 : index
    %c0_42 = arith.constant 0 : index
    %80 = vector.load %arg15[%c0_41, %c0_42] : memref<32x96xf32, #tpu.memory_space<vmem>>, vector<32x96xf32>
    %cst_43 = arith.constant dense<0.000000e+00> : vector<8x96xf32>
    %81 = tpu.matmul %79, %80, %cst_43 {dimension_numbers = #tpu.dot_dimension_numbers<[1], [0], [0], [1], [0, 0, 1, 1], [], []>} : vector<8x32xf32>, vector<32x96xf32>, vector<8x96xf32> -> vector<8x96xf32>
    %c0_44 = arith.constant 0 : index
    %c0_45 = arith.constant 0 : index
    %82 = vector.load %arg16[%c0_44, %c0_45] : memref<1x96xf32, #tpu.memory_space<vmem>>, vector<1x96xf32>
    %83 = vector.broadcast %82 : vector<1x96xf32> to vector<8x96xf32>
    %84 = arith.addf %81, %83 : vector<8x96xf32>
    %c0_46 = arith.constant 0 : index
    %c0_47 = arith.constant 0 : index
    %85 = vector.load %arg17[%c0_46, %c0_47] : memref<32x64xf32, #tpu.memory_space<vmem>>, vector<32x64xf32>
    %cst_48 = arith.constant dense<0.000000e+00> : vector<8x64xf32>
    %86 = tpu.matmul %43, %85, %cst_48 {dimension_numbers = #tpu.dot_dimension_numbers<[1], [0], [0], [1], [0, 0, 1, 1], [], []>} : vector<8x32xf32>, vector<32x64xf32>, vector<8x64xf32> -> vector<8x64xf32>
    %c0_49 = arith.constant 0 : index
    %c0_50 = arith.constant 0 : index
    %87 = vector.load %arg18[%c0_49, %c0_50] : memref<1x64xf32, #tpu.memory_space<vmem>>, vector<1x64xf32>
    %88 = vector.broadcast %87 : vector<1x64xf32> to vector<8x64xf32>
    %89 = arith.addf %86, %88 : vector<8x64xf32>
    %90 = vector.extract_strided_slice %84 {offsets = [0, 0], sizes = [8, 32], strides = [1, 1]} : vector<8x96xf32> to vector<8x32xf32>
    %91 = vector.extract_strided_slice %89 {offsets = [0, 0], sizes = [8, 32], strides = [1, 1]} : vector<8x64xf32> to vector<8x32xf32>
    %92 = arith.addf %90, %91 : vector<8x32xf32>
    %93 = arith.negf %92 : vector<8x32xf32>
    %94 = math.exp %93 : vector<8x32xf32>
    %cst_51 = arith.constant 1.000000e+00 : f32
    %95 = vector.broadcast %cst_51 : f32 to vector<8x32xf32>
    %96 = arith.addf %95, %94 : vector<8x32xf32>
    %97 = arith.divf %95, %96 : vector<8x32xf32>
    %98 = vector.extract_strided_slice %84 {offsets = [0, 32], sizes = [8, 32], strides = [1, 1]} : vector<8x96xf32> to vector<8x32xf32>
    %99 = vector.extract_strided_slice %89 {offsets = [0, 32], sizes = [8, 32], strides = [1, 1]} : vector<8x64xf32> to vector<8x32xf32>
    %100 = arith.addf %98, %99 : vector<8x32xf32>
    %cst_52 = arith.constant 1.000000e-01 : f32
    %101 = vector.broadcast %cst_52 : f32 to vector<8x32xf32>
    %102 = arith.subf %100, %101 : vector<8x32xf32>
    %103 = arith.negf %102 : vector<8x32xf32>
    %104 = math.exp %103 : vector<8x32xf32>
    %cst_53 = arith.constant 1.000000e+00 : f32
    %105 = vector.broadcast %cst_53 : f32 to vector<8x32xf32>
    %106 = arith.addf %105, %104 : vector<8x32xf32>
    %107 = arith.divf %105, %106 : vector<8x32xf32>
    %108 = vector.extract_strided_slice %84 {offsets = [0, 64], sizes = [8, 32], strides = [1, 1]} : vector<8x96xf32> to vector<8x32xf32>
    %109 = arith.mulf %97, %43 : vector<8x32xf32>
    %c0_54 = arith.constant 0 : index
    %c0_55 = arith.constant 0 : index
    %110 = vector.load %arg19[%c0_54, %c0_55] : memref<32x32xf32, #tpu.memory_space<vmem>>, vector<32x32xf32>
    %cst_56 = arith.constant dense<0.000000e+00> : vector<8x32xf32>
    %111 = tpu.matmul %109, %110, %cst_56 {dimension_numbers = #tpu.dot_dimension_numbers<[1], [0], [0], [1], [0, 0, 1, 1], [], []>} : vector<8x32xf32>, vector<32x32xf32>, vector<8x32xf32> -> vector<8x32xf32>
    %112 = arith.addf %108, %111 : vector<8x32xf32>
    %c0_57 = arith.constant 0 : index
    %c0_58 = arith.constant 0 : index
    %113 = vector.load %arg20[%c0_57, %c0_58] : memref<1x32xf32, #tpu.memory_space<vmem>>, vector<1x32xf32>
    %114 = vector.broadcast %113 : vector<1x32xf32> to vector<8x32xf32>
    %115 = arith.addf %112, %114 : vector<8x32xf32>
    %116 = math.tanh %115 : vector<8x32xf32>
    %cst_59 = arith.constant 1.000000e+00 : f32
    %117 = vector.broadcast %cst_59 : f32 to vector<8x32xf32>
    %118 = arith.subf %117, %107 : vector<8x32xf32>
    %119 = arith.mulf %118, %43 : vector<8x32xf32>
    %120 = arith.mulf %107, %116 : vector<8x32xf32>
    %121 = arith.addf %119, %120 : vector<8x32xf32>
    %c0_60 = arith.constant 0 : index
    %c0_61 = arith.constant 0 : index
    %122 = vector.load %arg21[%c0_60, %c0_61] : memref<8x32xf32, #tpu.memory_space<vmem>>, vector<8x32xf32>
    tpu.vector_store %arg21[%c0_60, %c0_61], %121 {strides = array<i32>} : memref<8x32xf32, #tpu.memory_space<vmem>>, vector<8x32xf32>,
    return
  }
  func.func @transform_0(%arg0: i32) -> (i32, i32) {
    %c0_i32 = arith.constant 0 : i32
    %c0_i32_0 = arith.constant 0 : i32
    return %arg0, %c0_i32 : i32, i32
  }
  func.func @transform_1(%arg0: i32) -> (i32, i32) {
    %c0_i32 = arith.constant 0 : i32
    %c0_i32_0 = arith.constant 0 : i32
    return %arg0, %c0_i32 : i32, i32
  }
  func.func @transform_2(%arg0: i32) -> (i32, i32) {
    %c0_i32 = arith.constant 0 : i32
    %c0_i32_0 = arith.constant 0 : i32
    %c0_i32_1 = arith.constant 0 : i32
    return %c0_i32, %c0_i32_0 : i32, i32
  }
  func.func @transform_3(%arg0: i32) -> (i32, i32) {
    %c0_i32 = arith.constant 0 : i32
    %c0_i32_0 = arith.constant 0 : i32
    %c0_i32_1 = arith.constant 0 : i32
    return %c0_i32, %c0_i32_0 : i32, i32
  }
  func.func @transform_4(%arg0: i32) -> (i32, i32) {
    %c0_i32 = arith.constant 0 : i32
    %c0_i32_0 = arith.constant 0 : i32
    %c0_i32_1 = arith.constant 0 : i32
    return %c0_i32, %c0_i32_0 : i32, i32
  }
  func.func @transform_5(%arg0: i32) -> (i32, i32) {
    %c0_i32 = arith.constant 0 : i32
    %c0_i32_0 = arith.constant 0 : i32
    %c0_i32_1 = arith.constant 0 : i32
    return %c0_i32, %c0_i32_0 : i32, i32
  }
  func.func @transform_6(%arg0: i32) -> (i32, i32) {
    %c0_i32 = arith.constant 0 : i32
    %c0_i32_0 = arith.constant 0 : i32
    %c0_i32_1 = arith.constant 0 : i32
    return %c0_i32, %c0_i32_0 : i32, i32
  }
  func.func @transform_7(%arg0: i32) -> (i32, i32) {
    %c0_i32 = arith.constant 0 : i32
    %c0_i32_0 = arith.constant 0 : i32
    %c0_i32_1 = arith.constant 0 : i32
    return %c0_i32, %c0_i32_0 : i32, i32
  }
  func.func @transform_8(%arg0: i32) -> (i32, i32) {
    %c0_i32 = arith.constant 0 : i32
    %c0_i32_0 = arith.constant 0 : i32
    %c0_i32_1 = arith.constant 0 : i32
    return %c0_i32, %c0_i32_0 : i32, i32
  }
  func.func @transform_9(%arg0: i32) -> (i32, i32) {
    %c0_i32 = arith.constant 0 : i32
    %c0_i32_0 = arith.constant 0 : i32
    %c0_i32_1 = arith.constant 0 : i32
    return %c0_i32, %c0_i32_0 : i32, i32
  }
  func.func @transform_10(%arg0: i32) -> (i32, i32) {
    %c0_i32 = arith.constant 0 : i32
    %c0_i32_0 = arith.constant 0 : i32
    %c0_i32_1 = arith.constant 0 : i32
    return %c0_i32, %c0_i32_0 : i32, i32
  }
  func.func @transform_11(%arg0: i32) -> (i32, i32) {
    %c0_i32 = arith.constant 0 : i32
    %c0_i32_0 = arith.constant 0 : i32
    %c0_i32_1 = arith.constant 0 : i32
    return %c0_i32, %c0_i32_0 : i32, i32
  }
  func.func @transform_12(%arg0: i32) -> (i32, i32) {
    %c0_i32 = arith.constant 0 : i32
    %c0_i32_0 = arith.constant 0 : i32
    %c0_i32_1 = arith.constant 0 : i32
    return %c0_i32, %c0_i32_0 : i32, i32
  }
  func.func @transform_13(%arg0: i32) -> (i32, i32) {
    %c0_i32 = arith.constant 0 : i32
    %c0_i32_0 = arith.constant 0 : i32
    %c0_i32_1 = arith.constant 0 : i32
    return %c0_i32, %c0_i32_0 : i32, i32
  }
  func.func @transform_14(%arg0: i32) -> (i32, i32) {
    %c0_i32 = arith.constant 0 : i32
    %c0_i32_0 = arith.constant 0 : i32
    %c0_i32_1 = arith.constant 0 : i32
    return %c0_i32, %c0_i32_0 : i32, i32
  }
  func.func @transform_15(%arg0: i32) -> (i32, i32) {
    %c0_i32 = arith.constant 0 : i32
    %c0_i32_0 = arith.constant 0 : i32
    %c0_i32_1 = arith.constant 0 : i32
    return %c0_i32, %c0_i32_0 : i32, i32
  }
  func.func @transform_16(%arg0: i32) -> (i32, i32) {
    %c0_i32 = arith.constant 0 : i32
    %c0_i32_0 = arith.constant 0 : i32
    %c0_i32_1 = arith.constant 0 : i32
    return %c0_i32, %c0_i32_0 : i32, i32
  }
  func.func @transform_17(%arg0: i32) -> (i32, i32) {
    %c0_i32 = arith.constant 0 : i32
    %c0_i32_0 = arith.constant 0 : i32
    %c0_i32_1 = arith.constant 0 : i32
    return %c0_i32, %c0_i32_0 : i32, i32
  }
  func.func @transform_18(%arg0: i32) -> (i32, i32) {
    %c0_i32 = arith.constant 0 : i32
    %c0_i32_0 = arith.constant 0 : i32
    %c0_i32_1 = arith.constant 0 : i32
    return %c0_i32, %c0_i32_0 : i32, i32
  }
  func.func @transform_19(%arg0: i32) -> (i32, i32) {
    %c0_i32 = arith.constant 0 : i32
    %c0_i32_0 = arith.constant 0 : i32
    %c0_i32_1 = arith.constant 0 : i32
    return %c0_i32, %c0_i32_0 : i32, i32
  }
  func.func @transform_20(%arg0: i32) -> (i32, i32) {
    %c0_i32 = arith.constant 0 : i32
    %c0_i32_0 = arith.constant 0 : i32
    return %arg0, %c0_i32 : i32, i32
  }
}

</mosaic_0001>

<llo_original>
// kernel: stable_transformer_layer.3
$region0: #{stable_transformer_layer.3}
  #allocation0 [shape = 'u32[]', space=smem, size = 0x4, offset = 0x4, fixed_abs, tag = 'smem constant byte address 0x4 - core index']
  #allocation1 [shape = 'u32[144,128]{1,0:T(1,128)}', space=vmem, size = 0x12000, scoped, tag = 'internal scratch']
  %s0 = inlined_call_operand.vmem [shape: f32[16,32], index: 0, kind: input, shape index: {}]
  %s1 = inlined_call_operand.vmem [shape: f32[16,32], index: 1, kind: input, shape index: {}]
  %s2 = inlined_call_operand.vmem [shape: f32[32,96], index: 2, kind: input, shape index: {}]
  %s3 = inlined_call_operand.vmem [shape: f32[1,96], index: 3, kind: input, shape index: {}]
  %s4 = inlined_call_operand.vmem [shape: f32[32,64], index: 4, kind: input, shape index: {}]
  %s5 = inlined_call_operand.vmem [shape: f32[1,64], index: 5, kind: input, shape index: {}]
  %s6 = inlined_call_operand.vmem [shape: f32[32,32], index: 6, kind: input, shape index: {}]
  %s7 = inlined_call_operand.vmem [shape: f32[1,32], index: 7, kind: input, shape index: {}]
  %s8 = inlined_call_operand.vmem [shape: f32[1,32], index: 8, kind: input, shape index: {}]
  %s9 = inlined_call_operand.vmem [shape: f32[1,32], index: 9, kind: input, shape index: {}]
  %s10 = inlined_call_operand.vmem [shape: f32[32,64], index: 10, kind: input, shape index: {}]
  %s11 = inlined_call_operand.vmem [shape: f32[1,64], index: 11, kind: input, shape index: {}]
  %s12 = inlined_call_operand.vmem [shape: f32[64,32], index: 12, kind: input, shape index: {}]
  %s13 = inlined_call_operand.vmem [shape: f32[1,32], index: 13, kind: input, shape index: {}]
  %s14 = inlined_call_operand.vmem [shape: f32[32,96], index: 14, kind: input, shape index: {}]
  %s15 = inlined_call_operand.vmem [shape: f32[1,96], index: 15, kind: input, shape index: {}]
  %s16 = inlined_call_operand.vmem [shape: f32[32,64], index: 16, kind: input, shape index: {}]
  %s17 = inlined_call_operand.vmem [shape: f32[1,64], index: 17, kind: input, shape index: {}]
  %s18 = inlined_call_operand.vmem [shape: f32[32,32], index: 18, kind: input, shape index: {}]
  %s19 = inlined_call_operand.vmem [shape: f32[1,32], index: 19, kind: input, shape index: {}]
  %s20 = inlined_call_operand.vmem [shape: f32[16,32], index: 20, kind: output, shape index: {}]
  %s21 = sld [smem:[#allocation0]]
  $region113: #{stable_transformer_layer.3} parent=0
    _
  %s23 = ssub.s32 1, %s21
  %s24 = scalar_select 0, %s23, %s21
  loop: start=0, step=1, limit=4
  $region2: #{stable_transformer_layer.3} parent=0 // loop_pre_header
    _
  $region3: #{stable_transformer_layer.3} parent=0 // loop_header
    %s26 = sphi 0, %s30
    %p27 = scmp.ge.s32.totalorder %s26, 4
    %s36 = sphi 0, %s38
    %s39 = sphi 0, %s36
    %s40 = sphi 0, %s39
    %s56 = sphi 0, %s40
    %s62 = sphi 0, %s64
    %s65 = sphi 0, %s62
    %s66 = sphi 0, %s65
    %s82 = sphi 0, %s66
    %s86 = sphi 0, %s86
    %s88 = sphi 0, %s86
    %s89 = sphi 0, %s88
    %s103 = sphi 0, %s89
    %s107 = sphi 0, %s107
    %s109 = sphi 0, %s107
    %s110 = sphi 0, %s109
    %s124 = sphi 0, %s110
    %s128 = sphi 0, %s128
    %s130 = sphi 0, %s128
    %s131 = sphi 0, %s130
    %s145 = sphi 0, %s131
    %s149 = sphi 0, %s149
    %s151 = sphi 0, %s149
    %s152 = sphi 0, %s151
    %s166 = sphi 0, %s152
    %s170 = sphi 0, %s170
    %s172 = sphi 0, %s170
    %s173 = sphi 0, %s172
    %s187 = sphi 0, %s173
    %s191 = sphi 0, %s191
    %s193 = sphi 0, %s191
    %s194 = sphi 0, %s193
    %s208 = sphi 0, %s194
    %s212 = sphi 0, %s212
    %s214 = sphi 0, %s212
    %s215 = sphi 0, %s214
    %s229 = sphi 0, %s215
    %s233 = sphi 0, %s233
    %s235 = sphi 0, %s233
    %s236 = sphi 0, %s235
    %s250 = sphi 0, %s236
    %s254 = sphi 0, %s254
    %s256 = sphi 0, %s254
    %s257 = sphi 0, %s256
    %s271 = sphi 0, %s257
    %s275 = sphi 0, %s275
    %s277 = sphi 0, %s275
    %s278 = sphi 0, %s277
    %s292 = sphi 0, %s278
    %s296 = sphi 0, %s296
    %s298 = sphi 0, %s296
    %s299 = sphi 0, %s298
    %s313 = sphi 0, %s299
    %s317 = sphi 0, %s317
    %s319 = sphi 0, %s317
    %s320 = sphi 0, %s319
    %s334 = sphi 0, %s320
    %s338 = sphi 0, %s338
    %s340 = sphi 0, %s338
    %s341 = sphi 0, %s340
    %s355 = sphi 0, %s341
    %s359 = sphi 0, %s359
    %s361 = sphi 0, %s359
    %s362 = sphi 0, %s361
    %s376 = sphi 0, %s362
    %s380 = sphi 0, %s380
    %s382 = sphi 0, %s380
    %s383 = sphi 0, %s382
    %s397 = sphi 0, %s383
    %s401 = sphi 0, %s401
    %s403 = sphi 0, %s401
    %s404 = sphi 0, %s403
    %s418 = sphi 0, %s404
    %s422 = sphi 0, %s422
    %s424 = sphi 0, %s422
    %s425 = sphi 0, %s424
    %s439 = sphi 0, %s425
    %s443 = sphi 0, %s443
    %s445 = sphi 0, %s443
    %s446 = sphi 0, %s445
    %s460 = sphi 0, %s446
    %s466 = sphi 0, %s468
    %s469 = sphi 0, %s466
    %s470 = sphi 0, %s469
    %s486 = sphi 0, %s470
  $region4: #{stable_transformer_layer.3} parent=0 // loop_header_branch
    %29 = sbr.rel (%p27) target = $region8
  $region5: #{stable_transformer_layer.3} parent=0 // loop_body
    %s31 = ssub.s32 %s26, 1
    %s32 = ssub.s32 %s26, 2
    %s33 = sadd.s32 %s26, 1
    %s34 = ssub.s32 %s26, %s33
    %p35 = scmp.eq.s32.totalorder %s34, 0
    %s37 = sadd.s32 %s36, 1
    %s38 = scalar_select %p35, %s36, %s37
    %p41 = pneg %p35
    %p42 = scmp.eq.s32.totalorder %s26, 1
    %p43 = por %p41, %p42
    %p44 = scmp.ne.s32.totalorder %s36, %s39
    %p45 = scmp.eq.s32.totalorder %s26, 0
    %p46 = por %p44, %p45
    %p47 = scmp.ne.s32.totalorder %s36, %s39
    %p48 = scmp.eq.s32.totalorder %s31, 1
    %p49 = por %p47, %p48
    %p50 = scmp.ne.s32.totalorder %s39, %s40
    %p51 = scmp.eq.s32.totalorder %s31, 0
    %p52 = por %p50, %p51
    %p53 = scmp.ne.s32.totalorder %s39, %s40
    %p54 = scmp.eq.s32.totalorder %s32, 1
    %p55 = por %p53, %p54
    %p57 = scmp.ne.s32.totalorder %s40, %s56
    %p58 = scmp.eq.s32.totalorder %s32, 0
    %p59 = por %p57, %p58
    %s60 = ssub.s32 %s26, %s33
    %p61 = scmp.eq.s32.totalorder %s60, 0
    %s63 = sadd.s32 %s62, 1
    %s64 = scalar_select %p61, %s62, %s63
    %p67 = pneg %p61
    %p68 = scmp.eq.s32.totalorder %s26, 1
    %p69 = por %p67, %p68
    %p70 = scmp.ne.s32.totalorder %s62, %s65
    %p71 = scmp.eq.s32.totalorder %s26, 0
    %p72 = por %p70, %p71
    %p73 = scmp.ne.s32.totalorder %s62, %s65
    %p74 = scmp.eq.s32.totalorder %s31, 1
    %p75 = por %p73, %p74
    %p76 = scmp.ne.s32.totalorder %s65, %s66
    %p77 = scmp.eq.s32.totalorder %s31, 0
    %p78 = por %p76, %p77
    %p79 = scmp.ne.s32.totalorder %s65, %s66
    %p80 = scmp.eq.s32.totalorder %s32, 1
    %p81 = por %p79, %p80
    %p83 = scmp.ne.s32.totalorder %s66, %s82
    %p84 = scmp.eq.s32.totalorder %s32, 0
    %p85 = por %p83, %p84
    %s87 = sadd.s32 %s86, 1
    %p90 = scmp.eq.s32.totalorder %s26, 1
    %p91 = scmp.ne.s32.totalorder %s86, %s88
    %p92 = scmp.eq.s32.totalorder %s26, 0
    %p93 = por %p91, %p92
    %p94 = scmp.ne.s32.totalorder %s86, %s88
    %p95 = scmp.eq.s32.totalorder %s31, 1
    %p96 = por %p94, %p95
    %p97 = scmp.ne.s32.totalorder %s88, %s89
    %p98 = scmp.eq.s32.totalorder %s31, 0
    %p99 = por %p97, %p98
    %p100 = scmp.ne.s32.totalorder %s88, %s89
    %p101 = scmp.eq.s32.totalorder %s32, 1
    %p102 = por %p100, %p101
    %p104 = scmp.ne.s32.totalorder %s89, %s103
    %p105 = scmp.eq.s32.totalorder %s32, 0
    %p106 = por %p104, %p105
    %s108 = sadd.s32 %s107, 1
    %p111 = scmp.eq.s32.totalorder %s26, 1
    %p112 = scmp.ne.s32.totalorder %s107, %s109
    %p113 = scmp.eq.s32.totalorder %s26, 0
    %p114 = por %p112, %p113
    %p115 = scmp.ne.s32.totalorder %s107, %s109
    %p116 = scmp.eq.s32.totalorder %s31, 1
    %p117 = por %p115, %p116
    %p118 = scmp.ne.s32.totalorder %s109, %s110
    %p119 = scmp.eq.s32.totalorder %s31, 0
    %p120 = por %p118, %p119
    %p121 = scmp.ne.s32.totalorder %s109, %s110
    %p122 = scmp.eq.s32.totalorder %s32, 1
    %p123 = por %p121, %p122
    %p125 = scmp.ne.s32.totalorder %s110, %s124
    %p126 = scmp.eq.s32.totalorder %s32, 0
    %p127 = por %p125, %p126
    %s129 = sadd.s32 %s128, 1
    %p132 = scmp.eq.s32.totalorder %s26, 1
    %p133 = scmp.ne.s32.totalorder %s128, %s130
    %p134 = scmp.eq.s32.totalorder %s26, 0
    %p135 = por %p133, %p134
    %p136 = scmp.ne.s32.totalorder %s128, %s130
    %p137 = scmp.eq.s32.totalorder %s31, 1
    %p138 = por %p136, %p137
    %p139 = scmp.ne.s32.totalorder %s130, %s131
    %p140 = scmp.eq.s32.totalorder %s31, 0
    %p141 = por %p139, %p140
    %p142 = scmp.ne.s32.totalorder %s130, %s131
    %p143 = scmp.eq.s32.totalorder %s32, 1
    %p144 = por %p142, %p143
    %p146 = scmp.ne.s32.totalorder %s131, %s145
    %p147 = scmp.eq.s32.totalorder %s32, 0
    %p148 = por %p146, %p147
    %s150 = sadd.s32 %s149, 1
    %p153 = scmp.eq.s32.totalorder %s26, 1
    %p154 = scmp.ne.s32.totalorder %s149, %s151
    %p155 = scmp.eq.s32.totalorder %s26, 0
    %p156 = por %p154, %p155
    %p157 = scmp.ne.s32.totalorder %s149, %s151
    %p158 = scmp.eq.s32.totalorder %s31, 1
    %p159 = por %p157, %p158
    %p160 = scmp.ne.s32.totalorder %s151, %s152
    %p161 = scmp.eq.s32.totalorder %s31, 0
    %p162 = por %p160, %p161
    %p163 = scmp.ne.s32.totalorder %s151, %s152
    %p164 = scmp.eq.s32.totalorder %s32, 1
    %p165 = por %p163, %p164
    %p167 = scmp.ne.s32.totalorder %s152, %s166
    %p168 = scmp.eq.s32.totalorder %s32, 0
    %p169 = por %p167, %p168
    %s171 = sadd.s32 %s170, 1
    %p174 = scmp.eq.s32.totalorder %s26, 1
    %p175 = scmp.ne.s32.totalorder %s170, %s172
    %p176 = scmp.eq.s32.totalorder %s26, 0
    %p177 = por %p175, %p176
    %p178 = scmp.ne.s32.totalorder %s170, %s172
    %p179 = scmp.eq.s32.totalorder %s31, 1
    %p180 = por %p178, %p179
    %p181 = scmp.ne.s32.totalorder %s172, %s173
    %p182 = scmp.eq.s32.totalorder %s31, 0
    %p183 = por %p181, %p182
    %p184 = scmp.ne.s32.totalorder %s172, %s173
    %p185 = scmp.eq.s32.totalorder %s32, 1
    %p186 = por %p184, %p185
    %p188 = scmp.ne.s32.totalorder %s173, %s187
    %p189 = scmp.eq.s32.totalorder %s32, 0
    %p190 = por %p188, %p189
    %s192 = sadd.s32 %s191, 1
    %p195 = scmp.eq.s32.totalorder %s26, 1
    %p196 = scmp.ne.s32.totalorder %s191, %s193
    %p197 = scmp.eq.s32.totalorder %s26, 0
    %p198 = por %p196, %p197
    %p199 = scmp.ne.s32.totalorder %s191, %s193
    %p200 = scmp.eq.s32.totalorder %s31, 1
    %p201 = por %p199, %p200
    %p202 = scmp.ne.s32.totalorder %s193, %s194
    %p203 = scmp.eq.s32.totalorder %s31, 0
    %p204 = por %p202, %p203
    %p205 = scmp.ne.s32.totalorder %s193, %s194
    %p206 = scmp.eq.s32.totalorder %s32, 1
    %p207 = por %p205, %p206
    %p209 = scmp.ne.s32.totalorder %s194, %s208
    %p210 = scmp.eq.s32.totalorder %s32, 0
    %p211 = por %p209, %p210
    %s213 = sadd.s32 %s212, 1
    %p216 = scmp.eq.s32.totalorder %s26, 1
    %p217 = scmp.ne.s32.totalorder %s212, %s214
    %p218 = scmp.eq.s32.totalorder %s26, 0
    %p219 = por %p217, %p218
    %p220 = scmp.ne.s32.totalorder %s212, %s214
    %p221 = scmp.eq.s32.totalorder %s31, 1
    %p222 = por %p220, %p221
    %p223 = scmp.ne.s32.totalorder %s214, %s215
    %p224 = scmp.eq.s32.totalorder %s31, 0
    %p225 = por %p223, %p224
    %p226 = scmp.ne.s32.totalorder %s214, %s215
    %p227 = scmp.eq.s32.totalorder %s32, 1
    %p228 = por %p226, %p227
    %p230 = scmp.ne.s32.totalorder %s215, %s229
    %p231 = scmp.eq.s32.totalorder %s32, 0
    %p232 = por %p230, %p231
    %s234 = sadd.s32 %s233, 1
    %p237 = scmp.eq.s32.totalorder %s26, 1
    %p238 = scmp.ne.s32.totalorder %s233, %s235
    %p239 = scmp.eq.s32.totalorder %s26, 0
    %p240 = por %p238, %p239
    %p241 = scmp.ne.s32.totalorder %s233, %s235
    %p242 = scmp.eq.s32.totalorder %s31, 1
    %p243 = por %p241, %p242
    %p244 = scmp.ne.s32.totalorder %s235, %s236
    %p245 = scmp.eq.s32.totalorder %s31, 0
    %p246 = por %p244, %p245
    %p247 = scmp.ne.s32.totalorder %s235, %s236
    %p248 = scmp.eq.s32.totalorder %s32, 1
    %p249 = por %p247, %p248
    %p251 = scmp.ne.s32.totalorder %s236, %s250
    %p252 = scmp.eq.s32.totalorder %s32, 0
    %p253 = por %p251, %p252
    %s255 = sadd.s32 %s254, 1
    %p258 = scmp.eq.s32.totalorder %s26, 1
    %p259 = scmp.ne.s32.totalorder %s254, %s256
    %p260 = scmp.eq.s32.totalorder %s26, 0
    %p261 = por %p259, %p260
    %p262 = scmp.ne.s32.totalorder %s254, %s256
    %p263 = scmp.eq.s32.totalorder %s31, 1
    %p264 = por %p262, %p263
    %p265 = scmp.ne.s32.totalorder %s256, %s257
    %p266 = scmp.eq.s32.totalorder %s31, 0
    %p267 = por %p265, %p266
    %p268 = scmp.ne.s32.totalorder %s256, %s257
    %p269 = scmp.eq.s32.totalorder %s32, 1
    %p270 = por %p268, %p269
    %p272 = scmp.ne.s32.totalorder %s257, %s271
    %p273 = scmp.eq.s32.totalorder %s32, 0
    %p274 = por %p272, %p273
    %s276 = sadd.s32 %s275, 1
    %p279 = scmp.eq.s32.totalorder %s26, 1
    %p280 = scmp.ne.s32.totalorder %s275, %s277
    %p281 = scmp.eq.s32.totalorder %s26, 0
    %p282 = por %p280, %p281
    %p283 = scmp.ne.s32.totalorder %s275, %s277
    %p284 = scmp.eq.s32.totalorder %s31, 1
    %p285 = por %p283, %p284
    %p286 = scmp.ne.s32.totalorder %s277, %s278
    %p287 = scmp.eq.s32.totalorder %s31, 0
    %p288 = por %p286, %p287
    %p289 = scmp.ne.s32.totalorder %s277, %s278
    %p290 = scmp.eq.s32.totalorder %s32, 1
    %p291 = por %p289, %p290
    %p293 = scmp.ne.s32.totalorder %s278, %s292
    %p294 = scmp.eq.s32.totalorder %s32, 0
    %p295 = por %p293, %p294
    %s297 = sadd.s32 %s296, 1
    %p300 = scmp.eq.s32.totalorder %s26, 1
    %p301 = scmp.ne.s32.totalorder %s296, %s298
    %p302 = scmp.eq.s32.totalorder %s26, 0
    %p303 = por %p301, %p302
    %p304 = scmp.ne.s32.totalorder %s296, %s298
    %p305 = scmp.eq.s32.totalorder %s31, 1
    %p306 = por %p304, %p305
    %p307 = scmp.ne.s32.totalorder %s298, %s299
    %p308 = scmp.eq.s32.totalorder %s31, 0
    %p309 = por %p307, %p308
    %p310 = scmp.ne.s32.totalorder %s298, %s299
    %p311 = scmp.eq.s32.totalorder %s32, 1
    %p312 = por %p310, %p311
    %p314 = scmp.ne.s32.totalorder %s299, %s313
    %p315 = scmp.eq.s32.totalorder %s32, 0
    %p316 = por %p314, %p315
    %s318 = sadd.s32 %s317, 1
    %p321 = scmp.eq.s32.totalorder %s26, 1
    %p322 = scmp.ne.s32.totalorder %s317, %s319
    %p323 = scmp.eq.s32.totalorder %s26, 0
    %p324 = por %p322, %p323
    %p325 = scmp.ne.s32.totalorder %s317, %s319
    %p326 = scmp.eq.s32.totalorder %s31, 1
    %p327 = por %p325, %p326
    %p328 = scmp.ne.s32.totalorder %s319, %s320
    %p329 = scmp.eq.s32.totalorder %s31, 0
    %p330 = por %p328, %p329
    %p331 = scmp.ne.s32.totalorder %s319, %s320
    %p332 = scmp.eq.s32.totalorder %s32, 1
    %p333 = por %p331, %p332
    %p335 = scmp.ne.s32.totalorder %s320, %s334
    %p336 = scmp.eq.s32.totalorder %s32, 0
    %p337 = por %p335, %p336
    %s339 = sadd.s32 %s338, 1
    %p342 = scmp.eq.s32.totalorder %s26, 1
    %p343 = scmp.ne.s32.totalorder %s338, %s340
    %p344 = scmp.eq.s32.totalorder %s26, 0
    %p345 = por %p343, %p344
    %p346 = scmp.ne.s32.totalorder %s338, %s340
    %p347 = scmp.eq.s32.totalorder %s31, 1
    %p348 = por %p346, %p347
    %p349 = scmp.ne.s32.totalorder %s340, %s341
    %p350 = scmp.eq.s32.totalorder %s31, 0
    %p351 = por %p349, %p350
    %p352 = scmp.ne.s32.totalorder %s340, %s341
    %p353 = scmp.eq.s32.totalorder %s32, 1
    %p354 = por %p352, %p353
    %p356 = scmp.ne.s32.totalorder %s341, %s355
    %p357 = scmp.eq.s32.totalorder %s32, 0
    %p358 = por %p356, %p357
    %s360 = sadd.s32 %s359, 1
    %p363 = scmp.eq.s32.totalorder %s26, 1
    %p364 = scmp.ne.s32.totalorder %s359, %s361
    %p365 = scmp.eq.s32.totalorder %s26, 0
    %p366 = por %p364, %p365
    %p367 = scmp.ne.s32.totalorder %s359, %s361
    %p368 = scmp.eq.s32.totalorder %s31, 1
    %p369 = por %p367, %p368
    %p370 = scmp.ne.s32.totalorder %s361, %s362
    %p371 = scmp.eq.s32.totalorder %s31, 0
    %p372 = por %p370, %p371
    %p373 = scmp.ne.s32.totalorder %s361, %s362
    %p374 = scmp.eq.s32.totalorder %s32, 1
    %p375 = por %p373, %p374
    %p377 = scmp.ne.s32.totalorder %s362, %s376
    %p378 = scmp.eq.s32.totalorder %s32, 0
    %p379 = por %p377, %p378
    %s381 = sadd.s32 %s380, 1
    %p384 = scmp.eq.s32.totalorder %s26, 1
    %p385 = scmp.ne.s32.totalorder %s380, %s382
    %p386 = scmp.eq.s32.totalorder %s26, 0
    %p387 = por %p385, %p386
    %p388 = scmp.ne.s32.totalorder %s380, %s382
    %p389 = scmp.eq.s32.totalorder %s31, 1
    %p390 = por %p388, %p389
    %p391 = scmp.ne.s32.totalorder %s382, %s383
    %p392 = scmp.eq.s32.totalorder %s31, 0
    %p393 = por %p391, %p392
    %p394 = scmp.ne.s32.totalorder %s382, %s383
    %p395 = scmp.eq.s32.totalorder %s32, 1
    %p396 = por %p394, %p395
    %p398 = scmp.ne.s32.totalorder %s383, %s397
    %p399 = scmp.eq.s32.totalorder %s32, 0
    %p400 = por %p398, %p399
    %s402 = sadd.s32 %s401, 1
    %p405 = scmp.eq.s32.totalorder %s26, 1
    %p406 = scmp.ne.s32.totalorder %s401, %s403
    %p407 = scmp.eq.s32.totalorder %s26, 0
    %p408 = por %p406, %p407
    %p409 = scmp.ne.s32.totalorder %s401, %s403
    %p410 = scmp.eq.s32.totalorder %s31, 1
    %p411 = por %p409, %p410
    %p412 = scmp.ne.s32.totalorder %s403, %s404
    %p413 = scmp.eq.s32.totalorder %s31, 0
    %p414 = por %p412, %p413
    %p415 = scmp.ne.s32.totalorder %s403, %s404
    %p416 = scmp.eq.s32.totalorder %s32, 1
    %p417 = por %p415, %p416
    %p419 = scmp.ne.s32.totalorder %s404, %s418
    %p420 = scmp.eq.s32.totalorder %s32, 0
    %p421 = por %p419, %p420
    %s423 = sadd.s32 %s422, 1
    %p426 = scmp.eq.s32.totalorder %s26, 1
    %p427 = scmp.ne.s32.totalorder %s422, %s424
    %p428 = scmp.eq.s32.totalorder %s26, 0
    %p429 = por %p427, %p428
    %p430 = scmp.ne.s32.totalorder %s422, %s424
    %p431 = scmp.eq.s32.totalorder %s31, 1
    %p432 = por %p430, %p431
    %p433 = scmp.ne.s32.totalorder %s424, %s425
    %p434 = scmp.eq.s32.totalorder %s31, 0
    %p435 = por %p433, %p434
    %p436 = scmp.ne.s32.totalorder %s424, %s425
    %p437 = scmp.eq.s32.totalorder %s32, 1
    %p438 = por %p436, %p437
    %p440 = scmp.ne.s32.totalorder %s425, %s439
    %p441 = scmp.eq.s32.totalorder %s32, 0
    %p442 = por %p440, %p441
    %s444 = sadd.s32 %s443, 1
    %p447 = scmp.eq.s32.totalorder %s26, 1
    %p448 = scmp.ne.s32.totalorder %s443, %s445
    %p449 = scmp.eq.s32.totalorder %s26, 0
    %p450 = por %p448, %p449
    %p451 = scmp.ne.s32.totalorder %s443, %s445
    %p452 = scmp.eq.s32.totalorder %s31, 1
    %p453 = por %p451, %p452
    %p454 = scmp.ne.s32.totalorder %s445, %s446
    %p455 = scmp.eq.s32.totalorder %s31, 0
    %p456 = por %p454, %p455
    %p457 = scmp.ne.s32.totalorder %s445, %s446
    %p458 = scmp.eq.s32.totalorder %s32, 1
    %p459 = por %p457, %p458
    %p461 = scmp.ne.s32.totalorder %s446, %s460
    %p462 = scmp.eq.s32.totalorder %s32, 0
    %p463 = por %p461, %p462
    %s464 = ssub.s32 %s26, %s33
    %p465 = scmp.eq.s32.totalorder %s464, 0
    %s467 = sadd.s32 %s466, 1
    %s468 = scalar_select %p465, %s466, %s467
    %p471 = pneg %p465
    %p472 = scmp.eq.s32.totalorder %s26, 1
    %p473 = por %p471, %p472
    %p474 = scmp.ne.s32.totalorder %s466, %s469
    %p475 = scmp.eq.s32.totalorder %s26, 0
    %p476 = por %p474, %p475
    %p477 = scmp.ne.s32.totalorder %s466, %s469
    %p478 = scmp.eq.s32.totalorder %s31, 1
    %p479 = por %p477, %p478
    %p480 = scmp.ne.s32.totalorder %s469, %s470
    %p481 = scmp.eq.s32.totalorder %s31, 0
    %p482 = por %p480, %p481
    %p483 = scmp.ne.s32.totalorder %s469, %s470
    %p484 = scmp.eq.s32.totalorder %s32, 1
    %p485 = por %p483, %p484
    %p487 = scmp.ne.s32.totalorder %s470, %s486
    %p488 = scmp.eq.s32.totalorder %s32, 0
    %p489 = por %p487, %p488
    %p490 = scmp.le.s32.totalorder 1, %s26
    %p491 = scmp.lt.s32.totalorder %s26, 3
    %p492 = pnand %p490, %p491
    %p493 = pneg %p492
    // Predicated region
    $region9: #{stable_transformer_layer.3} parent=5 // pred_check
      _
    $region10: #{stable_transformer_layer.3} parent=5 // pred_check_branch
      %495 = sbr.rel (%p492) target = $region12
    $region11: #{stable_transformer_layer.3} parent=5 // pred_region
      %s496 = ssub.s32 %s26, 1
      // Predicated region
      $region13: #{stable_transformer_layer.3} parent=11 // pred_check
        %p497 = pneg %p99
      $region14: #{stable_transformer_layer.3} parent=11 // pred_check_branch
        %499 = sbr.rel (%p497) target = $region16
      $region15: #{stable_transformer_layer.3} parent=11 // pred_region
        _
      $region16: #{stable_transformer_layer.3} parent=11 // pred_fallthru
        _
      // Predicated region
      $region17: #{stable_transformer_layer.3} parent=11 // pred_check
        %p500 = pneg %p120
      $region18: #{stable_transformer_layer.3} parent=11 // pred_check_branch
        %502 = sbr.rel (%p500) target = $region20
      $region19: #{stable_transformer_layer.3} parent=11 // pred_region
        _
      $region20: #{stable_transformer_layer.3} parent=11 // pred_fallthru
        _
      // Predicated region
      $region21: #{stable_transformer_layer.3} parent=11 // pred_check
        %p503 = pneg %p141
      $region22: #{stable_transformer_layer.3} parent=11 // pred_check_branch
        %505 = sbr.rel (%p503) target = $region24
      $region23: #{stable_transformer_layer.3} parent=11 // pred_region
        _
      $region24: #{stable_transformer_layer.3} parent=11 // pred_fallthru
        _
      // Predicated region
      $region25: #{stable_transformer_layer.3} parent=11 // pred_check
        %p506 = pneg %p162
      $region26: #{stable_transformer_layer.3} parent=11 // pred_check_branch
        %508 = sbr.rel (%p506) target = $region28
      $region27: #{stable_transformer_layer.3} parent=11 // pred_region
        _
      $region28: #{stable_transformer_layer.3} parent=11 // pred_fallthru
        _
      // Predicated region
      $region29: #{stable_transformer_layer.3} parent=11 // pred_check
        %p509 = pneg %p183
      $region30: #{stable_transformer_layer.3} parent=11 // pred_check_branch
        %511 = sbr.rel (%p509) target = $region32
      $region31: #{stable_transformer_layer.3} parent=11 // pred_region
        _
      $region32: #{stable_transformer_layer.3} parent=11 // pred_fallthru
        _
      // Predicated region
      $region33: #{stable_transformer_layer.3} parent=11 // pred_check
        %p512 = pneg %p204
      $region34: #{stable_transformer_layer.3} parent=11 // pred_check_branch
        %514 = sbr.rel (%p512) target = $region36
      $region35: #{stable_transformer_layer.3} parent=11 // pred_region
        _
      $region36: #{stable_transformer_layer.3} parent=11 // pred_fallthru
        _
      // Predicated region
      $region37: #{stable_transformer_layer.3} parent=11 // pred_check
        %p515 = pneg %p225
      $region38: #{stable_transformer_layer.3} parent=11 // pred_check_branch
        %517 = sbr.rel (%p515) target = $region40
      $region39: #{stable_transformer_layer.3} parent=11 // pred_region
        _
      $region40: #{stable_transformer_layer.3} parent=11 // pred_fallthru
        _
      // Predicated region
      $region41: #{stable_transformer_layer.3} parent=11 // pred_check
        %p518 = pneg %p246
      $region42: #{stable_transformer_layer.3} parent=11 // pred_check_branch
        %520 = sbr.rel (%p518) target = $region44
      $region43: #{stable_transformer_layer.3} parent=11 // pred_region
        _
      $region44: #{stable_transformer_layer.3} parent=11 // pred_fallthru
        _
      // Predicated region
      $region45: #{stable_transformer_layer.3} parent=11 // pred_check
        %p521 = pneg %p267
      $region46: #{stable_transformer_layer.3} parent=11 // pred_check_branch
        %523 = sbr.rel (%p521) target = $region48
      $region47: #{stable_transformer_layer.3} parent=11 // pred_region
        _
      $region48: #{stable_transformer_layer.3} parent=11 // pred_fallthru
        _
      // Predicated region
      $region49: #{stable_transformer_layer.3} parent=11 // pred_check
        %p524 = pneg %p288
      $region50: #{stable_transformer_layer.3} parent=11 // pred_check_branch
        %526 = sbr.rel (%p524) target = $region52
      $region51: #{stable_transformer_layer.3} parent=11 // pred_region
        _
      $region52: #{stable_transformer_layer.3} parent=11 // pred_fallthru
        _
      // Predicated region
      $region53: #{stable_transformer_layer.3} parent=11 // pred_check
        %p527 = pneg %p309
      $region54: #{stable_transformer_layer.3} parent=11 // pred_check_branch
        %529 = sbr.rel (%p527) target = $region56
      $region55: #{stable_transformer_layer.3} parent=11 // pred_region
        _
      $region56: #{stable_transformer_layer.3} parent=11 // pred_fallthru
        _
      // Predicated region
      $region57: #{stable_transformer_layer.3} parent=11 // pred_check
        %p530 = pneg %p330
      $region58: #{stable_transformer_layer.3} parent=11 // pred_check_branch
        %532 = sbr.rel (%p530) target = $region60
      $region59: #{stable_transformer_layer.3} parent=11 // pred_region
        _
      $region60: #{stable_transformer_layer.3} parent=11 // pred_fallthru
        _
      // Predicated region
      $region61: #{stable_transformer_layer.3} parent=11 // pred_check
        %p533 = pneg %p351
      $region62: #{stable_transformer_layer.3} parent=11 // pred_check_branch
        %535 = sbr.rel (%p533) target = $region64
      $region63: #{stable_transformer_layer.3} parent=11 // pred_region
        _
      $region64: #{stable_transformer_layer.3} parent=11 // pred_fallthru
        _
      // Predicated region
      $region65: #{stable_transformer_layer.3} parent=11 // pred_check
        %p536 = pneg %p372
      $region66: #{stable_transformer_layer.3} parent=11 // pred_check_branch
        %538 = sbr.rel (%p536) target = $region68
      $region67: #{stable_transformer_layer.3} parent=11 // pred_region
        _
      $region68: #{stable_transformer_layer.3} parent=11 // pred_fallthru
        _
      // Predicated region
      $region69: #{stable_transformer_layer.3} parent=11 // pred_check
        %p539 = pneg %p393
      $region70: #{stable_transformer_layer.3} parent=11 // pred_check_branch
        %541 = sbr.rel (%p539) target = $region72
      $region71: #{stable_transformer_layer.3} parent=11 // pred_region
        _
      $region72: #{stable_transformer_layer.3} parent=11 // pred_fallthru
        _
      // Predicated region
      $region73: #{stable_transformer_layer.3} parent=11 // pred_check
        %p542 = pneg %p414
      $region74: #{stable_transformer_layer.3} parent=11 // pred_check_branch
        %544 = sbr.rel (%p542) target = $region76
      $region75: #{stable_transformer_layer.3} parent=11 // pred_region
        _
      $region76: #{stable_transformer_layer.3} parent=11 // pred_fallthru
        _
      // Predicated region
      $region77: #{stable_transformer_layer.3} parent=11 // pred_check
        %p545 = pneg %p435
      $region78: #{stable_transformer_layer.3} parent=11 // pred_check_branch
        %547 = sbr.rel (%p545) target = $region80
      $region79: #{stable_transformer_layer.3} parent=11 // pred_region
        _
      $region80: #{stable_transformer_layer.3} parent=11 // pred_fallthru
        _
      // Predicated region
      $region81: #{stable_transformer_layer.3} parent=11 // pred_check
        %p548 = pneg %p456
      $region82: #{stable_transformer_layer.3} parent=11 // pred_check_branch
        %550 = sbr.rel (%p548) target = $region84
      $region83: #{stable_transformer_layer.3} parent=11 // pred_region
        _
      $region84: #{stable_transformer_layer.3} parent=11 // pred_fallthru
        _
    $region12: #{stable_transformer_layer.3} parent=5 // pred_fallthru
      _
    %p551 = scmp.lt.s32.totalorder %s26, 2
    // Predicated region
    $region85: #{stable_transformer_layer.3} parent=5 // pred_check
      %p552 = pneg %p551
    $region86: #{stable_transformer_layer.3} parent=5 // pred_check_branch
      %554 = sbr.rel (%p552) target = $region88
    $region87: #{stable_transformer_layer.3} parent=5 // pred_region
      // Predicated region
      $region89: #{stable_transformer_layer.3} parent=87 // pred_check
        %p555 = pneg %p46
      $region90: #{stable_transformer_layer.3} parent=87 // pred_check_branch
        %557 = sbr.rel (%p555) target = $region92
      $region91: #{stable_transformer_layer.3} parent=87 // pred_region
        %p558 = scmp.lt.s32.totalorder %s26, 1
        %s559 = scalar_select %p558, %s26, 1
        %s560 = smul.addr %s559, 8
        %s561 = scalar_lea.vmem %s0, %s560
      $region92: #{stable_transformer_layer.3} parent=87 // pred_fallthru
        _
      // Predicated region
      $region93: #{stable_transformer_layer.3} parent=87 // pred_check
        %p562 = pneg %p72
      $region94: #{stable_transformer_layer.3} parent=87 // pred_check_branch
        %564 = sbr.rel (%p562) target = $region96
      $region95: #{stable_transformer_layer.3} parent=87 // pred_region
        %p565 = scmp.lt.s32.totalorder %s26, 1
        %s566 = scalar_select %p565, %s26, 1
        %s567 = smul.addr %s566, 8
        %s568 = scalar_lea.vmem %s1, %s567
      $region96: #{stable_transformer_layer.3} parent=87 // pred_fallthru
        _
    $region88: #{stable_transformer_layer.3} parent=5 // pred_fallthru
      _
    %p569 = scmp.le.s32.totalorder 1, %s26
    %p570 = scmp.lt.s32.totalorder %s26, 3
    %p571 = pnand %p569, %p570
    %p572 = pneg %p571
    // Predicated region
    $region97: #{stable_transformer_layer.3} parent=5 // pred_check
      _
    $region98: #{stable_transformer_layer.3} parent=5 // pred_check_branch
      %574 = sbr.rel (%p571) target = $region100
    $region99: #{stable_transformer_layer.3} parent=5 // pred_region
      %s575 = ssub.s32 %s26, 1
      %p576 = scmp.lt.s32.totalorder %s31, 1
      %s577 = scalar_select %p576, %s31, 1
      %s578 = smul.addr %s577, 8
      %s579 = scalar_lea.vmem %s0, %s578
      %p580 = pneg %p52
      %p581 = pneg %p49
      %p582 = scmp.lt.s32.totalorder %s31, 1
      %s583 = scalar_select %p582, %s31, 1
      %s584 = smul.addr %s583, 8
      %s585 = scalar_lea.vmem %s1, %s584
      %p586 = pneg %p78
      %p587 = pneg %p75
      %p588 = pneg %p99
      %p589 = pneg %p96
      %p590 = pneg %p120
      %p591 = pneg %p117
      %p592 = pneg %p141
      %p593 = pneg %p138
      %p594 = pneg %p162
      %p595 = pneg %p159
      %p596 = pneg %p183
      %p597 = pneg %p180
      %p598 = pneg %p204
      %p599 = pneg %p201
      %p600 = pneg %p225
      %p601 = pneg %p222
      %p602 = pneg %p246
      %p603 = pneg %p243
      %p604 = pneg %p267
      %p605 = pneg %p264
      %p606 = pneg %p288
      %p607 = pneg %p285
      %p608 = pneg %p309
      %p609 = pneg %p306
      %p610 = pneg %p330
      %p611 = pneg %p327
      %p612 = pneg %p351
      %p613 = pneg %p348
      %p614 = pneg %p372
      %p615 = pneg %p369
      %p616 = pneg %p393
      %p617 = pneg %p390
      %p618 = pneg %p414
      %p619 = pneg %p411
      %p620 = pneg %p435
      %p621 = pneg %p432
      %p622 = pneg %p456
      %p623 = pneg %p453
      %p624 = pneg %p482
      %p625 = pneg %p479
      %p626 = scmp.lt.s32.totalorder %s31, 1
      %s627 = scalar_select %p626, %s31, 1
      %s628 = smul.addr %s627, 8
      %s629 = scalar_lea.vmem %s20, %s628
      %p630 = scmp.lt.s32.totalorder %s31, 1
      %s631 = scalar_select %p630, %s31, 1
      %s632 = smul.addr %s631, 8
      %s633 = scalar_lea.vmem %s0, %s632
      %p634 = scmp.lt.s32.totalorder %s31, 1
      %s635 = scalar_select %p634, %s31, 1
      %s636 = smul.addr %s635, 8
      %s637 = scalar_lea.vmem %s1, %s636
      %p638 = scmp.lt.s32.totalorder %s31, 1
      %s639 = scalar_select %p638, %s31, 1
      %s640 = smul.addr %s639, 8
      %s641 = scalar_lea.vmem %s20, %s640
      %v642 = vld [vmem:[%s633] sm:$0xff]
      %v643 = vld [vmem:[%s637] sm:$0xff]
      %v644 = vld [vmem:[%s2] sm:$0xff]
      %v645 = vld [vmem:[%s2 + $0x8] sm:$0xff]
      %v646 = vld [vmem:[%s2 + $0x10] sm:$0xff]
      %v647 = vld [vmem:[%s2 + $0x18] sm:$0xff]
      %v648 = vld [vmem:[%s3] sm:$0x1]
      %v650 = vlaneseq
      %v651 = vshrl.u32 %v650, 7
      %v652 = vsub.s32 0, %v651
      %v653 = vrot.slane %v648, %v652
      %vm655 = vcmask 261120
      %v657 = vsel %vm655, %v643, 0
      %659 = vmatprep.subr.mxu0 0.0
      %660 = vmatpush1.msra.mxu0 0.0
      %661 = vmatprep.subr.mxu0 0.0
      %662 = vmatpush1.msra.mxu0 0.0
      %663 = vmatprep.subr.mxu0 0.0
      %664 = vmatpush1.msra.mxu0 0.0
      %665 = vmatprep.subr.mxu0 0.0
      %666 = vmatpush1.msra.mxu0 0.0
      %667 = vmatprep.subr.mxu0 0.0
      %668 = vmatpush1.msra.mxu0 0.0
      %669 = vmatprep.subr.mxu0 0.0
      %670 = vmatpush1.msra.mxu0 0.0
      %671 = vmatprep.subr.mxu0 0.0
      %672 = vmatpush1.msra.mxu0 0.0
      %673 = vmatprep.subr.mxu0 0.0
      %674 = vmatpush1.msra.mxu0 0.0
      %675 = vmatprep.subr.mxu0 0.0
      %676 = vmatpush1.msra.mxu0 0.0
      %677 = vmatprep.subr.mxu0 0.0
      %678 = vmatpush1.msra.mxu0 0.0
      %679 = vmatprep.subr.mxu0 0.0
      %680 = vmatpush1.msra.mxu0 0.0
      %681 = vmatprep.subr.mxu0 0.0
      %682 = vmatpush1.msra.mxu0 0.0
      %683 = vmatprep.subr.mxu0 0.0
      %684 = vmatpush1.msra.mxu0 %v647
      %685 = vmatprep.subr.mxu0 0.0
      %686 = vmatpush1.msra.mxu0 %v646
      %687 = vmatprep.subr.mxu0 0.0
      %688 = vmatpush1.msra.mxu0 %v645
      %689 = vmatprep.subr.mxu0 0.0
      %690 = vmatpush1.msra.mxu0 %v644
      %691 = vmatprep.subr.mxu0 0.0
      %692 = vmatpush2.msra.mxu0 0.0
      %693 = vmatprep.subr.mxu0 0.0
      %694 = vmatpush2.msra.mxu0 0.0
      %695 = vmatprep.subr.mxu0 0.0
      %696 = vmatpush2.msra.mxu0 0.0
      %697 = vmatprep.subr.mxu0 0.0
      %698 = vmatpush2.msra.mxu0 0.0
      %699 = vmatprep.subr.mxu0 0.0
      %700 = vmatpush2.msra.mxu0 0.0
      %701 = vmatprep.subr.mxu0 0.0
      %702 = vmatpush2.msra.mxu0 0.0
      %703 = vmatprep.subr.mxu0 0.0
      %704 = vmatpush2.msra.mxu0 0.0
      %705 = vmatprep.subr.mxu0 0.0
      %706 = vmatpush2.msra.mxu0 0.0
      %707 = vmatprep.subr.mxu0 0.0
      %708 = vmatpush2.msra.mxu0 0.0
      %709 = vmatprep.subr.mxu0 0.0
      %710 = vmatpush2.msra.mxu0 0.0
      %711 = vmatprep.subr.mxu0 0.0
      %712 = vmatpush2.msra.mxu0 0.0
      %713 = vmatprep.subr.mxu0 0.0
      %714 = vmatpush2.msra.mxu0 0.0
      %715 = vmatprep.subr.mxu0 0.0
      %716 = vmatpush2.msra.mxu0 0.0
      %717 = vmatprep.subr.mxu0 0.0
      %718 = vmatpush2.msra.mxu0 0.0
      %719 = vmatprep.subr.mxu0 0.0
      %720 = vmatpush2.msra.mxu0 0.0
      %721 = vmatprep.subr.mxu0 0.0
      %722 = vmatpush2.msra.mxu0 0.0
      %723 = vmatprep.mubr.f32.mxu0 0.0
      %724 = vmatmul.mubr.f32.gmra.mxu0 %v657
      %v725 = vpop.f32.mrf.mxu0
      %v726 = vadd.f32 %v653, %v725
      %v727 = vpop.f32.mrf.mxu0
      %728 = vdwg.mxu0
      %v729 = vld [vmem:[%s4] sm:$0xff]
      %v730 = vld [vmem:[%s4 + $0x8] sm:$0xff]
      %v731 = vld [vmem:[%s4 + $0x10] sm:$0xff]
      %v732 = vld [vmem:[%s4 + $0x18] sm:$0xff]
      %v733 = vld [vmem:[%s5] sm:$0x1]
      %v735 = vlaneseq
      %v736 = vshrl.u32 %v735, 7
      %v737 = vsub.s32 0, %v736
      %v738 = vrot.slane %v733, %v737
      %v741 = vsel %vm655, %v642, 0
      %743 = vmatprep.subr.mxu0 0.0
      %744 = vmatpush1.msra.mxu0 0.0
      %745 = vmatprep.subr.mxu0 0.0
      %746 = vmatpush1.msra.mxu0 0.0
      %747 = vmatprep.subr.mxu0 0.0
      %748 = vmatpush1.msra.mxu0 0.0
      %749 = vmatprep.subr.mxu0 0.0
      %750 = vmatpush1.msra.mxu0 0.0
      %751 = vmatprep.subr.mxu0 0.0
      %752 = vmatpush1.msra.mxu0 0.0
      %753 = vmatprep.subr.mxu0 0.0
      %754 = vmatpush1.msra.mxu0 0.0
      %755 = vmatprep.subr.mxu0 0.0
      %756 = vmatpush1.msra.mxu0 0.0
      %757 = vmatprep.subr.mxu0 0.0
      %758 = vmatpush1.msra.mxu0 0.0
      %759 = vmatprep.subr.mxu0 0.0
      %760 = vmatpush1.msra.mxu0 0.0
      %761 = vmatprep.subr.mxu0 0.0
      %762 = vmatpush1.msra.mxu0 0.0
      %763 = vmatprep.subr.mxu0 0.0
      %764 = vmatpush1.msra.mxu0 0.0
      %765 = vmatprep.subr.mxu0 0.0
      %766 = vmatpush1.msra.mxu0 0.0
      %767 = vmatprep.subr.mxu0 0.0
      %768 = vmatpush1.msra.mxu0 %v732
      %769 = vmatprep.subr.mxu0 0.0
      %770 = vmatpush1.msra.mxu0 %v731
      %771 = vmatprep.subr.mxu0 0.0
      %772 = vmatpush1.msra.mxu0 %v730
      %773 = vmatprep.subr.mxu0 0.0
      %774 = vmatpush1.msra.mxu0 %v729
      %775 = vmatprep.subr.mxu0 0.0
      %776 = vmatpush2.msra.mxu0 0.0
      %777 = vmatprep.subr.mxu0 0.0
      %778 = vmatpush2.msra.mxu0 0.0
      %779 = vmatprep.subr.mxu0 0.0
      %780 = vmatpush2.msra.mxu0 0.0
      %781 = vmatprep.subr.mxu0 0.0
      %782 = vmatpush2.msra.mxu0 0.0
      %783 = vmatprep.subr.mxu0 0.0
      %784 = vmatpush2.msra.mxu0 0.0
      %785 = vmatprep.subr.mxu0 0.0
      %786 = vmatpush2.msra.mxu0 0.0
      %787 = vmatprep.subr.mxu0 0.0
      %788 = vmatpush2.msra.mxu0 0.0
      %789 = vmatprep.subr.mxu0 0.0
      %790 = vmatpush2.msra.mxu0 0.0
      %791 = vmatprep.subr.mxu0 0.0
      %792 = vmatpush2.msra.mxu0 0.0
      %793 = vmatprep.subr.mxu0 0.0
      %794 = vmatpush2.msra.mxu0 0.0
      %795 = vmatprep.subr.mxu0 0.0
      %796 = vmatpush2.msra.mxu0 0.0
      %797 = vmatprep.subr.mxu0 0.0
      %798 = vmatpush2.msra.mxu0 0.0
      %799 = vmatprep.subr.mxu0 0.0
      %800 = vmatpush2.msra.mxu0 0.0
      %801 = vmatprep.subr.mxu0 0.0
      %802 = vmatpush2.msra.mxu0 0.0
      %803 = vmatprep.subr.mxu0 0.0
      %804 = vmatpush2.msra.mxu0 0.0
      %805 = vmatprep.subr.mxu0 0.0
      %806 = vmatpush2.msra.mxu0 0.0
      %807 = vmatprep.mubr.f32.mxu0 0.0
      %808 = vmatmul.mubr.f32.gmra.mxu0 %v741
      %v809 = vpop.f32.mrf.mxu0
      %v810 = vadd.f32 %v738, %v809
      %v811 = vpop.f32.mrf.mxu0
      %812 = vdwg.mxu0
      %v813 = vadd.f32 %v726, %v810
      %v814 = vxor.u32 %v813, 2147483648
      %v815 = vmul.f32 %v814, 1.442695
      %v816 = vpow.pop %v815
      %v817 = vadd.f32 %v816, 1.0
      %v818 = vrcp.pop %v817
      %v819 = vmul.f32 1.0, %v818
      %v820 = vsub.f32 %v813, 0.1
      %v821 = vxor.u32 %v820, 2147483648
      %v822 = vmul.f32 %v821, 1.442695
      %v823 = vpow.pop %v822
      %v824 = vadd.f32 %v823, 1.0
      %v825 = vrcp.pop %v824
      %v826 = vmul.f32 1.0, %v825
      %v827 = vmul.f32 %v819, %v642
      %v828 = vld [vmem:[%s6] sm:$0xff]
      %v829 = vld [vmem:[%s6 + $0x8] sm:$0xff]
      %v830 = vld [vmem:[%s6 + $0x10] sm:$0xff]
      %v831 = vld [vmem:[%s6 + $0x18] sm:$0xff]
      %v833 = vsel %vm655, %v827, 0
      %835 = vmatprep.subr.mxu0 0.0
      %836 = vmatpush1.msra.mxu0 0.0
      %837 = vmatprep.subr.mxu0 0.0
      %838 = vmatpush1.msra.mxu0 0.0
      %839 = vmatprep.subr.mxu0 0.0
      %840 = vmatpush1.msra.mxu0 0.0
      %841 = vmatprep.subr.mxu0 0.0
      %842 = vmatpush1.msra.mxu0 0.0
      %843 = vmatprep.subr.mxu0 0.0
      %844 = vmatpush1.msra.mxu0 0.0
      %845 = vmatprep.subr.mxu0 0.0
      %846 = vmatpush1.msra.mxu0 0.0
      %847 = vmatprep.subr.mxu0 0.0
      %848 = vmatpush1.msra.mxu0 0.0
      %849 = vmatprep.subr.mxu0 0.0
      %850 = vmatpush1.msra.mxu0 0.0
      %851 = vmatprep.subr.mxu0 0.0
      %852 = vmatpush1.msra.mxu0 0.0
      %853 = vmatprep.subr.mxu0 0.0
      %854 = vmatpush1.msra.mxu0 0.0
      %855 = vmatprep.subr.mxu0 0.0
      %856 = vmatpush1.msra.mxu0 0.0
      %857 = vmatprep.subr.mxu0 0.0
      %858 = vmatpush1.msra.mxu0 0.0
      %859 = vmatprep.subr.mxu0 0.0
      %860 = vmatpush1.msra.mxu0 %v831
      %861 = vmatprep.subr.mxu0 0.0
      %862 = vmatpush1.msra.mxu0 %v830
      %863 = vmatprep.subr.mxu0 0.0
      %864 = vmatpush1.msra.mxu0 %v829
      %865 = vmatprep.subr.mxu0 0.0
      %866 = vmatpush1.msra.mxu0 %v828
      %867 = vmatprep.subr.mxu0 0.0
      %868 = vmatpush2.msra.mxu0 0.0
      %869 = vmatprep.subr.mxu0 0.0
      %870 = vmatpush2.msra.mxu0 0.0
      %871 = vmatprep.subr.mxu0 0.0
      %872 = vmatpush2.msra.mxu0 0.0
      %873 = vmatprep.subr.mxu0 0.0
      %874 = vmatpush2.msra.mxu0 0.0
      %875 = vmatprep.subr.mxu0 0.0
      %876 = vmatpush2.msra.mxu0 0.0
      %877 = vmatprep.subr.mxu0 0.0
      %878 = vmatpush2.msra.mxu0 0.0
      %879 = vmatprep.subr.mxu0 0.0
      %880 = vmatpush2.msra.mxu0 0.0
      %881 = vmatprep.subr.mxu0 0.0
      %882 = vmatpush2.msra.mxu0 0.0
      %883 = vmatprep.subr.mxu0 0.0
      %884 = vmatpush2.msra.mxu0 0.0
      %885 = vmatprep.subr.mxu0 0.0
      %886 = vmatpush2.msra.mxu0 0.0
      %887 = vmatprep.subr.mxu0 0.0
      %888 = vmatpush2.msra.mxu0 0.0
      %889 = vmatprep.subr.mxu0 0.0
      %890 = vmatpush2.msra.mxu0 0.0
      %891 = vmatprep.subr.mxu0 0.0
      %892 = vmatpush2.msra.mxu0 0.0
      %893 = vmatprep.subr.mxu0 0.0
      %894 = vmatpush2.msra.mxu0 0.0
      %895 = vmatprep.subr.mxu0 0.0
      %896 = vmatpush2.msra.mxu0 0.0
      %897 = vmatprep.subr.mxu0 0.0
      %898 = vmatpush2.msra.mxu0 0.0
      %899 = vmatprep.mubr.f32.mxu0 0.0
      %900 = vmatmul.mubr.f32.gmra.mxu0 %v833
      %v901 = vpop.f32.mrf.mxu0
      %v902 = vadd.f32 0.0, %v901
      %v903 = vpop.f32.mrf.mxu0
      %904 = vdwg.mxu0
      %906 = vrot.lane.b32.xlu0 %v902, 64
      %v907 = vpop.permute.xlu0 %906
      %v909 = vadd.f32 %v726, %v907
      %v910 = vld [vmem:[%s7] sm:$0x1]
      %v912 = vlaneseq
      %v913 = vshrl.u32 %v912, 7
      %v914 = vsub.s32 0, %v913
      %v915 = vrot.slane %v910, %v914
      %916 = vrot.lane.b32.xlu0 %v915, 64
      %v917 = vpop.permute.xlu0 %916
      %v919 = vadd.f32 %v909, %v917
      %v920 = vtanh.pop %v919
      %v921 = vsub.f32 1.0, %v826
      %922 = vrot.lane.b32.xlu0 %v642, 32
      %v923 = vpop.permute.xlu0 %922
      %v925 = vmul.f32 %v921, %v923
      %927 = vrot.lane.b32.xlu0 %v920, 96
      %v928 = vpop.permute.xlu0 %927
      %v930 = vmul.f32 %v826, %v928
      %v931 = vadd.f32 %v925, %v930
      %933 = vrot.lane.b32.xlu0 %v931, 96
      %v934 = vpop.permute.xlu0 %933
      %v936 = vsel %vm655, %v934, 0.0
      %937 = vadd.xlane.f32.xlu0 %v936
      %v938 = vpop.xlane.xlu0 %937
      %v939 = vrcp.pop 32.0
      %v940 = vmul.f32 %v938, %v939
      %v941 = vsub.f32 %v931, %v940
      %v942 = vmul.f32 %v941, %v941
      %944 = vrot.lane.b32.xlu0 %v942, 96
      %v945 = vpop.permute.xlu0 %944
      %v947 = vsel %vm655, %v945, 0.0
      %948 = vadd.xlane.f32.xlu0 %v947
      %v949 = vpop.xlane.xlu0 %948
      %v950 = vmul.f32 %v949, %v939
      %v951 = vadd.f32 %v950, 1e-05
      %v952 = vrsqrt.pop %v951
      %v953 = vmul.f32 %v941, %v952
      %v954 = vld [vmem:[%s8] sm:$0x1]
      %v956 = vlaneseq
      %v957 = vshrl.u32 %v956, 7
      %v958 = vsub.s32 0, %v957
      %v959 = vrot.slane %v954, %v958
      %960 = vrot.lane.b32.xlu0 %v959, 32
      %v961 = vpop.permute.xlu0 %960
      %v963 = vmul.f32 %v953, %v961
      %v964 = vld [vmem:[%s9] sm:$0x1]
      %v966 = vlaneseq
      %v967 = vshrl.u32 %v966, 7
      %v968 = vsub.s32 0, %v967
      %v969 = vrot.slane %v964, %v968
      %970 = vrot.lane.b32.xlu0 %v969, 32
      %v971 = vpop.permute.xlu0 %970
      %v973 = vadd.f32 %v963, %v971
      %v974 = vld [vmem:[%s10] sm:$0xff]
      %v975 = vld [vmem:[%s10 + $0x8] sm:$0xff]
      %v976 = vld [vmem:[%s10 + $0x10] sm:$0xff]
      %v977 = vld [vmem:[%s10 + $0x18] sm:$0xff]
      %v978 = vld [vmem:[%s11] sm:$0x1]
      %v980 = vlaneseq
      %v981 = vshrl.u32 %v980, 7
      %v982 = vsub.s32 0, %v981
      %v983 = vrot.slane %v978, %v982
      %986 = vrot.lane.b32.xlu0 %v973, 96
      %v987 = vpop.permute.xlu0 %986
      %v988 = vsel %vm655, %v987, 0
      %990 = vmatprep.subr.mxu0 0.0
      %991 = vmatpush1.msra.mxu0 0.0
      %992 = vmatprep.subr.mxu0 0.0
      %993 = vmatpush1.msra.mxu0 0.0
      %994 = vmatprep.subr.mxu0 0.0
      %995 = vmatpush1.msra.mxu0 0.0
      %996 = vmatprep.subr.mxu0 0.0
      %997 = vmatpush1.msra.mxu0 0.0
      %998 = vmatprep.subr.mxu0 0.0
      %999 = vmatpush1.msra.mxu0 0.0
      %1000 = vmatprep.subr.mxu0 0.0
      %1001 = vmatpush1.msra.mxu0 0.0
      %1002 = vmatprep.subr.mxu0 0.0
      %1003 = vmatpush1.msra.mxu0 0.0
      %1004 = vmatprep.subr.mxu0 0.0
      %1005 = vmatpush1.msra.mxu0 0.0
      %1006 = vmatprep.subr.mxu0 0.0
      %1007 = vmatpush1.msra.mxu0 0.0
      %1008 = vmatprep.subr.mxu0 0.0
      %1009 = vmatpush1.msra.mxu0 0.0
      %1010 = vmatprep.subr.mxu0 0.0
      %1011 = vmatpush1.msra.mxu0 0.0
      %1012 = vmatprep.subr.mxu0 0.0
      %1013 = vmatpush1.msra.mxu0 0.0
      %1014 = vmatprep.subr.mxu0 0.0
      %1015 = vmatpush1.msra.mxu0 %v977
      %1016 = vmatprep.subr.mxu0 0.0
      %1017 = vmatpush1.msra.mxu0 %v976
      %1018 = vmatprep.subr.mxu0 0.0
      %1019 = vmatpush1.msra.mxu0 %v975
      %1020 = vmatprep.subr.mxu0 0.0
      %1021 = vmatpush1.msra.mxu0 %v974
      %1022 = vmatprep.subr.mxu0 0.0
      %1023 = vmatpush2.msra.mxu0 0.0
      %1024 = vmatprep.subr.mxu0 0.0
      %1025 = vmatpush2.msra.mxu0 0.0
      %1026 = vmatprep.subr.mxu0 0.0
      %1027 = vmatpush2.msra.mxu0 0.0
      %1028 = vmatprep.subr.mxu0 0.0
      %1029 = vmatpush2.msra.mxu0 0.0
      %1030 = vmatprep.subr.mxu0 0.0
      %1031 = vmatpush2.msra.mxu0 0.0
      %1032 = vmatprep.subr.mxu0 0.0
      %1033 = vmatpush2.msra.mxu0 0.0
      %1034 = vmatprep.subr.mxu0 0.0
      %1035 = vmatpush2.msra.mxu0 0.0
      %1036 = vmatprep.subr.mxu0 0.0
      %1037 = vmatpush2.msra.mxu0 0.0
      %1038 = vmatprep.subr.mxu0 0.0
      %1039 = vmatpush2.msra.mxu0 0.0
      %1040 = vmatprep.subr.mxu0 0.0
      %1041 = vmatpush2.msra.mxu0 0.0
      %1042 = vmatprep.subr.mxu0 0.0
      %1043 = vmatpush2.msra.mxu0 0.0
      %1044 = vmatprep.subr.mxu0 0.0
      %1045 = vmatpush2.msra.mxu0 0.0
      %1046 = vmatprep.subr.mxu0 0.0
      %1047 = vmatpush2.msra.mxu0 0.0
      %1048 = vmatprep.subr.mxu0 0.0
      %1049 = vmatpush2.msra.mxu0 0.0
      %1050 = vmatprep.subr.mxu0 0.0
      %1051 = vmatpush2.msra.mxu0 0.0
      %1052 = vmatprep.subr.mxu0 0.0
      %1053 = vmatpush2.msra.mxu0 0.0
      %1054 = vmatprep.mubr.f32.mxu0 0.0
      %1055 = vmatmul.mubr.f32.gmra.mxu0 %v988
      %v1056 = vpop.f32.mrf.mxu0
      %v1057 = vadd.f32 %v983, %v1056
      %v1058 = vpop.f32.mrf.mxu0
      %1059 = vdwg.mxu0
      %v1060 = vmax.f32 %v1057, 0.0
      %v1061 = vld [vmem:[%s12] sm:$0xff]
      %v1062 = vld [vmem:[%s12 + $0x8] sm:$0xff]
      %v1063 = vld [vmem:[%s12 + $0x10] sm:$0xff]
      %v1064 = vld [vmem:[%s12 + $0x18] sm:$0xff]
      %v1065 = vld [vmem:[%s12 + $0x20] sm:$0xff]
      %v1066 = vld [vmem:[%s12 + $0x28] sm:$0xff]
      %v1067 = vld [vmem:[%s12 + $0x30] sm:$0xff]
      %v1068 = vld [vmem:[%s12 + $0x38] sm:$0xff]
      %v1069 = vld [vmem:[%s13] sm:$0x1]
      %v1071 = vlaneseq
      %v1072 = vshrl.u32 %v1071, 7
      %v1073 = vsub.s32 0, %v1072
      %v1074 = vrot.slane %v1069, %v1073
      %vm1076 = vcmask 523264
      %v1078 = vsel %vm1076, %v1060, 0
      %1080 = vmatprep.subr.mxu0 0.0
      %1081 = vmatpush1.msra.mxu0 0.0
      %1082 = vmatprep.subr.mxu0 0.0
      %1083 = vmatpush1.msra.mxu0 0.0
      %1084 = vmatprep.subr.mxu0 0.0
      %1085 = vmatpush1.msra.mxu0 0.0
      %1086 = vmatprep.subr.mxu0 0.0
      %1087 = vmatpush1.msra.mxu0 0.0
      %1088 = vmatprep.subr.mxu0 0.0
      %1089 = vmatpush1.msra.mxu0 0.0
      %1090 = vmatprep.subr.mxu0 0.0
      %1091 = vmatpush1.msra.mxu0 0.0
      %1092 = vmatprep.subr.mxu0 0.0
      %1093 = vmatpush1.msra.mxu0 0.0
      %1094 = vmatprep.subr.mxu0 0.0
      %1095 = vmatpush1.msra.mxu0 0.0
      %1096 = vmatprep.subr.mxu0 0.0
      %1097 = vmatpush1.msra.mxu0 %v1068
      %1098 = vmatprep.subr.mxu0 0.0
      %1099 = vmatpush1.msra.mxu0 %v1067
      %1100 = vmatprep.subr.mxu0 0.0
      %1101 = vmatpush1.msra.mxu0 %v1066
      %1102 = vmatprep.subr.mxu0 0.0
      %1103 = vmatpush1.msra.mxu0 %v1065
      %1104 = vmatprep.subr.mxu0 0.0
      %1105 = vmatpush1.msra.mxu0 %v1064
      %1106 = vmatprep.subr.mxu0 0.0
      %1107 = vmatpush1.msra.mxu0 %v1063
      %1108 = vmatprep.subr.mxu0 0.0
      %1109 = vmatpush1.msra.mxu0 %v1062
      %1110 = vmatprep.subr.mxu0 0.0
      %1111 = vmatpush1.msra.mxu0 %v1061
      %1112 = vmatprep.subr.mxu0 0.0
      %1113 = vmatpush2.msra.mxu0 0.0
      %1114 = vmatprep.subr.mxu0 0.0
      %1115 = vmatpush2.msra.mxu0 0.0
      %1116 = vmatprep.subr.mxu0 0.0
      %1117 = vmatpush2.msra.mxu0 0.0
      %1118 = vmatprep.subr.mxu0 0.0
      %1119 = vmatpush2.msra.mxu0 0.0
      %1120 = vmatprep.subr.mxu0 0.0
      %1121 = vmatpush2.msra.mxu0 0.0
      %1122 = vmatprep.subr.mxu0 0.0
      %1123 = vmatpush2.msra.mxu0 0.0
      %1124 = vmatprep.subr.mxu0 0.0
      %1125 = vmatpush2.msra.mxu0 0.0
      %1126 = vmatprep.subr.mxu0 0.0
      %1127 = vmatpush2.msra.mxu0 0.0
      %1128 = vmatprep.subr.mxu0 0.0
      %1129 = vmatpush2.msra.mxu0 0.0
      %1130 = vmatprep.subr.mxu0 0.0
      %1131 = vmatpush2.msra.mxu0 0.0
      %1132 = vmatprep.subr.mxu0 0.0
      %1133 = vmatpush2.msra.mxu0 0.0
      %1134 = vmatprep.subr.mxu0 0.0
      %1135 = vmatpush2.msra.mxu0 0.0
      %1136 = vmatprep.subr.mxu0 0.0
      %1137 = vmatpush2.msra.mxu0 0.0
      %1138 = vmatprep.subr.mxu0 0.0
      %1139 = vmatpush2.msra.mxu0 0.0
      %1140 = vmatprep.subr.mxu0 0.0
      %1141 = vmatpush2.msra.mxu0 0.0
      %1142 = vmatprep.subr.mxu0 0.0
      %1143 = vmatpush2.msra.mxu0 0.0
      %1144 = vmatprep.mubr.f32.mxu0 0.0
      %1145 = vmatmul.mubr.f32.gmra.mxu0 %v1078
      %v1146 = vpop.f32.mrf.mxu0
      %v1147 = vadd.f32 %v1074, %v1146
      %v1148 = vpop.f32.mrf.mxu0
      %1149 = vdwg.mxu0
      %v1150 = vld [vmem:[%s14] sm:$0xff]
      %v1151 = vld [vmem:[%s14 + $0x8] sm:$0xff]
      %v1152 = vld [vmem:[%s14 + $0x10] sm:$0xff]
      %v1153 = vld [vmem:[%s14 + $0x18] sm:$0xff]
      %v1154 = vld [vmem:[%s15] sm:$0x1]
      %v1156 = vlaneseq
      %v1157 = vshrl.u32 %v1156, 7
      %v1158 = vsub.s32 0, %v1157
      %v1159 = vrot.slane %v1154, %v1158
      %v1162 = vsel %vm655, %v1147, 0
      %1164 = vmatprep.subr.mxu0 0.0
      %1165 = vmatpush1.msra.mxu0 0.0
      %1166 = vmatprep.subr.mxu0 0.0
      %1167 = vmatpush1.msra.mxu0 0.0
      %1168 = vmatprep.subr.mxu0 0.0
      %1169 = vmatpush1.msra.mxu0 0.0
      %1170 = vmatprep.subr.mxu0 0.0
      %1171 = vmatpush1.msra.mxu0 0.0
      %1172 = vmatprep.subr.mxu0 0.0
      %1173 = vmatpush1.msra.mxu0 0.0
      %1174 = vmatprep.subr.mxu0 0.0
      %1175 = vmatpush1.msra.mxu0 0.0
      %1176 = vmatprep.subr.mxu0 0.0
      %1177 = vmatpush1.msra.mxu0 0.0
      %1178 = vmatprep.subr.mxu0 0.0
      %1179 = vmatpush1.msra.mxu0 0.0
      %1180 = vmatprep.subr.mxu0 0.0
      %1181 = vmatpush1.msra.mxu0 0.0
      %1182 = vmatprep.subr.mxu0 0.0
      %1183 = vmatpush1.msra.mxu0 0.0
      %1184 = vmatprep.subr.mxu0 0.0
      %1185 = vmatpush1.msra.mxu0 0.0
      %1186 = vmatprep.subr.mxu0 0.0
      %1187 = vmatpush1.msra.mxu0 0.0
      %1188 = vmatprep.subr.mxu0 0.0
      %1189 = vmatpush1.msra.mxu0 %v1153
      %1190 = vmatprep.subr.mxu0 0.0
      %1191 = vmatpush1.msra.mxu0 %v1152
      %1192 = vmatprep.subr.mxu0 0.0
      %1193 = vmatpush1.msra.mxu0 %v1151
      %1194 = vmatprep.subr.mxu0 0.0
      %1195 = vmatpush1.msra.mxu0 %v1150
      %1196 = vmatprep.subr.mxu0 0.0
      %1197 = vmatpush2.msra.mxu0 0.0
      %1198 = vmatprep.subr.mxu0 0.0
      %1199 = vmatpush2.msra.mxu0 0.0
      %1200 = vmatprep.subr.mxu0 0.0
      %1201 = vmatpush2.msra.mxu0 0.0
      %1202 = vmatprep.subr.mxu0 0.0
      %1203 = vmatpush2.msra.mxu0 0.0
      %1204 = vmatprep.subr.mxu0 0.0
      %1205 = vmatpush2.msra.mxu0 0.0
      %1206 = vmatprep.subr.mxu0 0.0
      %1207 = vmatpush2.msra.mxu0 0.0
      %1208 = vmatprep.subr.mxu0 0.0
      %1209 = vmatpush2.msra.mxu0 0.0
      %1210 = vmatprep.subr.mxu0 0.0
      %1211 = vmatpush2.msra.mxu0 0.0
      %1212 = vmatprep.subr.mxu0 0.0
      %1213 = vmatpush2.msra.mxu0 0.0
      %1214 = vmatprep.subr.mxu0 0.0
      %1215 = vmatpush2.msra.mxu0 0.0
      %1216 = vmatprep.subr.mxu0 0.0
      %1217 = vmatpush2.msra.mxu0 0.0
      %1218 = vmatprep.subr.mxu0 0.0
      %1219 = vmatpush2.msra.mxu0 0.0
      %1220 = vmatprep.subr.mxu0 0.0
      %1221 = vmatpush2.msra.mxu0 0.0
      %1222 = vmatprep.subr.mxu0 0.0
      %1223 = vmatpush2.msra.mxu0 0.0
      %1224 = vmatprep.subr.mxu0 0.0
      %1225 = vmatpush2.msra.mxu0 0.0
      %1226 = vmatprep.subr.mxu0 0.0
      %1227 = vmatpush2.msra.mxu0 0.0
      %1228 = vmatprep.mubr.f32.mxu0 0.0
      %1229 = vmatmul.mubr.f32.gmra.mxu0 %v1162
      %v1230 = vpop.f32.mrf.mxu0
      %v1231 = vadd.f32 %v1159, %v1230
      %v1232 = vpop.f32.mrf.mxu0
      %1233 = vdwg.mxu0
      %v1234 = vld [vmem:[%s16] sm:$0xff]
      %v1235 = vld [vmem:[%s16 + $0x8] sm:$0xff]
      %v1236 = vld [vmem:[%s16 + $0x10] sm:$0xff]
      %v1237 = vld [vmem:[%s16 + $0x18] sm:$0xff]
      %v1238 = vld [vmem:[%s17] sm:$0x1]
      %v1240 = vlaneseq
      %v1241 = vshrl.u32 %v1240, 7
      %v1242 = vsub.s32 0, %v1241
      %v1243 = vrot.slane %v1238, %v1242
      %v1245 = vsel %vm655, %v934, 0
      %1247 = vmatprep.subr.mxu0 0.0
      %1248 = vmatpush1.msra.mxu0 0.0
      %1249 = vmatprep.subr.mxu0 0.0
      %1250 = vmatpush1.msra.mxu0 0.0
      %1251 = vmatprep.subr.mxu0 0.0
      %1252 = vmatpush1.msra.mxu0 0.0
      %1253 = vmatprep.subr.mxu0 0.0
      %1254 = vmatpush1.msra.mxu0 0.0
      %1255 = vmatprep.subr.mxu0 0.0
      %1256 = vmatpush1.msra.mxu0 0.0
      %1257 = vmatprep.subr.mxu0 0.0
      %1258 = vmatpush1.msra.mxu0 0.0
      %1259 = vmatprep.subr.mxu0 0.0
      %1260 = vmatpush1.msra.mxu0 0.0
      %1261 = vmatprep.subr.mxu0 0.0
      %1262 = vmatpush1.msra.mxu0 0.0
      %1263 = vmatprep.subr.mxu0 0.0
      %1264 = vmatpush1.msra.mxu0 0.0
      %1265 = vmatprep.subr.mxu0 0.0
      %1266 = vmatpush1.msra.mxu0 0.0
      %1267 = vmatprep.subr.mxu0 0.0
      %1268 = vmatpush1.msra.mxu0 0.0
      %1269 = vmatprep.subr.mxu0 0.0
      %1270 = vmatpush1.msra.mxu0 0.0
      %1271 = vmatprep.subr.mxu0 0.0
      %1272 = vmatpush1.msra.mxu0 %v1237
      %1273 = vmatprep.subr.mxu0 0.0
      %1274 = vmatpush1.msra.mxu0 %v1236
      %1275 = vmatprep.subr.mxu0 0.0
      %1276 = vmatpush1.msra.mxu0 %v1235
      %1277 = vmatprep.subr.mxu0 0.0
      %1278 = vmatpush1.msra.mxu0 %v1234
      %1279 = vmatprep.subr.mxu0 0.0
      %1280 = vmatpush2.msra.mxu0 0.0
      %1281 = vmatprep.subr.mxu0 0.0
      %1282 = vmatpush2.msra.mxu0 0.0
      %1283 = vmatprep.subr.mxu0 0.0
      %1284 = vmatpush2.msra.mxu0 0.0
      %1285 = vmatprep.subr.mxu0 0.0
      %1286 = vmatpush2.msra.mxu0 0.0
      %1287 = vmatprep.subr.mxu0 0.0
      %1288 = vmatpush2.msra.mxu0 0.0
      %1289 = vmatprep.subr.mxu0 0.0
      %1290 = vmatpush2.msra.mxu0 0.0
      %1291 = vmatprep.subr.mxu0 0.0
      %1292 = vmatpush2.msra.mxu0 0.0
      %1293 = vmatprep.subr.mxu0 0.0
      %1294 = vmatpush2.msra.mxu0 0.0
      %1295 = vmatprep.subr.mxu0 0.0
      %1296 = vmatpush2.msra.mxu0 0.0
      %1297 = vmatprep.subr.mxu0 0.0
      %1298 = vmatpush2.msra.mxu0 0.0
      %1299 = vmatprep.subr.mxu0 0.0
      %1300 = vmatpush2.msra.mxu0 0.0
      %1301 = vmatprep.subr.mxu0 0.0
      %1302 = vmatpush2.msra.mxu0 0.0
      %1303 = vmatprep.subr.mxu0 0.0
      %1304 = vmatpush2.msra.mxu0 0.0
      %1305 = vmatprep.subr.mxu0 0.0
      %1306 = vmatpush2.msra.mxu0 0.0
      %1307 = vmatprep.subr.mxu0 0.0
      %1308 = vmatpush2.msra.mxu0 0.0
      %1309 = vmatprep.subr.mxu0 0.0
      %1310 = vmatpush2.msra.mxu0 0.0
      %1311 = vmatprep.mubr.f32.mxu0 0.0
      %1312 = vmatmul.mubr.f32.gmra.mxu0 %v1245
      %v1313 = vpop.f32.mrf.mxu0
      %v1314 = vadd.f32 %v1243, %v1313
      %v1315 = vpop.f32.mrf.mxu0
      %1316 = vdwg.mxu0
      %v1317 = vadd.f32 %v1231, %v1314
      %v1318 = vxor.u32 %v1317, 2147483648
      %v1319 = vmul.f32 %v1318, 1.442695
      %v1320 = vpow.pop %v1319
      %v1321 = vadd.f32 %v1320, 1.0
      %v1322 = vrcp.pop %v1321
      %v1323 = vmul.f32 1.0, %v1322
      %v1324 = vsub.f32 %v1317, 0.1
      %v1325 = vxor.u32 %v1324, 2147483648
      %v1326 = vmul.f32 %v1325, 1.442695
      %v1327 = vpow.pop %v1326
      %v1328 = vadd.f32 %v1327, 1.0
      %v1329 = vrcp.pop %v1328
      %v1330 = vmul.f32 1.0, %v1329
      %v1331 = vmul.f32 %v1323, %v934
      %v1332 = vld [vmem:[%s18] sm:$0xff]
      %v1333 = vld [vmem:[%s18 + $0x8] sm:$0xff]
      %v1334 = vld [vmem:[%s18 + $0x10] sm:$0xff]
      %v1335 = vld [vmem:[%s18 + $0x18] sm:$0xff]
      %v1337 = vsel %vm655, %v1331, 0
      %1339 = vmatprep.subr.mxu0 0.0
      %1340 = vmatpush1.msra.mxu0 0.0
      %1341 = vmatprep.subr.mxu0 0.0
      %1342 = vmatpush1.msra.mxu0 0.0
      %1343 = vmatprep.subr.mxu0 0.0
      %1344 = vmatpush1.msra.mxu0 0.0
      %1345 = vmatprep.subr.mxu0 0.0
      %1346 = vmatpush1.msra.mxu0 0.0
      %1347 = vmatprep.subr.mxu0 0.0
      %1348 = vmatpush1.msra.mxu0 0.0
      %1349 = vmatprep.subr.mxu0 0.0
      %1350 = vmatpush1.msra.mxu0 0.0
      %1351 = vmatprep.subr.mxu0 0.0
      %1352 = vmatpush1.msra.mxu0 0.0
      %1353 = vmatprep.subr.mxu0 0.0
      %1354 = vmatpush1.msra.mxu0 0.0
      %1355 = vmatprep.subr.mxu0 0.0
      %1356 = vmatpush1.msra.mxu0 0.0
      %1357 = vmatprep.subr.mxu0 0.0
      %1358 = vmatpush1.msra.mxu0 0.0
      %1359 = vmatprep.subr.mxu0 0.0
      %1360 = vmatpush1.msra.mxu0 0.0
      %1361 = vmatprep.subr.mxu0 0.0
      %1362 = vmatpush1.msra.mxu0 0.0
      %1363 = vmatprep.subr.mxu0 0.0
      %1364 = vmatpush1.msra.mxu0 %v1335
      %1365 = vmatprep.subr.mxu0 0.0
      %1366 = vmatpush1.msra.mxu0 %v1334
      %1367 = vmatprep.subr.mxu0 0.0
      %1368 = vmatpush1.msra.mxu0 %v1333
      %1369 = vmatprep.subr.mxu0 0.0
      %1370 = vmatpush1.msra.mxu0 %v1332
      %1371 = vmatprep.subr.mxu0 0.0
      %1372 = vmatpush2.msra.mxu0 0.0
      %1373 = vmatprep.subr.mxu0 0.0
      %1374 = vmatpush2.msra.mxu0 0.0
      %1375 = vmatprep.subr.mxu0 0.0
      %1376 = vmatpush2.msra.mxu0 0.0
      %1377 = vmatprep.subr.mxu0 0.0
      %1378 = vmatpush2.msra.mxu0 0.0
      %1379 = vmatprep.subr.mxu0 0.0
      %1380 = vmatpush2.msra.mxu0 0.0
      %1381 = vmatprep.subr.mxu0 0.0
      %1382 = vmatpush2.msra.mxu0 0.0
      %1383 = vmatprep.subr.mxu0 0.0
      %1384 = vmatpush2.msra.mxu0 0.0
      %1385 = vmatprep.subr.mxu0 0.0
      %1386 = vmatpush2.msra.mxu0 0.0
      %1387 = vmatprep.subr.mxu0 0.0
      %1388 = vmatpush2.msra.mxu0 0.0
      %1389 = vmatprep.subr.mxu0 0.0
      %1390 = vmatpush2.msra.mxu0 0.0
      %1391 = vmatprep.subr.mxu0 0.0
      %1392 = vmatpush2.msra.mxu0 0.0
      %1393 = vmatprep.subr.mxu0 0.0
      %1394 = vmatpush2.msra.mxu0 0.0
      %1395 = vmatprep.subr.mxu0 0.0
      %1396 = vmatpush2.msra.mxu0 0.0
      %1397 = vmatprep.subr.mxu0 0.0
      %1398 = vmatpush2.msra.mxu0 0.0
      %1399 = vmatprep.subr.mxu0 0.0
      %1400 = vmatpush2.msra.mxu0 0.0
      %1401 = vmatprep.subr.mxu0 0.0
      %1402 = vmatpush2.msra.mxu0 0.0
      %1403 = vmatprep.mubr.f32.mxu0 0.0
      %1404 = vmatmul.mubr.f32.gmra.mxu0 %v1337
      %v1405 = vpop.f32.mrf.mxu0
      %v1406 = vadd.f32 0.0, %v1405
      %v1407 = vpop.f32.mrf.mxu0
      %1408 = vdwg.mxu0
      %1410 = vrot.lane.b32.xlu0 %v1406, 64
      %v1411 = vpop.permute.xlu0 %1410
      %v1413 = vadd.f32 %v1231, %v1411
      %v1414 = vld [vmem:[%s19] sm:$0x1]
      %v1416 = vlaneseq
      %v1417 = vshrl.u32 %v1416, 7
      %v1418 = vsub.s32 0, %v1417
      %v1419 = vrot.slane %v1414, %v1418
      %1420 = vrot.lane.b32.xlu0 %v1419, 64
      %v1421 = vpop.permute.xlu0 %1420
      %v1423 = vadd.f32 %v1413, %v1421
      %v1424 = vtanh.pop %v1423
      %v1425 = vsub.f32 1.0, %v1330
      %v1426 = vmul.f32 %v1425, %v931
      %1428 = vrot.lane.b32.xlu0 %v1424, 96
      %v1429 = vpop.permute.xlu0 %1428
      %v1431 = vmul.f32 %v1330, %v1429
      %v1432 = vadd.f32 %v1426, %v1431
      %1434 = vrot.lane.b32.xlu0 %v1432, 96
      %v1435 = vpop.permute.xlu0 %1434
      %1437 = vst.msk [vmem:[%s641] sm:$0xff] %vm655, %v1435
      %p1438 = scmp.lt.s32.totalorder %s31, 1
      %s1439 = scalar_select %p1438, %s31, 1
      %s1440 = smul.addr %s1439, 8
      %s1441 = scalar_lea.vmem %s20, %s1440
      // Predicated region
      $region101: #{stable_transformer_layer.3} parent=99 // pred_check
        %p1442 = pneg %p479
      $region102: #{stable_transformer_layer.3} parent=99 // pred_check_branch
        %1444 = sbr.rel (%p1442) target = $region104
      $region103: #{stable_transformer_layer.3} parent=99 // pred_region
        _
      $region104: #{stable_transformer_layer.3} parent=99 // pred_fallthru
        _
    $region100: #{stable_transformer_layer.3} parent=5 // pred_fallthru
      _
    %p1445 = scmp.le.s32.totalorder 2, %s26
    // Predicated region
    $region105: #{stable_transformer_layer.3} parent=5 // pred_check
      %p1446 = pneg %p1445
    $region106: #{stable_transformer_layer.3} parent=5 // pred_check_branch
      %1448 = sbr.rel (%p1446) target = $region108
    $region107: #{stable_transformer_layer.3} parent=5 // pred_region
      %s1449 = ssub.s32 %s26, 2
      // Predicated region
      $region109: #{stable_transformer_layer.3} parent=107 // pred_check
        %p1450 = pneg %p485
      $region110: #{stable_transformer_layer.3} parent=107 // pred_check_branch
        %1452 = sbr.rel (%p1450) target = $region112
      $region111: #{stable_transformer_layer.3} parent=107 // pred_region
        %p1453 = scmp.lt.s32.totalorder %s32, 1
        %s1454 = scalar_select %p1453, %s32, 1
        %s1455 = smul.addr %s1454, 8
        %s1456 = scalar_lea.vmem %s20, %s1455
      $region112: #{stable_transformer_layer.3} parent=107 // pred_fallthru
        _
    $region108: #{stable_transformer_layer.3} parent=5 // pred_fallthru
      _
  $region6: #{stable_transformer_layer.3} parent=0 // loop_footer
    %s30 = sadd.s32 1, %s26
  $region7: #{stable_transformer_layer.3} parent=0 // loop_footer_branch
    %25 = sbr.rel target = $region3
  $region8: #{stable_transformer_layer.3} parent=0 // loop_exit
    _

// kernel: stable_transformer_layer.2
$region0: #{stable_transformer_layer.2}
  #allocation0 [shape = 'u32[]', space=smem, size = 0x4, offset = 0x4, fixed_abs, tag = 'smem constant byte address 0x4 - core index']
  #allocation1 [shape = 'u32[144,128]{1,0:T(1,128)}', space=vmem, size = 0x12000, scoped, tag = 'internal scratch']
  %s0 = inlined_call_operand.vmem [shape: f32[2,12,32], index: 0, kind: input, shape index: {}]
  %s1 = inlined_call_operand.vmem [shape: f32[12,32], index: 1, kind: input, shape index: {}]
  %s2 = inlined_call_operand.vmem [shape: f32[1,32], index: 2, kind: input, shape index: {}]
  %s3 = inlined_call_operand.vmem [shape: f32[1,32], index: 3, kind: input, shape index: {}]
  %s4 = inlined_call_operand.vmem [shape: f32[32,32], index: 4, kind: input, shape index: {}]
  %s5 = inlined_call_operand.vmem [shape: f32[32,64], index: 5, kind: input, shape index: {}]
  %s6 = inlined_call_operand.vmem [shape: f32[32,32], index: 6, kind: input, shape index: {}]
  %s7 = inlined_call_operand.vmem [shape: f32[4,8], index: 7, kind: input, shape index: {}]
  %s8 = inlined_call_operand.vmem [shape: f32[4,8], index: 8, kind: input, shape index: {}]
  %s9 = inlined_call_operand.vmem [shape: f32[32,32], index: 9, kind: input, shape index: {}]
  %s10 = inlined_call_operand.vmem [shape: f32[2,8,32], index: 10, kind: output, shape index: {}]
  %s11 = sld [smem:[#allocation0]]
  $region73: #{stable_transformer_layer.2} parent=0
    _
  %s13 = ssub.s32 1, %s11
  %s14 = scalar_select 0, %s13, %s11
  loop: start=0, step=1, limit=4
  $region2: #{stable_transformer_layer.2} parent=0 // loop_pre_header
    _
  $region3: #{stable_transformer_layer.2} parent=0 // loop_header
    %s16 = sphi 0, %s20
    %p17 = scmp.ge.s32.totalorder %s16, 4
    %s26 = sphi 0, %s28
    %s29 = sphi 0, %s26
    %s30 = sphi 0, %s29
    %s46 = sphi 0, %s30
    %s50 = sphi 0, %s50
    %s52 = sphi 0, %s50
    %s53 = sphi 0, %s52
    %s67 = sphi 0, %s53
    %s71 = sphi 0, %s71
    %s73 = sphi 0, %s71
    %s74 = sphi 0, %s73
    %s88 = sphi 0, %s74
    %s92 = sphi 0, %s92
    %s94 = sphi 0, %s92
    %s95 = sphi 0, %s94
    %s109 = sphi 0, %s95
    %s113 = sphi 0, %s113
    %s115 = sphi 0, %s113
    %s116 = sphi 0, %s115
    %s130 = sphi 0, %s116
    %s134 = sphi 0, %s134
    %s136 = sphi 0, %s134
    %s137 = sphi 0, %s136
    %s151 = sphi 0, %s137
    %s155 = sphi 0, %s155
    %s157 = sphi 0, %s155
    %s158 = sphi 0, %s157
    %s172 = sphi 0, %s158
    %s176 = sphi 0, %s176
    %s178 = sphi 0, %s176
    %s179 = sphi 0, %s178
    %s193 = sphi 0, %s179
    %s197 = sphi 0, %s197
    %s199 = sphi 0, %s197
    %s200 = sphi 0, %s199
    %s214 = sphi 0, %s200
    %s218 = sphi 0, %s218
    %s220 = sphi 0, %s218
    %s221 = sphi 0, %s220
    %s235 = sphi 0, %s221
    %s241 = sphi 0, %s243
    %s244 = sphi 0, %s241
    %s245 = sphi 0, %s244
    %s261 = sphi 0, %s245
  $region4: #{stable_transformer_layer.2} parent=0 // loop_header_branch
    %19 = sbr.rel (%p17) target = $region8
  $region5: #{stable_transformer_layer.2} parent=0 // loop_body
    %s21 = ssub.s32 %s16, 1
    %s22 = ssub.s32 %s16, 2
    %s23 = sadd.s32 %s16, 1
    %s24 = ssub.s32 %s16, %s23
    %p25 = scmp.eq.s32.totalorder %s24, 0
    %s27 = sadd.s32 %s26, 1
    %s28 = scalar_select %p25, %s26, %s27
    %p31 = pneg %p25
    %p32 = scmp.eq.s32.totalorder %s16, 1
    %p33 = por %p31, %p32
    %p34 = scmp.ne.s32.totalorder %s26, %s29
    %p35 = scmp.eq.s32.totalorder %s16, 0
    %p36 = por %p34, %p35
    %p37 = scmp.ne.s32.totalorder %s26, %s29
    %p38 = scmp.eq.s32.totalorder %s21, 1
    %p39 = por %p37, %p38
    %p40 = scmp.ne.s32.totalorder %s29, %s30
    %p41 = scmp.eq.s32.totalorder %s21, 0
    %p42 = por %p40, %p41
    %p43 = scmp.ne.s32.totalorder %s29, %s30
    %p44 = scmp.eq.s32.totalorder %s22, 1
    %p45 = por %p43, %p44
    %p47 = scmp.ne.s32.totalorder %s30, %s46
    %p48 = scmp.eq.s32.totalorder %s22, 0
    %p49 = por %p47, %p48
    %s51 = sadd.s32 %s50, 1
    %p54 = scmp.eq.s32.totalorder %s16, 1
    %p55 = scmp.ne.s32.totalorder %s50, %s52
    %p56 = scmp.eq.s32.totalorder %s16, 0
    %p57 = por %p55, %p56
    %p58 = scmp.ne.s32.totalorder %s50, %s52
    %p59 = scmp.eq.s32.totalorder %s21, 1
    %p60 = por %p58, %p59
    %p61 = scmp.ne.s32.totalorder %s52, %s53
    %p62 = scmp.eq.s32.totalorder %s21, 0
    %p63 = por %p61, %p62
    %p64 = scmp.ne.s32.totalorder %s52, %s53
    %p65 = scmp.eq.s32.totalorder %s22, 1
    %p66 = por %p64, %p65
    %p68 = scmp.ne.s32.totalorder %s53, %s67
    %p69 = scmp.eq.s32.totalorder %s22, 0
    %p70 = por %p68, %p69
    %s72 = sadd.s32 %s71, 1
    %p75 = scmp.eq.s32.totalorder %s16, 1
    %p76 = scmp.ne.s32.totalorder %s71, %s73
    %p77 = scmp.eq.s32.totalorder %s16, 0
    %p78 = por %p76, %p77
    %p79 = scmp.ne.s32.totalorder %s71, %s73
    %p80 = scmp.eq.s32.totalorder %s21, 1
    %p81 = por %p79, %p80
    %p82 = scmp.ne.s32.totalorder %s73, %s74
    %p83 = scmp.eq.s32.totalorder %s21, 0
    %p84 = por %p82, %p83
    %p85 = scmp.ne.s32.totalorder %s73, %s74
    %p86 = scmp.eq.s32.totalorder %s22, 1
    %p87 = por %p85, %p86
    %p89 = scmp.ne.s32.totalorder %s74, %s88
    %p90 = scmp.eq.s32.totalorder %s22, 0
    %p91 = por %p89, %p90
    %s93 = sadd.s32 %s92, 1
    %p96 = scmp.eq.s32.totalorder %s16, 1
    %p97 = scmp.ne.s32.totalorder %s92, %s94
    %p98 = scmp.eq.s32.totalorder %s16, 0
    %p99 = por %p97, %p98
    %p100 = scmp.ne.s32.totalorder %s92, %s94
    %p101 = scmp.eq.s32.totalorder %s21, 1
    %p102 = por %p100, %p101
    %p103 = scmp.ne.s32.totalorder %s94, %s95
    %p104 = scmp.eq.s32.totalorder %s21, 0
    %p105 = por %p103, %p104
    %p106 = scmp.ne.s32.totalorder %s94, %s95
    %p107 = scmp.eq.s32.totalorder %s22, 1
    %p108 = por %p106, %p107
    %p110 = scmp.ne.s32.totalorder %s95, %s109
    %p111 = scmp.eq.s32.totalorder %s22, 0
    %p112 = por %p110, %p111
    %s114 = sadd.s32 %s113, 1
    %p117 = scmp.eq.s32.totalorder %s16, 1
    %p118 = scmp.ne.s32.totalorder %s113, %s115
    %p119 = scmp.eq.s32.totalorder %s16, 0
    %p120 = por %p118, %p119
    %p121 = scmp.ne.s32.totalorder %s113, %s115
    %p122 = scmp.eq.s32.totalorder %s21, 1
    %p123 = por %p121, %p122
    %p124 = scmp.ne.s32.totalorder %s115, %s116
    %p125 = scmp.eq.s32.totalorder %s21, 0
    %p126 = por %p124, %p125
    %p127 = scmp.ne.s32.totalorder %s115, %s116
    %p128 = scmp.eq.s32.totalorder %s22, 1
    %p129 = por %p127, %p128
    %p131 = scmp.ne.s32.totalorder %s116, %s130
    %p132 = scmp.eq.s32.totalorder %s22, 0
    %p133 = por %p131, %p132
    %s135 = sadd.s32 %s134, 1
    %p138 = scmp.eq.s32.totalorder %s16, 1
    %p139 = scmp.ne.s32.totalorder %s134, %s136
    %p140 = scmp.eq.s32.totalorder %s16, 0
    %p141 = por %p139, %p140
    %p142 = scmp.ne.s32.totalorder %s134, %s136
    %p143 = scmp.eq.s32.totalorder %s21, 1
    %p144 = por %p142, %p143
    %p145 = scmp.ne.s32.totalorder %s136, %s137
    %p146 = scmp.eq.s32.totalorder %s21, 0
    %p147 = por %p145, %p146
    %p148 = scmp.ne.s32.totalorder %s136, %s137
    %p149 = scmp.eq.s32.totalorder %s22, 1
    %p150 = por %p148, %p149
    %p152 = scmp.ne.s32.totalorder %s137, %s151
    %p153 = scmp.eq.s32.totalorder %s22, 0
    %p154 = por %p152, %p153
    %s156 = sadd.s32 %s155, 1
    %p159 = scmp.eq.s32.totalorder %s16, 1
    %p160 = scmp.ne.s32.totalorder %s155, %s157
    %p161 = scmp.eq.s32.totalorder %s16, 0
    %p162 = por %p160, %p161
    %p163 = scmp.ne.s32.totalorder %s155, %s157
    %p164 = scmp.eq.s32.totalorder %s21, 1
    %p165 = por %p163, %p164
    %p166 = scmp.ne.s32.totalorder %s157, %s158
    %p167 = scmp.eq.s32.totalorder %s21, 0
    %p168 = por %p166, %p167
    %p169 = scmp.ne.s32.totalorder %s157, %s158
    %p170 = scmp.eq.s32.totalorder %s22, 1
    %p171 = por %p169, %p170
    %p173 = scmp.ne.s32.totalorder %s158, %s172
    %p174 = scmp.eq.s32.totalorder %s22, 0
    %p175 = por %p173, %p174
    %s177 = sadd.s32 %s176, 1
    %p180 = scmp.eq.s32.totalorder %s16, 1
    %p181 = scmp.ne.s32.totalorder %s176, %s178
    %p182 = scmp.eq.s32.totalorder %s16, 0
    %p183 = por %p181, %p182
    %p184 = scmp.ne.s32.totalorder %s176, %s178
    %p185 = scmp.eq.s32.totalorder %s21, 1
    %p186 = por %p184, %p185
    %p187 = scmp.ne.s32.totalorder %s178, %s179
    %p188 = scmp.eq.s32.totalorder %s21, 0
    %p189 = por %p187, %p188
    %p190 = scmp.ne.s32.totalorder %s178, %s179
    %p191 = scmp.eq.s32.totalorder %s22, 1
    %p192 = por %p190, %p191
    %p194 = scmp.ne.s32.totalorder %s179, %s193
    %p195 = scmp.eq.s32.totalorder %s22, 0
    %p196 = por %p194, %p195
    %s198 = sadd.s32 %s197, 1
    %p201 = scmp.eq.s32.totalorder %s16, 1
    %p202 = scmp.ne.s32.totalorder %s197, %s199
    %p203 = scmp.eq.s32.totalorder %s16, 0
    %p204 = por %p202, %p203
    %p205 = scmp.ne.s32.totalorder %s197, %s199
    %p206 = scmp.eq.s32.totalorder %s21, 1
    %p207 = por %p205, %p206
    %p208 = scmp.ne.s32.totalorder %s199, %s200
    %p209 = scmp.eq.s32.totalorder %s21, 0
    %p210 = por %p208, %p209
    %p211 = scmp.ne.s32.totalorder %s199, %s200
    %p212 = scmp.eq.s32.totalorder %s22, 1
    %p213 = por %p211, %p212
    %p215 = scmp.ne.s32.totalorder %s200, %s214
    %p216 = scmp.eq.s32.totalorder %s22, 0
    %p217 = por %p215, %p216
    %s219 = sadd.s32 %s218, 1
    %p222 = scmp.eq.s32.totalorder %s16, 1
    %p223 = scmp.ne.s32.totalorder %s218, %s220
    %p224 = scmp.eq.s32.totalorder %s16, 0
    %p225 = por %p223, %p224
    %p226 = scmp.ne.s32.totalorder %s218, %s220
    %p227 = scmp.eq.s32.totalorder %s21, 1
    %p228 = por %p226, %p227
    %p229 = scmp.ne.s32.totalorder %s220, %s221
    %p230 = scmp.eq.s32.totalorder %s21, 0
    %p231 = por %p229, %p230
    %p232 = scmp.ne.s32.totalorder %s220, %s221
    %p233 = scmp.eq.s32.totalorder %s22, 1
    %p234 = por %p232, %p233
    %p236 = scmp.ne.s32.totalorder %s221, %s235
    %p237 = scmp.eq.s32.totalorder %s22, 0
    %p238 = por %p236, %p237
    %s239 = ssub.s32 %s16, %s23
    %p240 = scmp.eq.s32.totalorder %s239, 0
    %s242 = sadd.s32 %s241, 1
    %s243 = scalar_select %p240, %s241, %s242
    %p246 = pneg %p240
    %p247 = scmp.eq.s32.totalorder %s16, 1
    %p248 = por %p246, %p247
    %p249 = scmp.ne.s32.totalorder %s241, %s244
    %p250 = scmp.eq.s32.totalorder %s16, 0
    %p251 = por %p249, %p250
    %p252 = scmp.ne.s32.totalorder %s241, %s244
    %p253 = scmp.eq.s32.totalorder %s21, 1
    %p254 = por %p252, %p253
    %p255 = scmp.ne.s32.totalorder %s244, %s245
    %p256 = scmp.eq.s32.totalorder %s21, 0
    %p257 = por %p255, %p256
    %p258 = scmp.ne.s32.totalorder %s244, %s245
    %p259 = scmp.eq.s32.totalorder %s22, 1
    %p260 = por %p258, %p259
    %p262 = scmp.ne.s32.totalorder %s245, %s261
    %p263 = scmp.eq.s32.totalorder %s22, 0
    %p264 = por %p262, %p263
    %p265 = scmp.le.s32.totalorder 1, %s16
    %p266 = scmp.lt.s32.totalorder %s16, 3
    %p267 = pnand %p265, %p266
    %p268 = pneg %p267
    // Predicated region
    $region9: #{stable_transformer_layer.2} parent=5 // pred_check
      _
    $region10: #{stable_transformer_layer.2} parent=5 // pred_check_branch
      %270 = sbr.rel (%p267) target = $region12
    $region11: #{stable_transformer_layer.2} parent=5 // pred_region
      %s271 = ssub.s32 %s16, 1
      // Predicated region
      $region13: #{stable_transformer_layer.2} parent=11 // pred_check
        %p272 = pneg %p63
      $region14: #{stable_transformer_layer.2} parent=11 // pred_check_branch
        %274 = sbr.rel (%p272) target = $region16
      $region15: #{stable_transformer_layer.2} parent=11 // pred_region
        _
      $region16: #{stable_transformer_layer.2} parent=11 // pred_fallthru
        _
      // Predicated region
      $region17: #{stable_transformer_layer.2} parent=11 // pred_check
        %p275 = pneg %p84
      $region18: #{stable_transformer_layer.2} parent=11 // pred_check_branch
        %277 = sbr.rel (%p275) target = $region20
      $region19: #{stable_transformer_layer.2} parent=11 // pred_region
        _
      $region20: #{stable_transformer_layer.2} parent=11 // pred_fallthru
        _
      // Predicated region
      $region21: #{stable_transformer_layer.2} parent=11 // pred_check
        %p278 = pneg %p105
      $region22: #{stable_transformer_layer.2} parent=11 // pred_check_branch
        %280 = sbr.rel (%p278) target = $region24
      $region23: #{stable_transformer_layer.2} parent=11 // pred_region
        _
      $region24: #{stable_transformer_layer.2} parent=11 // pred_fallthru
        _
      // Predicated region
      $region25: #{stable_transformer_layer.2} parent=11 // pred_check
        %p281 = pneg %p126
      $region26: #{stable_transformer_layer.2} parent=11 // pred_check_branch
        %283 = sbr.rel (%p281) target = $region28
      $region27: #{stable_transformer_layer.2} parent=11 // pred_region
        _
      $region28: #{stable_transformer_layer.2} parent=11 // pred_fallthru
        _
      // Predicated region
      $region29: #{stable_transformer_layer.2} parent=11 // pred_check
        %p284 = pneg %p147
      $region30: #{stable_transformer_layer.2} parent=11 // pred_check_branch
        %286 = sbr.rel (%p284) target = $region32
      $region31: #{stable_transformer_layer.2} parent=11 // pred_region
        _
      $region32: #{stable_transformer_layer.2} parent=11 // pred_fallthru
        _
      // Predicated region
      $region33: #{stable_transformer_layer.2} parent=11 // pred_check
        %p287 = pneg %p168
      $region34: #{stable_transformer_layer.2} parent=11 // pred_check_branch
        %289 = sbr.rel (%p287) target = $region36
      $region35: #{stable_transformer_layer.2} parent=11 // pred_region
        _
      $region36: #{stable_transformer_layer.2} parent=11 // pred_fallthru
        _
      // Predicated region
      $region37: #{stable_transformer_layer.2} parent=11 // pred_check
        %p290 = pneg %p189
      $region38: #{stable_transformer_layer.2} parent=11 // pred_check_branch
        %292 = sbr.rel (%p290) target = $region40
      $region39: #{stable_transformer_layer.2} parent=11 // pred_region
        _
      $region40: #{stable_transformer_layer.2} parent=11 // pred_fallthru
        _
      // Predicated region
      $region41: #{stable_transformer_layer.2} parent=11 // pred_check
        %p293 = pneg %p210
      $region42: #{stable_transformer_layer.2} parent=11 // pred_check_branch
        %295 = sbr.rel (%p293) target = $region44
      $region43: #{stable_transformer_layer.2} parent=11 // pred_region
        _
      $region44: #{stable_transformer_layer.2} parent=11 // pred_fallthru
        _
      // Predicated region
      $region45: #{stable_transformer_layer.2} parent=11 // pred_check
        %p296 = pneg %p231
      $region46: #{stable_transformer_layer.2} parent=11 // pred_check_branch
        %298 = sbr.rel (%p296) target = $region48
      $region47: #{stable_transformer_layer.2} parent=11 // pred_region
        _
      $region48: #{stable_transformer_layer.2} parent=11 // pred_fallthru
        _
    $region12: #{stable_transformer_layer.2} parent=5 // pred_fallthru
      _
    %p299 = scmp.lt.s32.totalorder %s16, 2
    // Predicated region
    $region49: #{stable_transformer_layer.2} parent=5 // pred_check
      %p300 = pneg %p299
    $region50: #{stable_transformer_layer.2} parent=5 // pred_check_branch
      %302 = sbr.rel (%p300) target = $region52
    $region51: #{stable_transformer_layer.2} parent=5 // pred_region
      // Predicated region
      $region53: #{stable_transformer_layer.2} parent=51 // pred_check
        %p303 = pneg %p36
      $region54: #{stable_transformer_layer.2} parent=51 // pred_check_branch
        %305 = sbr.rel (%p303) target = $region56
      $region55: #{stable_transformer_layer.2} parent=51 // pred_region
        %p306 = scmp.lt.s32.totalorder %s16, 1
        %s307 = scalar_select %p306, %s16, 1
        %s308 = smul.addr %s307, 2
        %s309 = smul.addr %s308, 8
        %s310 = scalar_lea.vmem %s0, %s309
      $region56: #{stable_transformer_layer.2} parent=51 // pred_fallthru
        _
    $region52: #{stable_transformer_layer.2} parent=5 // pred_fallthru
      _
    %p311 = scmp.le.s32.totalorder 1, %s16
    %p312 = scmp.lt.s32.totalorder %s16, 3
    %p313 = pnand %p311, %p312
    %p314 = pneg %p313
    // Predicated region
    $region57: #{stable_transformer_layer.2} parent=5 // pred_check
      _
    $region58: #{stable_transformer_layer.2} parent=5 // pred_check_branch
      %316 = sbr.rel (%p313) target = $region60
    $region59: #{stable_transformer_layer.2} parent=5 // pred_region
      %s317 = ssub.s32 %s16, 1
      %p318 = scmp.lt.s32.totalorder %s21, 1
      %s319 = scalar_select %p318, %s21, 1
      %s320 = smul.addr %s319, 2
      %s321 = smul.addr %s320, 8
      %s322 = scalar_lea.vmem %s0, %s321
      %p323 = pneg %p42
      %p324 = pneg %p39
      %p325 = pneg %p63
      %p326 = pneg %p60
      %p327 = pneg %p84
      %p328 = pneg %p81
      %p329 = pneg %p105
      %p330 = pneg %p102
      %p331 = pneg %p126
      %p332 = pneg %p123
      %p333 = pneg %p147
      %p334 = pneg %p144
      %p335 = pneg %p168
      %p336 = pneg %p165
      %p337 = pneg %p189
      %p338 = pneg %p186
      %p339 = pneg %p210
      %p340 = pneg %p207
      %p341 = pneg %p231
      %p342 = pneg %p228
      %p343 = pneg %p257
      %p344 = pneg %p254
      %p345 = scmp.lt.s32.totalorder %s21, 1
      %s346 = scalar_select %p345, %s21, 1
      %s347 = smul.addr %s346, 8
      %s348 = scalar_lea.vmem %s10, %s347
      %p349 = scmp.lt.s32.totalorder %s21, 1
      %s350 = scalar_select %p349, %s21, 1
      %s351 = smul.addr %s350, 2
      %s352 = smul.addr %s351, 8
      %s353 = scalar_lea.vmem %s0, %s352
      %p354 = scmp.lt.s32.totalorder %s21, 1
      %s355 = scalar_select %p354, %s21, 1
      %s356 = smul.addr %s355, 8
      %s357 = scalar_lea.vmem %s10, %s356
      %v358 = vld [vmem:[%s353] sm:$0xff]
      %v359 = vld [vmem:[%s353 + $0x8] sm:$0xf]
      %vm360 = vcmask 261120
      %v361 = vsel %vm360, %v358, 0.0
      %362 = vadd.xlane.f32.xlu0 %v361
      %v363 = vpop.xlane.xlu0 %362
      %vm364 = vcmask 257024
      %v365 = vsel %vm364, %v359, 0.0
      %366 = vadd.xlane.f32.xlu0 %v365
      %v367 = vpop.xlane.xlu0 %366
      %v368 = vrcp.pop 32.0
      %v369 = vmul.f32 %v363, %v368
      %v370 = vmul.f32 %v367, %v368
      %v371 = vsub.f32 %v358, %v369
      %v372 = vsub.f32 %v359, %v370
      %v373 = vmul.f32 %v371, %v371
      %v374 = vmul.f32 %v372, %v372
      %v375 = vsel %vm360, %v373, 0.0
      %376 = vadd.xlane.f32.xlu0 %v375
      %v377 = vpop.xlane.xlu0 %376
      %v378 = vsel %vm364, %v374, 0.0
      %379 = vadd.xlane.f32.xlu0 %v378
      %v380 = vpop.xlane.xlu0 %379
      %v381 = vmul.f32 %v377, %v368
      %v382 = vmul.f32 %v380, %v368
      %v383 = vadd.f32 %v381, 1e-05
      %v384 = vadd.f32 %v382, 1e-05
      %v385 = vrsqrt.pop %v383
      %v386 = vrsqrt.pop %v384
      %v387 = vmul.f32 %v371, %v385
      %v388 = vmul.f32 %v372, %v386
      %v389 = vld [vmem:[%s2] sm:$0x1]
      %v391 = vlaneseq
      %v392 = vshrl.u32 %v391, 7
      %v393 = vsub.s32 0, %v392
      %v394 = vrot.slane %v389, %v393
      %v396 = vmul.f32 %v387, %v394
      %v397 = vmul.f32 %v388, %v394
      %v398 = vld [vmem:[%s3] sm:$0x1]
      %v400 = vlaneseq
      %v401 = vshrl.u32 %v400, 7
      %v402 = vsub.s32 0, %v401
      %v403 = vrot.slane %v398, %v402
      %v405 = vadd.f32 %v396, %v403
      %v406 = vadd.f32 %v397, %v403
      %v407 = vlaneseq
      %v408 = vshrl.u32 %v407, 7
      %v409 = vadd.s32 %v408, 8
      %vm410 = vcmp.ge.s32.totalorder %v408, 4
      %vm411 = vcmp.ge.s32.totalorder %v409, 4
      %v412 = vsel %vm410, 1, 0
      %v413 = vsel %vm411, 1, 0
      %vm414 = vcmp.eq.s32.totalorder %v412, 1
      %vm415 = vcmp.eq.s32.totalorder %v413, 1
      %v416 = vsel %vm414, %v405, %v358
      %v417 = vsel %vm415, %v406, %v359
      %v418 = vld [vmem:[%s5] sm:$0xff]
      %v419 = vld [vmem:[%s5 + $0x8] sm:$0xff]
      %v420 = vld [vmem:[%s5 + $0x10] sm:$0xff]
      %v421 = vld [vmem:[%s5 + $0x18] sm:$0xff]
      %v423 = vsel %vm360, %v416, 0
      %v426 = vsel %vm360, %v417, 0
      %428 = vmatprep.subr.mxu0 0.0
      %429 = vmatpush1.msra.mxu0 0.0
      %430 = vmatprep.subr.mxu0 0.0
      %431 = vmatpush1.msra.mxu0 0.0
      %432 = vmatprep.subr.mxu0 0.0
      %433 = vmatpush1.msra.mxu0 0.0
      %434 = vmatprep.subr.mxu0 0.0
      %435 = vmatpush1.msra.mxu0 0.0
      %436 = vmatprep.subr.mxu0 0.0
      %437 = vmatpush1.msra.mxu0 0.0
      %438 = vmatprep.subr.mxu0 0.0
      %439 = vmatpush1.msra.mxu0 0.0
      %440 = vmatprep.subr.mxu0 0.0
      %441 = vmatpush1.msra.mxu0 0.0
      %442 = vmatprep.subr.mxu0 0.0
      %443 = vmatpush1.msra.mxu0 0.0
      %444 = vmatprep.subr.mxu0 0.0
      %445 = vmatpush1.msra.mxu0 0.0
      %446 = vmatprep.subr.mxu0 0.0
      %447 = vmatpush1.msra.mxu0 0.0
      %448 = vmatprep.subr.mxu0 0.0
      %449 = vmatpush1.msra.mxu0 0.0
      %450 = vmatprep.subr.mxu0 0.0
      %451 = vmatpush1.msra.mxu0 0.0
      %452 = vmatprep.subr.mxu0 0.0
      %453 = vmatpush1.msra.mxu0 %v421
      %454 = vmatprep.subr.mxu0 0.0
      %455 = vmatpush1.msra.mxu0 %v420
      %456 = vmatprep.subr.mxu0 0.0
      %457 = vmatpush1.msra.mxu0 %v419
      %458 = vmatprep.subr.mxu0 0.0
      %459 = vmatpush1.msra.mxu0 %v418
      %460 = vmatprep.subr.mxu0 0.0
      %461 = vmatpush2.msra.mxu0 0.0
      %462 = vmatprep.subr.mxu0 0.0
      %463 = vmatpush2.msra.mxu0 0.0
      %464 = vmatprep.subr.mxu0 0.0
      %465 = vmatpush2.msra.mxu0 0.0
      %466 = vmatprep.subr.mxu0 0.0
      %467 = vmatpush2.msra.mxu0 0.0
      %468 = vmatprep.subr.mxu0 0.0
      %469 = vmatpush2.msra.mxu0 0.0
      %470 = vmatprep.subr.mxu0 0.0
      %471 = vmatpush2.msra.mxu0 0.0
      %472 = vmatprep.subr.mxu0 0.0
      %473 = vmatpush2.msra.mxu0 0.0
      %474 = vmatprep.subr.mxu0 0.0
      %475 = vmatpush2.msra.mxu0 0.0
      %476 = vmatprep.subr.mxu0 0.0
      %477 = vmatpush2.msra.mxu0 0.0
      %478 = vmatprep.subr.mxu0 0.0
      %479 = vmatpush2.msra.mxu0 0.0
      %480 = vmatprep.subr.mxu0 0.0
      %481 = vmatpush2.msra.mxu0 0.0
      %482 = vmatprep.subr.mxu0 0.0
      %483 = vmatpush2.msra.mxu0 0.0
      %484 = vmatprep.subr.mxu0 0.0
      %485 = vmatpush2.msra.mxu0 0.0
      %486 = vmatprep.subr.mxu0 0.0
      %487 = vmatpush2.msra.mxu0 0.0
      %488 = vmatprep.subr.mxu0 0.0
      %489 = vmatpush2.msra.mxu0 0.0
      %490 = vmatprep.subr.mxu0 0.0
      %491 = vmatpush2.msra.mxu0 0.0
      %492 = vmatprep.mubr.f32.mxu0 0.0
      %493 = vmatmul.mubr.f32.gmra.mxu0 %v423
      %v494 = vpop.f32.mrf.mxu0
      %v495 = vadd.f32 0.0, %v494
      %v496 = vpop.f32.mrf.mxu0
      %497 = vmatprep.mubr.f32.mxu0 0.0
      %498 = vmatmul.mubr.f32.gmra.mxu0 %v426
      %v499 = vpop.f32.mrf.mxu0
      %v500 = vadd.f32 0.0, %v499
      %v501 = vpop.f32.mrf.mxu0
      %502 = vdwg.mxu0
      %v503 = vld [vmem:[%s4] sm:$0xff]
      %v504 = vld [vmem:[%s4 + $0x8] sm:$0xff]
      %v505 = vld [vmem:[%s4 + $0x10] sm:$0xff]
      %v506 = vld [vmem:[%s4 + $0x18] sm:$0xff]
      %vm509 = vcmask 1043456
      %v510 = vrot.slane %v405, 4
      %v511 = vrot.slane %v406, 4
      %v512 = vsel %vm509, %v510, %v511
      %v513 = vsel %vm360, %v512, 0
      %515 = vmatprep.subr.mxu0 0.0
      %516 = vmatpush1.msra.mxu0 0.0
      %517 = vmatprep.subr.mxu0 0.0
      %518 = vmatpush1.msra.mxu0 0.0
      %519 = vmatprep.subr.mxu0 0.0
      %520 = vmatpush1.msra.mxu0 0.0
      %521 = vmatprep.subr.mxu0 0.0
      %522 = vmatpush1.msra.mxu0 0.0
      %523 = vmatprep.subr.mxu0 0.0
      %524 = vmatpush1.msra.mxu0 0.0
      %525 = vmatprep.subr.mxu0 0.0
      %526 = vmatpush1.msra.mxu0 0.0
      %527 = vmatprep.subr.mxu0 0.0
      %528 = vmatpush1.msra.mxu0 0.0
      %529 = vmatprep.subr.mxu0 0.0
      %530 = vmatpush1.msra.mxu0 0.0
      %531 = vmatprep.subr.mxu0 0.0
      %532 = vmatpush1.msra.mxu0 0.0
      %533 = vmatprep.subr.mxu0 0.0
      %534 = vmatpush1.msra.mxu0 0.0
      %535 = vmatprep.subr.mxu0 0.0
      %536 = vmatpush1.msra.mxu0 0.0
      %537 = vmatprep.subr.mxu0 0.0
      %538 = vmatpush1.msra.mxu0 0.0
      %539 = vmatprep.subr.mxu0 0.0
      %540 = vmatpush1.msra.mxu0 %v506
      %541 = vmatprep.subr.mxu0 0.0
      %542 = vmatpush1.msra.mxu0 %v505
      %543 = vmatprep.subr.mxu0 0.0
      %544 = vmatpush1.msra.mxu0 %v504
      %545 = vmatprep.subr.mxu0 0.0
      %546 = vmatpush1.msra.mxu0 %v503
      %547 = vmatprep.subr.mxu0 0.0
      %548 = vmatpush2.msra.mxu0 0.0
      %549 = vmatprep.subr.mxu0 0.0
      %550 = vmatpush2.msra.mxu0 0.0
      %551 = vmatprep.subr.mxu0 0.0
      %552 = vmatpush2.msra.mxu0 0.0
      %553 = vmatprep.subr.mxu0 0.0
      %554 = vmatpush2.msra.mxu0 0.0
      %555 = vmatprep.subr.mxu0 0.0
      %556 = vmatpush2.msra.mxu0 0.0
      %557 = vmatprep.subr.mxu0 0.0
      %558 = vmatpush2.msra.mxu0 0.0
      %559 = vmatprep.subr.mxu0 0.0
      %560 = vmatpush2.msra.mxu0 0.0
      %561 = vmatprep.subr.mxu0 0.0
      %562 = vmatpush2.msra.mxu0 0.0
      %563 = vmatprep.subr.mxu0 0.0
      %564 = vmatpush2.msra.mxu0 0.0
      %565 = vmatprep.subr.mxu0 0.0
      %566 = vmatpush2.msra.mxu0 0.0
      %567 = vmatprep.subr.mxu0 0.0
      %568 = vmatpush2.msra.mxu0 0.0
      %569 = vmatprep.subr.mxu0 0.0
      %570 = vmatpush2.msra.mxu0 0.0
      %571 = vmatprep.subr.mxu0 0.0
      %572 = vmatpush2.msra.mxu0 0.0
      %573 = vmatprep.subr.mxu0 0.0
      %574 = vmatpush2.msra.mxu0 0.0
      %575 = vmatprep.subr.mxu0 0.0
      %576 = vmatpush2.msra.mxu0 0.0
      %577 = vmatprep.subr.mxu0 0.0
      %578 = vmatpush2.msra.mxu0 0.0
      %579 = vmatprep.mubr.f32.mxu0 0.0
      %580 = vmatmul.mubr.f32.gmra.mxu0 %v513
      %v581 = vpop.f32.mrf.mxu0
      %v582 = vadd.f32 0.0, %v581
      %v583 = vpop.f32.mrf.mxu0
      %584 = vdwg.mxu0
      %v585 = vld [vmem:[%s1] sm:$0xff]
      %v586 = vld [vmem:[%s1 + $0x8] sm:$0xf]
      %v587 = vld [vmem:[%s6] sm:$0xff]
      %v588 = vld [vmem:[%s6 + $0x8] sm:$0xff]
      %v589 = vld [vmem:[%s6 + $0x10] sm:$0xff]
      %v590 = vld [vmem:[%s6 + $0x18] sm:$0xff]
      %v592 = vsel %vm360, %v585, 0
      %v595 = vsel %vm360, %v586, 0
      %597 = vmatprep.subr.mxu0 0.0
      %598 = vmatpush1.msra.mxu0 0.0
      %599 = vmatprep.subr.mxu0 0.0
      %600 = vmatpush1.msra.mxu0 0.0
      %601 = vmatprep.subr.mxu0 0.0
      %602 = vmatpush1.msra.mxu0 0.0
      %603 = vmatprep.subr.mxu0 0.0
      %604 = vmatpush1.msra.mxu0 0.0
      %605 = vmatprep.subr.mxu0 0.0
      %606 = vmatpush1.msra.mxu0 0.0
      %607 = vmatprep.subr.mxu0 0.0
      %608 = vmatpush1.msra.mxu0 0.0
      %609 = vmatprep.subr.mxu0 0.0
      %610 = vmatpush1.msra.mxu0 0.0
      %611 = vmatprep.subr.mxu0 0.0
      %612 = vmatpush1.msra.mxu0 0.0
      %613 = vmatprep.subr.mxu0 0.0
      %614 = vmatpush1.msra.mxu0 0.0
      %615 = vmatprep.subr.mxu0 0.0
      %616 = vmatpush1.msra.mxu0 0.0
      %617 = vmatprep.subr.mxu0 0.0
      %618 = vmatpush1.msra.mxu0 0.0
      %619 = vmatprep.subr.mxu0 0.0
      %620 = vmatpush1.msra.mxu0 0.0
      %621 = vmatprep.subr.mxu0 0.0
      %622 = vmatpush1.msra.mxu0 %v590
      %623 = vmatprep.subr.mxu0 0.0
      %624 = vmatpush1.msra.mxu0 %v589
      %625 = vmatprep.subr.mxu0 0.0
      %626 = vmatpush1.msra.mxu0 %v588
      %627 = vmatprep.subr.mxu0 0.0
      %628 = vmatpush1.msra.mxu0 %v587
      %629 = vmatprep.subr.mxu0 0.0
      %630 = vmatpush2.msra.mxu0 0.0
      %631 = vmatprep.subr.mxu0 0.0
      %632 = vmatpush2.msra.mxu0 0.0
      %633 = vmatprep.subr.mxu0 0.0
      %634 = vmatpush2.msra.mxu0 0.0
      %635 = vmatprep.subr.mxu0 0.0
      %636 = vmatpush2.msra.mxu0 0.0
      %637 = vmatprep.subr.mxu0 0.0
      %638 = vmatpush2.msra.mxu0 0.0
      %639 = vmatprep.subr.mxu0 0.0
      %640 = vmatpush2.msra.mxu0 0.0
      %641 = vmatprep.subr.mxu0 0.0
      %642 = vmatpush2.msra.mxu0 0.0
      %643 = vmatprep.subr.mxu0 0.0
      %644 = vmatpush2.msra.mxu0 0.0
      %645 = vmatprep.subr.mxu0 0.0
      %646 = vmatpush2.msra.mxu0 0.0
      %647 = vmatprep.subr.mxu0 0.0
      %648 = vmatpush2.msra.mxu0 0.0
      %649 = vmatprep.subr.mxu0 0.0
      %650 = vmatpush2.msra.mxu0 0.0
      %651 = vmatprep.subr.mxu0 0.0
      %652 = vmatpush2.msra.mxu0 0.0
      %653 = vmatprep.subr.mxu0 0.0
      %654 = vmatpush2.msra.mxu0 0.0
      %655 = vmatprep.subr.mxu0 0.0
      %656 = vmatpush2.msra.mxu0 0.0
      %657 = vmatprep.subr.mxu0 0.0
      %658 = vmatpush2.msra.mxu0 0.0
      %659 = vmatprep.subr.mxu0 0.0
      %660 = vmatpush2.msra.mxu0 0.0
      %661 = vmatprep.mubr.f32.mxu0 0.0
      %662 = vmatmul.mubr.f32.gmra.mxu0 %v592
      %v663 = vpop.f32.mrf.mxu0
      %v664 = vadd.f32 0.0, %v663
      %v665 = vpop.f32.mrf.mxu0
      %666 = vmatprep.mubr.f32.mxu0 0.0
      %667 = vmatmul.mubr.f32.gmra.mxu0 %v595
      %v668 = vpop.f32.mrf.mxu0
      %v669 = vadd.f32 0.0, %v668
      %v670 = vpop.f32.mrf.mxu0
      %671 = vdwg.mxu0
      %v672 = vld [vmem:[%s7] sm:$0x1]
      %v673 = vld [vmem:[%s8] sm:$0x1]
      %v674 = vlaneseq
      %v675 = vshrl.u32 %v674, 7
      %v676 = vsub.s32 0, %v675
      %v677 = vrot.slane %v672, %v676
      %v678 = vadd.f32 %v582, %v677
      %v679 = vlaneseq
      %v680 = vshrl.u32 %v679, 7
      %v681 = vsub.s32 0, %v680
      %v682 = vrot.slane %v673, %v681
      %v683 = vadd.f32 %v582, %v682
      %vm684 = vcmask 64512
      %v686 = vsel %vm684, %v683, 0
      %v689 = vsel %vm684, %v664, 0
      %v692 = vsel %vm684, %v669, 0
      %694 = vmatprep.subr.mxu0 0.0
      %695 = vmatpush1.xpose.msra.mxu0 0.0
      %696 = vmatprep.subr.mxu0 0.0
      %697 = vmatpush1.xpose.msra.mxu0 0.0
      %698 = vmatprep.subr.mxu0 0.0
      %699 = vmatpush1.xpose.msra.mxu0 0.0
      %700 = vmatprep.subr.mxu0 0.0
      %701 = vmatpush1.xpose.msra.mxu0 0.0
      %702 = vmatprep.subr.mxu0 0.0
      %703 = vmatpush1.xpose.msra.mxu0 0.0
      %704 = vmatprep.subr.mxu0 0.0
      %705 = vmatpush1.xpose.msra.mxu0 0.0
      %706 = vmatprep.subr.mxu0 0.0
      %707 = vmatpush1.xpose.msra.mxu0 0.0
      %708 = vmatprep.subr.mxu0 0.0
      %709 = vmatpush1.xpose.msra.mxu0 0.0
      %710 = vmatprep.subr.mxu0 0.0
      %711 = vmatpush1.xpose.msra.mxu0 0.0
      %712 = vmatprep.subr.mxu0 0.0
      %713 = vmatpush1.xpose.msra.mxu0 0.0
      %714 = vmatprep.subr.mxu0 0.0
      %715 = vmatpush1.xpose.msra.mxu0 0.0
      %716 = vmatprep.subr.mxu0 0.0
      %717 = vmatpush1.xpose.msra.mxu0 0.0
      %718 = vmatprep.subr.mxu0 0.0
      %719 = vmatpush1.xpose.msra.mxu0 0.0
      %720 = vmatprep.subr.mxu0 0.0
      %721 = vmatpush1.xpose.msra.mxu0 0.0
      %722 = vmatprep.subr.mxu0 0.0
      %723 = vmatpush1.xpose.msra.mxu0 %v692
      %724 = vmatprep.subr.mxu0 0.0
      %725 = vmatpush1.xpose.msra.mxu0 %v689
      %726 = vmatprep.subr.mxu0 0.0
      %727 = vmatpush2.xpose.msra.mxu0 0.0
      %728 = vmatprep.subr.mxu0 0.0
      %729 = vmatpush2.xpose.msra.mxu0 0.0
      %730 = vmatprep.subr.mxu0 0.0
      %731 = vmatpush2.xpose.msra.mxu0 0.0
      %732 = vmatprep.subr.mxu0 0.0
      %733 = vmatpush2.xpose.msra.mxu0 0.0
      %734 = vmatprep.subr.mxu0 0.0
      %735 = vmatpush2.xpose.msra.mxu0 0.0
      %736 = vmatprep.subr.mxu0 0.0
      %737 = vmatpush2.xpose.msra.mxu0 0.0
      %738 = vmatprep.subr.mxu0 0.0
      %739 = vmatpush2.xpose.msra.mxu0 0.0
      %740 = vmatprep.subr.mxu0 0.0
      %741 = vmatpush2.xpose.msra.mxu0 0.0
      %742 = vmatprep.subr.mxu0 0.0
      %743 = vmatpush2.xpose.msra.mxu0 0.0
      %744 = vmatprep.subr.mxu0 0.0
      %745 = vmatpush2.xpose.msra.mxu0 0.0
      %746 = vmatprep.subr.mxu0 0.0
      %747 = vmatpush2.xpose.msra.mxu0 0.0
      %748 = vmatprep.subr.mxu0 0.0
      %749 = vmatpush2.xpose.msra.mxu0 0.0
      %750 = vmatprep.subr.mxu0 0.0
      %751 = vmatpush2.xpose.msra.mxu0 0.0
      %752 = vmatprep.subr.mxu0 0.0
      %753 = vmatpush2.xpose.msra.mxu0 0.0
      %754 = vmatprep.subr.mxu0 0.0
      %755 = vmatpush2.xpose.msra.mxu0 0.0
      %756 = vmatprep.subr.mxu0 0.0
      %757 = vmatpush2.xpose.msra.mxu0 0.0
      %758 = vmatprep.mubr.f32.mxu0 0.0
      %759 = vmatmul.mubr.f32.gmra.mxu0 %v686
      %v760 = vpop.f32.mrf.mxu0
      %v761 = vadd.f32 0.0, %v760
      %v762 = vpop.f32.mrf.mxu0
      %763 = vdwg.mxu0
      %765 = vrot.lane.b32.xlu0 %v761, 121
      %v766 = vpop.permute.xlu0 %765
      %v768 = vrot.slane %v761, 1
      %769 = vrot.lane.b32.xlu0 %v768, 6
      %v770 = vpop.permute.xlu0 %769
      %vm772 = vcmask 39936
      %v773 = vsel %vm772, %v766, 0.0
      %vm774 = vcmask 48128
      %v775 = vsel %vm774, %v773, %v770
      %776 = vrot.lane.b32.xlu0 %v761, 122
      %v777 = vpop.permute.xlu0 %776
      %779 = vrot.lane.b32.xlu0 %v768, 7
      %v780 = vpop.permute.xlu0 %779
      %v782 = vsel %vm774, %v777, 0.0
      %vm783 = vcmask 56320
      %v784 = vsel %vm783, %v782, %v780
      %785 = vrot.lane.b32.xlu0 %v761, 123
      %v786 = vpop.permute.xlu0 %785
      %788 = vrot.lane.b32.xlu0 %v768, 8
      %v789 = vpop.permute.xlu0 %788
      %v791 = vsel %vm783, %v786, 0.0
      %v792 = vsel %vm684, %v791, %v789
      %793 = vrot.lane.b32.xlu0 %v761, 124
      %v794 = vpop.permute.xlu0 %793
      %796 = vrot.lane.b32.xlu0 %v768, 9
      %v797 = vpop.permute.xlu0 %796
      %v799 = vsel %vm684, %v794, 0.0
      %vm800 = vcmask 72704
      %v801 = vsel %vm800, %v799, %v797
      %802 = vrot.lane.b32.xlu0 %v761, 125
      %v803 = vpop.permute.xlu0 %802
      %805 = vrot.lane.b32.xlu0 %v768, 10
      %v806 = vpop.permute.xlu0 %805
      %v808 = vsel %vm800, %v803, 0.0
      %vm809 = vcmask 80896
      %v810 = vsel %vm809, %v808, %v806
      %811 = vrot.lane.b32.xlu0 %v761, 126
      %v812 = vpop.permute.xlu0 %811
      %814 = vrot.lane.b32.xlu0 %v768, 11
      %v815 = vpop.permute.xlu0 %814
      %v817 = vsel %vm809, %v812, 0.0
      %vm818 = vcmask 89088
      %v819 = vsel %vm818, %v817, %v815
      %820 = vrot.lane.b32.xlu0 %v761, 127
      %v821 = vpop.permute.xlu0 %820
      %v823 = vsel %vm818, %v821, 0.0
      %vm824 = vcmask 1040384
      %v825 = vsel %vm824, %v775, %v784
      %vm826 = vcmask 1041408
      %v827 = vsel %vm826, %v825, %v792
      %vm828 = vcmask 1042432
      %v829 = vsel %vm828, %v827, %v801
      %v830 = vsel %vm509, %v829, %v810
      %vm831 = vcmask 1044480
      %v832 = vsel %vm831, %v830, %v819
      %vm833 = vcmask 1045504
      %v834 = vsel %vm833, %v832, %v823
      %vm835 = vcmask 1046528
      %v836 = vsel %vm835, %v834, %v761
      %v838 = vsel %vm684, %v678, 0
      %v841 = vsel %vm684, %v495, 0
      %v844 = vsel %vm684, %v500, 0
      %846 = vmatprep.subr.mxu0 0.0
      %847 = vmatpush1.xpose.msra.mxu0 0.0
      %848 = vmatprep.subr.mxu0 0.0
      %849 = vmatpush1.xpose.msra.mxu0 0.0
      %850 = vmatprep.subr.mxu0 0.0
      %851 = vmatpush1.xpose.msra.mxu0 0.0
      %852 = vmatprep.subr.mxu0 0.0
      %853 = vmatpush1.xpose.msra.mxu0 0.0
      %854 = vmatprep.subr.mxu0 0.0
      %855 = vmatpush1.xpose.msra.mxu0 0.0
      %856 = vmatprep.subr.mxu0 0.0
      %857 = vmatpush1.xpose.msra.mxu0 0.0
      %858 = vmatprep.subr.mxu0 0.0
      %859 = vmatpush1.xpose.msra.mxu0 0.0
      %860 = vmatprep.subr.mxu0 0.0
      %861 = vmatpush1.xpose.msra.mxu0 0.0
      %862 = vmatprep.subr.mxu0 0.0
      %863 = vmatpush1.xpose.msra.mxu0 0.0
      %864 = vmatprep.subr.mxu0 0.0
      %865 = vmatpush1.xpose.msra.mxu0 0.0
      %866 = vmatprep.subr.mxu0 0.0
      %867 = vmatpush1.xpose.msra.mxu0 0.0
      %868 = vmatprep.subr.mxu0 0.0
      %869 = vmatpush1.xpose.msra.mxu0 0.0
      %870 = vmatprep.subr.mxu0 0.0
      %871 = vmatpush1.xpose.msra.mxu0 0.0
      %872 = vmatprep.subr.mxu0 0.0
      %873 = vmatpush1.xpose.msra.mxu0 0.0
      %874 = vmatprep.subr.mxu0 0.0
      %875 = vmatpush1.xpose.msra.mxu0 %v844
      %876 = vmatprep.subr.mxu0 0.0
      %877 = vmatpush1.xpose.msra.mxu0 %v841
      %878 = vmatprep.subr.mxu0 0.0
      %879 = vmatpush2.xpose.msra.mxu0 0.0
      %880 = vmatprep.subr.mxu0 0.0
      %881 = vmatpush2.xpose.msra.mxu0 0.0
      %882 = vmatprep.subr.mxu0 0.0
      %883 = vmatpush2.xpose.msra.mxu0 0.0
      %884 = vmatprep.subr.mxu0 0.0
      %885 = vmatpush2.xpose.msra.mxu0 0.0
      %886 = vmatprep.subr.mxu0 0.0
      %887 = vmatpush2.xpose.msra.mxu0 0.0
      %888 = vmatprep.subr.mxu0 0.0
      %889 = vmatpush2.xpose.msra.mxu0 0.0
      %890 = vmatprep.subr.mxu0 0.0
      %891 = vmatpush2.xpose.msra.mxu0 0.0
      %892 = vmatprep.subr.mxu0 0.0
      %893 = vmatpush2.xpose.msra.mxu0 0.0
      %894 = vmatprep.subr.mxu0 0.0
      %895 = vmatpush2.xpose.msra.mxu0 0.0
      %896 = vmatprep.subr.mxu0 0.0
      %897 = vmatpush2.xpose.msra.mxu0 0.0
      %898 = vmatprep.subr.mxu0 0.0
      %899 = vmatpush2.xpose.msra.mxu0 0.0
      %900 = vmatprep.subr.mxu0 0.0
      %901 = vmatpush2.xpose.msra.mxu0 0.0
      %902 = vmatprep.subr.mxu0 0.0
      %903 = vmatpush2.xpose.msra.mxu0 0.0
      %904 = vmatprep.subr.mxu0 0.0
      %905 = vmatpush2.xpose.msra.mxu0 0.0
      %906 = vmatprep.subr.mxu0 0.0
      %907 = vmatpush2.xpose.msra.mxu0 0.0
      %908 = vmatprep.subr.mxu0 0.0
      %909 = vmatpush2.xpose.msra.mxu0 0.0
      %910 = vmatprep.mubr.f32.mxu0 0.0
      %911 = vmatmul.mubr.f32.gmra.mxu0 %v838
      %v912 = vpop.f32.mrf.mxu0
      %v913 = vadd.f32 %v836, %v912
      %v914 = vpop.f32.mrf.mxu0
      %915 = vdwg.mxu0
      %v916 = vmul.f32 %v913, 0.35355338
      %vm917 = vcmask 97280
      %v918 = vsel %vm917, %v916, -inf
      %919 = vmax.xlane.f32.xlu0 %v918
      %v920 = vpop.xlane.xlu0 %919
      %v921 = vsub.f32 %v916, %v920
      %v922 = vmul.f32 %v921, 1.442695
      %v923 = vpow.pop %v922
      %v924 = vsel %vm917, %v923, 0.0
      %925 = vadd.xlane.f32.xlu0 %v924
      %v926 = vpop.xlane.xlu0 %925
      %v927 = vrcp.pop %v926
      %v928 = vmul.f32 %v923, %v927
      %929 = vrot.lane.b32.xlu0 %v495, 96
      %v930 = vpop.permute.xlu0 %929
      %931 = vrot.lane.b32.xlu0 %v500, 96
      %v932 = vpop.permute.xlu0 %931
      %v935 = vsel %vm917, %v928, 0
      %v937 = vsel %vm509, %v932, 0
      %939 = vmatprep.subr.mxu0 0.0
      %940 = vmatpush1.msra.mxu0 0.0
      %941 = vmatprep.subr.mxu0 0.0
      %942 = vmatpush1.msra.mxu0 0.0
      %943 = vmatprep.subr.mxu0 0.0
      %944 = vmatpush1.msra.mxu0 0.0
      %945 = vmatprep.subr.mxu0 0.0
      %946 = vmatpush1.msra.mxu0 0.0
      %947 = vmatprep.subr.mxu0 0.0
      %948 = vmatpush1.msra.mxu0 0.0
      %949 = vmatprep.subr.mxu0 0.0
      %950 = vmatpush1.msra.mxu0 0.0
      %951 = vmatprep.subr.mxu0 0.0
      %952 = vmatpush1.msra.mxu0 0.0
      %953 = vmatprep.subr.mxu0 0.0
      %954 = vmatpush1.msra.mxu0 0.0
      %955 = vmatprep.subr.mxu0 0.0
      %956 = vmatpush1.msra.mxu0 0.0
      %957 = vmatprep.subr.mxu0 0.0
      %958 = vmatpush1.msra.mxu0 0.0
      %959 = vmatprep.subr.mxu0 0.0
      %960 = vmatpush1.msra.mxu0 0.0
      %961 = vmatprep.subr.mxu0 0.0
      %962 = vmatpush1.msra.mxu0 0.0
      %963 = vmatprep.subr.mxu0 0.0
      %964 = vmatpush1.msra.mxu0 0.0
      %965 = vmatprep.subr.mxu0 0.0
      %966 = vmatpush1.msra.mxu0 0.0
      %967 = vmatprep.subr.mxu0 0.0
      %968 = vmatpush1.msra.mxu0 %v937
      %969 = vmatprep.subr.mxu0 0.0
      %970 = vmatpush1.msra.mxu0 %v930
      %971 = vmatprep.subr.mxu0 0.0
      %972 = vmatpush2.msra.mxu0 0.0
      %973 = vmatprep.subr.mxu0 0.0
      %974 = vmatpush2.msra.mxu0 0.0
      %975 = vmatprep.subr.mxu0 0.0
      %976 = vmatpush2.msra.mxu0 0.0
      %977 = vmatprep.subr.mxu0 0.0
      %978 = vmatpush2.msra.mxu0 0.0
      %979 = vmatprep.subr.mxu0 0.0
      %980 = vmatpush2.msra.mxu0 0.0
      %981 = vmatprep.subr.mxu0 0.0
      %982 = vmatpush2.msra.mxu0 0.0
      %983 = vmatprep.subr.mxu0 0.0
      %984 = vmatpush2.msra.mxu0 0.0
      %985 = vmatprep.subr.mxu0 0.0
      %986 = vmatpush2.msra.mxu0 0.0
      %987 = vmatprep.subr.mxu0 0.0
      %988 = vmatpush2.msra.mxu0 0.0
      %989 = vmatprep.subr.mxu0 0.0
      %990 = vmatpush2.msra.mxu0 0.0
      %991 = vmatprep.subr.mxu0 0.0
      %992 = vmatpush2.msra.mxu0 0.0
      %993 = vmatprep.subr.mxu0 0.0
      %994 = vmatpush2.msra.mxu0 0.0
      %995 = vmatprep.subr.mxu0 0.0
      %996 = vmatpush2.msra.mxu0 0.0
      %997 = vmatprep.subr.mxu0 0.0
      %998 = vmatpush2.msra.mxu0 0.0
      %999 = vmatprep.subr.mxu0 0.0
      %1000 = vmatpush2.msra.mxu0 0.0
      %1001 = vmatprep.subr.mxu0 0.0
      %1002 = vmatpush2.msra.mxu0 0.0
      %1003 = vmatprep.mubr.f32.mxu0 0.0
      %1004 = vmatmul.mubr.f32.gmra.mxu0 %v935
      %v1005 = vpop.f32.mrf.mxu0
      %v1006 = vadd.f32 0.0, %v1005
      %v1007 = vpop.f32.mrf.mxu0
      %1008 = vdwg.mxu0
      %v1009 = vld [vmem:[%s7 + $0x1] sm:$0x1]
      %v1010 = vld [vmem:[%s8 + $0x1] sm:$0x1]
      %v1011 = vlaneseq
      %v1012 = vshrl.u32 %v1011, 7
      %v1013 = vsub.s32 0, %v1012
      %v1014 = vrot.slane %v1009, %v1013
      %1016 = vrot.lane.b32.xlu0 %v1014, 8
      %v1017 = vpop.permute.xlu0 %1016
      %v1019 = vadd.f32 %v582, %v1017
      %v1020 = vlaneseq
      %v1021 = vshrl.u32 %v1020, 7
      %v1022 = vsub.s32 0, %v1021
      %v1023 = vrot.slane %v1010, %v1022
      %1025 = vrot.lane.b32.xlu0 %v1023, 8
      %v1026 = vpop.permute.xlu0 %1025
      %v1028 = vadd.f32 %v582, %v1026
      %1030 = vrot.lane.b32.xlu0 %v1028, 120
      %v1031 = vpop.permute.xlu0 %1030
      %1032 = vrot.lane.b32.xlu0 %v664, 120
      %v1033 = vpop.permute.xlu0 %1032
      %1034 = vrot.lane.b32.xlu0 %v669, 120
      %v1035 = vpop.permute.xlu0 %1034
      %v1036 = vsel %vm684, %v1031, 0
      %v1038 = vsel %vm684, %v1033, 0
      %v1040 = vsel %vm684, %v1035, 0
      %1042 = vmatprep.subr.mxu0 0.0
      %1043 = vmatpush1.xpose.msra.mxu0 0.0
      %1044 = vmatprep.subr.mxu0 0.0
      %1045 = vmatpush1.xpose.msra.mxu0 0.0
      %1046 = vmatprep.subr.mxu0 0.0
      %1047 = vmatpush1.xpose.msra.mxu0 0.0
      %1048 = vmatprep.subr.mxu0 0.0
      %1049 = vmatpush1.xpose.msra.mxu0 0.0
      %1050 = vmatprep.subr.mxu0 0.0
      %1051 = vmatpush1.xpose.msra.mxu0 0.0
      %1052 = vmatprep.subr.mxu0 0.0
      %1053 = vmatpush1.xpose.msra.mxu0 0.0
      %1054 = vmatprep.subr.mxu0 0.0
      %1055 = vmatpush1.xpose.msra.mxu0 0.0
      %1056 = vmatprep.subr.mxu0 0.0
      %1057 = vmatpush1.xpose.msra.mxu0 0.0
      %1058 = vmatprep.subr.mxu0 0.0
      %1059 = vmatpush1.xpose.msra.mxu0 0.0
      %1060 = vmatprep.subr.mxu0 0.0
      %1061 = vmatpush1.xpose.msra.mxu0 0.0
      %1062 = vmatprep.subr.mxu0 0.0
      %1063 = vmatpush1.xpose.msra.mxu0 0.0
      %1064 = vmatprep.subr.mxu0 0.0
      %1065 = vmatpush1.xpose.msra.mxu0 0.0
      %1066 = vmatprep.subr.mxu0 0.0
      %1067 = vmatpush1.xpose.msra.mxu0 0.0
      %1068 = vmatprep.subr.mxu0 0.0
      %1069 = vmatpush1.xpose.msra.mxu0 0.0
      %1070 = vmatprep.subr.mxu0 0.0
      %1071 = vmatpush1.xpose.msra.mxu0 %v1040
      %1072 = vmatprep.subr.mxu0 0.0
      %1073 = vmatpush1.xpose.msra.mxu0 %v1038
      %1074 = vmatprep.subr.mxu0 0.0
      %1075 = vmatpush2.xpose.msra.mxu0 0.0
      %1076 = vmatprep.subr.mxu0 0.0
      %1077 = vmatpush2.xpose.msra.mxu0 0.0
      %1078 = vmatprep.subr.mxu0 0.0
      %1079 = vmatpush2.xpose.msra.mxu0 0.0
      %1080 = vmatprep.subr.mxu0 0.0
      %1081 = vmatpush2.xpose.msra.mxu0 0.0
      %1082 = vmatprep.subr.mxu0 0.0
      %1083 = vmatpush2.xpose.msra.mxu0 0.0
      %1084 = vmatprep.subr.mxu0 0.0
      %1085 = vmatpush2.xpose.msra.mxu0 0.0
      %1086 = vmatprep.subr.mxu0 0.0
      %1087 = vmatpush2.xpose.msra.mxu0 0.0
      %1088 = vmatprep.subr.mxu0 0.0
      %1089 = vmatpush2.xpose.msra.mxu0 0.0
      %1090 = vmatprep.subr.mxu0 0.0
      %1091 = vmatpush2.xpose.msra.mxu0 0.0
      %1092 = vmatprep.subr.mxu0 0.0
      %1093 = vmatpush2.xpose.msra.mxu0 0.0
      %1094 = vmatprep.subr.mxu0 0.0
      %1095 = vmatpush2.xpose.msra.mxu0 0.0
      %1096 = vmatprep.subr.mxu0 0.0
      %1097 = vmatpush2.xpose.msra.mxu0 0.0
      %1098 = vmatprep.subr.mxu0 0.0
      %1099 = vmatpush2.xpose.msra.mxu0 0.0
      %1100 = vmatprep.subr.mxu0 0.0
      %1101 = vmatpush2.xpose.msra.mxu0 0.0
      %1102 = vmatprep.subr.mxu0 0.0
      %1103 = vmatpush2.xpose.msra.mxu0 0.0
      %1104 = vmatprep.subr.mxu0 0.0
      %1105 = vmatpush2.xpose.msra.mxu0 0.0
      %1106 = vmatprep.mubr.f32.mxu0 0.0
      %1107 = vmatmul.mubr.f32.gmra.mxu0 %v1036
      %v1108 = vpop.f32.mrf.mxu0
      %v1109 = vadd.f32 0.0, %v1108
      %v1110 = vpop.f32.mrf.mxu0
      %1111 = vdwg.mxu0
      %1113 = vrot.lane.b32.xlu0 %v1109, 121
      %v1114 = vpop.permute.xlu0 %1113
      %v1116 = vrot.slane %v1109, 1
      %1117 = vrot.lane.b32.xlu0 %v1116, 6
      %v1118 = vpop.permute.xlu0 %1117
      %v1120 = vsel %vm772, %v1114, 0.0
      %v1121 = vsel %vm774, %v1120, %v1118
      %1122 = vrot.lane.b32.xlu0 %v1109, 122
      %v1123 = vpop.permute.xlu0 %1122
      %1125 = vrot.lane.b32.xlu0 %v1116, 7
      %v1126 = vpop.permute.xlu0 %1125
      %v1128 = vsel %vm774, %v1123, 0.0
      %v1129 = vsel %vm783, %v1128, %v1126
      %1130 = vrot.lane.b32.xlu0 %v1109, 123
      %v1131 = vpop.permute.xlu0 %1130
      %1133 = vrot.lane.b32.xlu0 %v1116, 8
      %v1134 = vpop.permute.xlu0 %1133
      %v1136 = vsel %vm783, %v1131, 0.0
      %v1137 = vsel %vm684, %v1136, %v1134
      %1138 = vrot.lane.b32.xlu0 %v1109, 124
      %v1139 = vpop.permute.xlu0 %1138
      %1141 = vrot.lane.b32.xlu0 %v1116, 9
      %v1142 = vpop.permute.xlu0 %1141
      %v1144 = vsel %vm684, %v1139, 0.0
      %v1145 = vsel %vm800, %v1144, %v1142
      %1146 = vrot.lane.b32.xlu0 %v1109, 125
      %v1147 = vpop.permute.xlu0 %1146
      %1149 = vrot.lane.b32.xlu0 %v1116, 10
      %v1150 = vpop.permute.xlu0 %1149
      %v1152 = vsel %vm800, %v1147, 0.0
      %v1153 = vsel %vm809, %v1152, %v1150
      %1154 = vrot.lane.b32.xlu0 %v1109, 126
      %v1155 = vpop.permute.xlu0 %1154
      %1157 = vrot.lane.b32.xlu0 %v1116, 11
      %v1158 = vpop.permute.xlu0 %1157
      %v1160 = vsel %vm809, %v1155, 0.0
      %v1161 = vsel %vm818, %v1160, %v1158
      %1162 = vrot.lane.b32.xlu0 %v1109, 127
      %v1163 = vpop.permute.xlu0 %1162
      %v1165 = vsel %vm818, %v1163, 0.0
      %v1166 = vsel %vm824, %v1121, %v1129
      %v1167 = vsel %vm826, %v1166, %v1137
      %v1168 = vsel %vm828, %v1167, %v1145
      %v1169 = vsel %vm509, %v1168, %v1153
      %v1170 = vsel %vm831, %v1169, %v1161
      %v1171 = vsel %vm833, %v1170, %v1165
      %v1172 = vsel %vm835, %v1171, %v1109
      %1174 = vrot.lane.b32.xlu0 %v1019, 120
      %v1175 = vpop.permute.xlu0 %1174
      %1176 = vrot.lane.b32.xlu0 %v495, 120
      %v1177 = vpop.permute.xlu0 %1176
      %1178 = vrot.lane.b32.xlu0 %v500, 120
      %v1179 = vpop.permute.xlu0 %1178
      %v1180 = vsel %vm684, %v1175, 0
      %v1182 = vsel %vm684, %v1177, 0
      %v1184 = vsel %vm684, %v1179, 0
      %1186 = vmatprep.subr.mxu0 0.0
      %1187 = vmatpush1.xpose.msra.mxu0 0.0
      %1188 = vmatprep.subr.mxu0 0.0
      %1189 = vmatpush1.xpose.msra.mxu0 0.0
      %1190 = vmatprep.subr.mxu0 0.0
      %1191 = vmatpush1.xpose.msra.mxu0 0.0
      %1192 = vmatprep.subr.mxu0 0.0
      %1193 = vmatpush1.xpose.msra.mxu0 0.0
      %1194 = vmatprep.subr.mxu0 0.0
      %1195 = vmatpush1.xpose.msra.mxu0 0.0
      %1196 = vmatprep.subr.mxu0 0.0
      %1197 = vmatpush1.xpose.msra.mxu0 0.0
      %1198 = vmatprep.subr.mxu0 0.0
      %1199 = vmatpush1.xpose.msra.mxu0 0.0
      %1200 = vmatprep.subr.mxu0 0.0
      %1201 = vmatpush1.xpose.msra.mxu0 0.0
      %1202 = vmatprep.subr.mxu0 0.0
      %1203 = vmatpush1.xpose.msra.mxu0 0.0
      %1204 = vmatprep.subr.mxu0 0.0
      %1205 = vmatpush1.xpose.msra.mxu0 0.0
      %1206 = vmatprep.subr.mxu0 0.0
      %1207 = vmatpush1.xpose.msra.mxu0 0.0
      %1208 = vmatprep.subr.mxu0 0.0
      %1209 = vmatpush1.xpose.msra.mxu0 0.0
      %1210 = vmatprep.subr.mxu0 0.0
      %1211 = vmatpush1.xpose.msra.mxu0 0.0
      %1212 = vmatprep.subr.mxu0 0.0
      %1213 = vmatpush1.xpose.msra.mxu0 0.0
      %1214 = vmatprep.subr.mxu0 0.0
      %1215 = vmatpush1.xpose.msra.mxu0 %v1184
      %1216 = vmatprep.subr.mxu0 0.0
      %1217 = vmatpush1.xpose.msra.mxu0 %v1182
      %1218 = vmatprep.subr.mxu0 0.0
      %1219 = vmatpush2.xpose.msra.mxu0 0.0
      %1220 = vmatprep.subr.mxu0 0.0
      %1221 = vmatpush2.xpose.msra.mxu0 0.0
      %1222 = vmatprep.subr.mxu0 0.0
      %1223 = vmatpush2.xpose.msra.mxu0 0.0
      %1224 = vmatprep.subr.mxu0 0.0
      %1225 = vmatpush2.xpose.msra.mxu0 0.0
      %1226 = vmatprep.subr.mxu0 0.0
      %1227 = vmatpush2.xpose.msra.mxu0 0.0
      %1228 = vmatprep.subr.mxu0 0.0
      %1229 = vmatpush2.xpose.msra.mxu0 0.0
      %1230 = vmatprep.subr.mxu0 0.0
      %1231 = vmatpush2.xpose.msra.mxu0 0.0
      %1232 = vmatprep.subr.mxu0 0.0
      %1233 = vmatpush2.xpose.msra.mxu0 0.0
      %1234 = vmatprep.subr.mxu0 0.0
      %1235 = vmatpush2.xpose.msra.mxu0 0.0
      %1236 = vmatprep.subr.mxu0 0.0
      %1237 = vmatpush2.xpose.msra.mxu0 0.0
      %1238 = vmatprep.subr.mxu0 0.0
      %1239 = vmatpush2.xpose.msra.mxu0 0.0
      %1240 = vmatprep.subr.mxu0 0.0
      %1241 = vmatpush2.xpose.msra.mxu0 0.0
      %1242 = vmatprep.subr.mxu0 0.0
      %1243 = vmatpush2.xpose.msra.mxu0 0.0
      %1244 = vmatprep.subr.mxu0 0.0
      %1245 = vmatpush2.xpose.msra.mxu0 0.0
      %1246 = vmatprep.subr.mxu0 0.0
      %1247 = vmatpush2.xpose.msra.mxu0 0.0
      %1248 = vmatprep.subr.mxu0 0.0
      %1249 = vmatpush2.xpose.msra.mxu0 0.0
      %1250 = vmatprep.mubr.f32.mxu0 0.0
      %1251 = vmatmul.mubr.f32.gmra.mxu0 %v1180
      %v1252 = vpop.f32.mrf.mxu0
      %v1253 = vadd.f32 %v1172, %v1252
      %v1254 = vpop.f32.mrf.mxu0
      %1255 = vdwg.mxu0
      %v1256 = vmul.f32 %v1253, 0.35355338
      %v1257 = vsel %vm917, %v1256, -inf
      %1258 = vmax.xlane.f32.xlu0 %v1257
      %v1259 = vpop.xlane.xlu0 %1258
      %v1260 = vsub.f32 %v1256, %v1259
      %v1261 = vmul.f32 %v1260, 1.442695
      %v1262 = vpow.pop %v1261
      %v1263 = vsel %vm917, %v1262, 0.0
      %1264 = vadd.xlane.f32.xlu0 %v1263
      %v1265 = vpop.xlane.xlu0 %1264
      %v1266 = vrcp.pop %v1265
      %v1267 = vmul.f32 %v1262, %v1266
      %1268 = vrot.lane.b32.xlu0 %v495, 88
      %v1269 = vpop.permute.xlu0 %1268
      %1270 = vrot.lane.b32.xlu0 %v500, 88
      %v1271 = vpop.permute.xlu0 %1270
      %v1274 = vsel %vm917, %v1267, 0
      %v1276 = vsel %vm509, %v1271, 0
      %1278 = vmatprep.subr.mxu0 0.0
      %1279 = vmatpush1.msra.mxu0 0.0
      %1280 = vmatprep.subr.mxu0 0.0
      %1281 = vmatpush1.msra.mxu0 0.0
      %1282 = vmatprep.subr.mxu0 0.0
      %1283 = vmatpush1.msra.mxu0 0.0
      %1284 = vmatprep.subr.mxu0 0.0
      %1285 = vmatpush1.msra.mxu0 0.0
      %1286 = vmatprep.subr.mxu0 0.0
      %1287 = vmatpush1.msra.mxu0 0.0
      %1288 = vmatprep.subr.mxu0 0.0
      %1289 = vmatpush1.msra.mxu0 0.0
      %1290 = vmatprep.subr.mxu0 0.0
      %1291 = vmatpush1.msra.mxu0 0.0
      %1292 = vmatprep.subr.mxu0 0.0
      %1293 = vmatpush1.msra.mxu0 0.0
      %1294 = vmatprep.subr.mxu0 0.0
      %1295 = vmatpush1.msra.mxu0 0.0
      %1296 = vmatprep.subr.mxu0 0.0
      %1297 = vmatpush1.msra.mxu0 0.0
      %1298 = vmatprep.subr.mxu0 0.0
      %1299 = vmatpush1.msra.mxu0 0.0
      %1300 = vmatprep.subr.mxu0 0.0
      %1301 = vmatpush1.msra.mxu0 0.0
      %1302 = vmatprep.subr.mxu0 0.0
      %1303 = vmatpush1.msra.mxu0 0.0
      %1304 = vmatprep.subr.mxu0 0.0
      %1305 = vmatpush1.msra.mxu0 0.0
      %1306 = vmatprep.subr.mxu0 0.0
      %1307 = vmatpush1.msra.mxu0 %v1276
      %1308 = vmatprep.subr.mxu0 0.0
      %1309 = vmatpush1.msra.mxu0 %v1269
      %1310 = vmatprep.subr.mxu0 0.0
      %1311 = vmatpush2.msra.mxu0 0.0
      %1312 = vmatprep.subr.mxu0 0.0
      %1313 = vmatpush2.msra.mxu0 0.0
      %1314 = vmatprep.subr.mxu0 0.0
      %1315 = vmatpush2.msra.mxu0 0.0
      %1316 = vmatprep.subr.mxu0 0.0
      %1317 = vmatpush2.msra.mxu0 0.0
      %1318 = vmatprep.subr.mxu0 0.0
      %1319 = vmatpush2.msra.mxu0 0.0
      %1320 = vmatprep.subr.mxu0 0.0
      %1321 = vmatpush2.msra.mxu0 0.0
      %1322 = vmatprep.subr.mxu0 0.0
      %1323 = vmatpush2.msra.mxu0 0.0
      %1324 = vmatprep.subr.mxu0 0.0
      %1325 = vmatpush2.msra.mxu0 0.0
      %1326 = vmatprep.subr.mxu0 0.0
      %1327 = vmatpush2.msra.mxu0 0.0
      %1328 = vmatprep.subr.mxu0 0.0
      %1329 = vmatpush2.msra.mxu0 0.0
      %1330 = vmatprep.subr.mxu0 0.0
      %1331 = vmatpush2.msra.mxu0 0.0
      %1332 = vmatprep.subr.mxu0 0.0
      %1333 = vmatpush2.msra.mxu0 0.0
      %1334 = vmatprep.subr.mxu0 0.0
      %1335 = vmatpush2.msra.mxu0 0.0
      %1336 = vmatprep.subr.mxu0 0.0
      %1337 = vmatpush2.msra.mxu0 0.0
      %1338 = vmatprep.subr.mxu0 0.0
      %1339 = vmatpush2.msra.mxu0 0.0
      %1340 = vmatprep.subr.mxu0 0.0
      %1341 = vmatpush2.msra.mxu0 0.0
      %1342 = vmatprep.mubr.f32.mxu0 0.0
      %1343 = vmatmul.mubr.f32.gmra.mxu0 %v1274
      %v1344 = vpop.f32.mrf.mxu0
      %v1345 = vadd.f32 0.0, %v1344
      %v1346 = vpop.f32.mrf.mxu0
      %1347 = vdwg.mxu0
      %v1348 = vld [vmem:[%s7 + $0x2] sm:$0x1]
      %v1349 = vld [vmem:[%s8 + $0x2] sm:$0x1]
      %v1350 = vlaneseq
      %v1351 = vshrl.u32 %v1350, 7
      %v1352 = vsub.s32 0, %v1351
      %v1353 = vrot.slane %v1348, %v1352
      %1355 = vrot.lane.b32.xlu0 %v1353, 16
      %v1356 = vpop.permute.xlu0 %1355
      %v1358 = vadd.f32 %v582, %v1356
      %v1359 = vlaneseq
      %v1360 = vshrl.u32 %v1359, 7
      %v1361 = vsub.s32 0, %v1360
      %v1362 = vrot.slane %v1349, %v1361
      %1364 = vrot.lane.b32.xlu0 %v1362, 16
      %v1365 = vpop.permute.xlu0 %1364
      %v1367 = vadd.f32 %v582, %v1365
      %1369 = vrot.lane.b32.xlu0 %v1367, 112
      %v1370 = vpop.permute.xlu0 %1369
      %1371 = vrot.lane.b32.xlu0 %v664, 112
      %v1372 = vpop.permute.xlu0 %1371
      %1373 = vrot.lane.b32.xlu0 %v669, 112
      %v1374 = vpop.permute.xlu0 %1373
      %v1375 = vsel %vm684, %v1370, 0
      %v1377 = vsel %vm684, %v1372, 0
      %v1379 = vsel %vm684, %v1374, 0
      %1381 = vmatprep.subr.mxu0 0.0
      %1382 = vmatpush1.xpose.msra.mxu0 0.0
      %1383 = vmatprep.subr.mxu0 0.0
      %1384 = vmatpush1.xpose.msra.mxu0 0.0
      %1385 = vmatprep.subr.mxu0 0.0
      %1386 = vmatpush1.xpose.msra.mxu0 0.0
      %1387 = vmatprep.subr.mxu0 0.0
      %1388 = vmatpush1.xpose.msra.mxu0 0.0
      %1389 = vmatprep.subr.mxu0 0.0
      %1390 = vmatpush1.xpose.msra.mxu0 0.0
      %1391 = vmatprep.subr.mxu0 0.0
      %1392 = vmatpush1.xpose.msra.mxu0 0.0
      %1393 = vmatprep.subr.mxu0 0.0
      %1394 = vmatpush1.xpose.msra.mxu0 0.0
      %1395 = vmatprep.subr.mxu0 0.0
      %1396 = vmatpush1.xpose.msra.mxu0 0.0
      %1397 = vmatprep.subr.mxu0 0.0
      %1398 = vmatpush1.xpose.msra.mxu0 0.0
      %1399 = vmatprep.subr.mxu0 0.0
      %1400 = vmatpush1.xpose.msra.mxu0 0.0
      %1401 = vmatprep.subr.mxu0 0.0
      %1402 = vmatpush1.xpose.msra.mxu0 0.0
      %1403 = vmatprep.subr.mxu0 0.0
      %1404 = vmatpush1.xpose.msra.mxu0 0.0
      %1405 = vmatprep.subr.mxu0 0.0
      %1406 = vmatpush1.xpose.msra.mxu0 0.0
      %1407 = vmatprep.subr.mxu0 0.0
      %1408 = vmatpush1.xpose.msra.mxu0 0.0
      %1409 = vmatprep.subr.mxu0 0.0
      %1410 = vmatpush1.xpose.msra.mxu0 %v1379
      %1411 = vmatprep.subr.mxu0 0.0
      %1412 = vmatpush1.xpose.msra.mxu0 %v1377
      %1413 = vmatprep.subr.mxu0 0.0
      %1414 = vmatpush2.xpose.msra.mxu0 0.0
      %1415 = vmatprep.subr.mxu0 0.0
      %1416 = vmatpush2.xpose.msra.mxu0 0.0
      %1417 = vmatprep.subr.mxu0 0.0
      %1418 = vmatpush2.xpose.msra.mxu0 0.0
      %1419 = vmatprep.subr.mxu0 0.0
      %1420 = vmatpush2.xpose.msra.mxu0 0.0
      %1421 = vmatprep.subr.mxu0 0.0
      %1422 = vmatpush2.xpose.msra.mxu0 0.0
      %1423 = vmatprep.subr.mxu0 0.0
      %1424 = vmatpush2.xpose.msra.mxu0 0.0
      %1425 = vmatprep.subr.mxu0 0.0
      %1426 = vmatpush2.xpose.msra.mxu0 0.0
      %1427 = vmatprep.subr.mxu0 0.0
      %1428 = vmatpush2.xpose.msra.mxu0 0.0
      %1429 = vmatprep.subr.mxu0 0.0
      %1430 = vmatpush2.xpose.msra.mxu0 0.0
      %1431 = vmatprep.subr.mxu0 0.0
      %1432 = vmatpush2.xpose.msra.mxu0 0.0
      %1433 = vmatprep.subr.mxu0 0.0
      %1434 = vmatpush2.xpose.msra.mxu0 0.0
      %1435 = vmatprep.subr.mxu0 0.0
      %1436 = vmatpush2.xpose.msra.mxu0 0.0
      %1437 = vmatprep.subr.mxu0 0.0
      %1438 = vmatpush2.xpose.msra.mxu0 0.0
      %1439 = vmatprep.subr.mxu0 0.0
      %1440 = vmatpush2.xpose.msra.mxu0 0.0
      %1441 = vmatprep.subr.mxu0 0.0
      %1442 = vmatpush2.xpose.msra.mxu0 0.0
      %1443 = vmatprep.subr.mxu0 0.0
      %1444 = vmatpush2.xpose.msra.mxu0 0.0
      %1445 = vmatprep.mubr.f32.mxu0 0.0
      %1446 = vmatmul.mubr.f32.gmra.mxu0 %v1375
      %v1447 = vpop.f32.mrf.mxu0
      %v1448 = vadd.f32 0.0, %v1447
      %v1449 = vpop.f32.mrf.mxu0
      %1450 = vdwg.mxu0
      %1452 = vrot.lane.b32.xlu0 %v1448, 121
      %v1453 = vpop.permute.xlu0 %1452
      %v1455 = vrot.slane %v1448, 1
      %1456 = vrot.lane.b32.xlu0 %v1455, 6
      %v1457 = vpop.permute.xlu0 %1456
      %v1459 = vsel %vm772, %v1453, 0.0
      %v1460 = vsel %vm774, %v1459, %v1457
      %1461 = vrot.lane.b32.xlu0 %v1448, 122
      %v1462 = vpop.permute.xlu0 %1461
      %1464 = vrot.lane.b32.xlu0 %v1455, 7
      %v1465 = vpop.permute.xlu0 %1464
      %v1467 = vsel %vm774, %v1462, 0.0
      %v1468 = vsel %vm783, %v1467, %v1465
      %1469 = vrot.lane.b32.xlu0 %v1448, 123
      %v1470 = vpop.permute.xlu0 %1469
      %1472 = vrot.lane.b32.xlu0 %v1455, 8
      %v1473 = vpop.permute.xlu0 %1472
      %v1475 = vsel %vm783, %v1470, 0.0
      %v1476 = vsel %vm684, %v1475, %v1473
      %1477 = vrot.lane.b32.xlu0 %v1448, 124
      %v1478 = vpop.permute.xlu0 %1477
      %1480 = vrot.lane.b32.xlu0 %v1455, 9
      %v1481 = vpop.permute.xlu0 %1480
      %v1483 = vsel %vm684, %v1478, 0.0
      %v1484 = vsel %vm800, %v1483, %v1481
      %1485 = vrot.lane.b32.xlu0 %v1448, 125
      %v1486 = vpop.permute.xlu0 %1485
      %1488 = vrot.lane.b32.xlu0 %v1455, 10
      %v1489 = vpop.permute.xlu0 %1488
      %v1491 = vsel %vm800, %v1486, 0.0
      %v1492 = vsel %vm809, %v1491, %v1489
      %1493 = vrot.lane.b32.xlu0 %v1448, 126
      %v1494 = vpop.permute.xlu0 %1493
      %1496 = vrot.lane.b32.xlu0 %v1455, 11
      %v1497 = vpop.permute.xlu0 %1496
      %v1499 = vsel %vm809, %v1494, 0.0
      %v1500 = vsel %vm818, %v1499, %v1497
      %1501 = vrot.lane.b32.xlu0 %v1448, 127
      %v1502 = vpop.permute.xlu0 %1501
      %v1504 = vsel %vm818, %v1502, 0.0
      %v1505 = vsel %vm824, %v1460, %v1468
      %v1506 = vsel %vm826, %v1505, %v1476
      %v1507 = vsel %vm828, %v1506, %v1484
      %v1508 = vsel %vm509, %v1507, %v1492
      %v1509 = vsel %vm831, %v1508, %v1500
      %v1510 = vsel %vm833, %v1509, %v1504
      %v1511 = vsel %vm835, %v1510, %v1448
      %1513 = vrot.lane.b32.xlu0 %v1358, 112
      %v1514 = vpop.permute.xlu0 %1513
      %1515 = vrot.lane.b32.xlu0 %v495, 112
      %v1516 = vpop.permute.xlu0 %1515
      %1517 = vrot.lane.b32.xlu0 %v500, 112
      %v1518 = vpop.permute.xlu0 %1517
      %v1519 = vsel %vm684, %v1514, 0
      %v1521 = vsel %vm684, %v1516, 0
      %v1523 = vsel %vm684, %v1518, 0
      %1525 = vmatprep.subr.mxu0 0.0
      %1526 = vmatpush1.xpose.msra.mxu0 0.0
      %1527 = vmatprep.subr.mxu0 0.0
      %1528 = vmatpush1.xpose.msra.mxu0 0.0
      %1529 = vmatprep.subr.mxu0 0.0
      %1530 = vmatpush1.xpose.msra.mxu0 0.0
      %1531 = vmatprep.subr.mxu0 0.0
      %1532 = vmatpush1.xpose.msra.mxu0 0.0
      %1533 = vmatprep.subr.mxu0 0.0
      %1534 = vmatpush1.xpose.msra.mxu0 0.0
      %1535 = vmatprep.subr.mxu0 0.0
      %1536 = vmatpush1.xpose.msra.mxu0 0.0
      %1537 = vmatprep.subr.mxu0 0.0
      %1538 = vmatpush1.xpose.msra.mxu0 0.0
      %1539 = vmatprep.subr.mxu0 0.0
      %1540 = vmatpush1.xpose.msra.mxu0 0.0
      %1541 = vmatprep.subr.mxu0 0.0
      %1542 = vmatpush1.xpose.msra.mxu0 0.0
      %1543 = vmatprep.subr.mxu0 0.0
      %1544 = vmatpush1.xpose.msra.mxu0 0.0
      %1545 = vmatprep.subr.mxu0 0.0
      %1546 = vmatpush1.xpose.msra.mxu0 0.0
      %1547 = vmatprep.subr.mxu0 0.0
      %1548 = vmatpush1.xpose.msra.mxu0 0.0
      %1549 = vmatprep.subr.mxu0 0.0
      %1550 = vmatpush1.xpose.msra.mxu0 0.0
      %1551 = vmatprep.subr.mxu0 0.0
      %1552 = vmatpush1.xpose.msra.mxu0 0.0
      %1553 = vmatprep.subr.mxu0 0.0
      %1554 = vmatpush1.xpose.msra.mxu0 %v1523
      %1555 = vmatprep.subr.mxu0 0.0
      %1556 = vmatpush1.xpose.msra.mxu0 %v1521
      %1557 = vmatprep.subr.mxu0 0.0
      %1558 = vmatpush2.xpose.msra.mxu0 0.0
      %1559 = vmatprep.subr.mxu0 0.0
      %1560 = vmatpush2.xpose.msra.mxu0 0.0
      %1561 = vmatprep.subr.mxu0 0.0
      %1562 = vmatpush2.xpose.msra.mxu0 0.0
      %1563 = vmatprep.subr.mxu0 0.0
      %1564 = vmatpush2.xpose.msra.mxu0 0.0
      %1565 = vmatprep.subr.mxu0 0.0
      %1566 = vmatpush2.xpose.msra.mxu0 0.0
      %1567 = vmatprep.subr.mxu0 0.0
      %1568 = vmatpush2.xpose.msra.mxu0 0.0
      %1569 = vmatprep.subr.mxu0 0.0
      %1570 = vmatpush2.xpose.msra.mxu0 0.0
      %1571 = vmatprep.subr.mxu0 0.0
      %1572 = vmatpush2.xpose.msra.mxu0 0.0
      %1573 = vmatprep.subr.mxu0 0.0
      %1574 = vmatpush2.xpose.msra.mxu0 0.0
      %1575 = vmatprep.subr.mxu0 0.0
      %1576 = vmatpush2.xpose.msra.mxu0 0.0
      %1577 = vmatprep.subr.mxu0 0.0
      %1578 = vmatpush2.xpose.msra.mxu0 0.0
      %1579 = vmatprep.subr.mxu0 0.0
      %1580 = vmatpush2.xpose.msra.mxu0 0.0
      %1581 = vmatprep.subr.mxu0 0.0
      %1582 = vmatpush2.xpose.msra.mxu0 0.0
      %1583 = vmatprep.subr.mxu0 0.0
      %1584 = vmatpush2.xpose.msra.mxu0 0.0
      %1585 = vmatprep.subr.mxu0 0.0
      %1586 = vmatpush2.xpose.msra.mxu0 0.0
      %1587 = vmatprep.subr.mxu0 0.0
      %1588 = vmatpush2.xpose.msra.mxu0 0.0
      %1589 = vmatprep.mubr.f32.mxu0 0.0
      %1590 = vmatmul.mubr.f32.gmra.mxu0 %v1519
      %v1591 = vpop.f32.mrf.mxu0
      %v1592 = vadd.f32 %v1511, %v1591
      %v1593 = vpop.f32.mrf.mxu0
      %1594 = vdwg.mxu0
      %v1595 = vmul.f32 %v1592, 0.35355338
      %v1596 = vsel %vm917, %v1595, -inf
      %1597 = vmax.xlane.f32.xlu0 %v1596
      %v1598 = vpop.xlane.xlu0 %1597
      %v1599 = vsub.f32 %v1595, %v1598
      %v1600 = vmul.f32 %v1599, 1.442695
      %v1601 = vpow.pop %v1600
      %v1602 = vsel %vm917, %v1601, 0.0
      %1603 = vadd.xlane.f32.xlu0 %v1602
      %v1604 = vpop.xlane.xlu0 %1603
      %v1605 = vrcp.pop %v1604
      %v1606 = vmul.f32 %v1601, %v1605
      %1607 = vrot.lane.b32.xlu0 %v495, 80
      %v1608 = vpop.permute.xlu0 %1607
      %1609 = vrot.lane.b32.xlu0 %v500, 80
      %v1610 = vpop.permute.xlu0 %1609
      %v1613 = vsel %vm917, %v1606, 0
      %v1615 = vsel %vm509, %v1610, 0
      %1617 = vmatprep.subr.mxu0 0.0
      %1618 = vmatpush1.msra.mxu0 0.0
      %1619 = vmatprep.subr.mxu0 0.0
      %1620 = vmatpush1.msra.mxu0 0.0
      %1621 = vmatprep.subr.mxu0 0.0
      %1622 = vmatpush1.msra.mxu0 0.0
      %1623 = vmatprep.subr.mxu0 0.0
      %1624 = vmatpush1.msra.mxu0 0.0
      %1625 = vmatprep.subr.mxu0 0.0
      %1626 = vmatpush1.msra.mxu0 0.0
      %1627 = vmatprep.subr.mxu0 0.0
      %1628 = vmatpush1.msra.mxu0 0.0
      %1629 = vmatprep.subr.mxu0 0.0
      %1630 = vmatpush1.msra.mxu0 0.0
      %1631 = vmatprep.subr.mxu0 0.0
      %1632 = vmatpush1.msra.mxu0 0.0
      %1633 = vmatprep.subr.mxu0 0.0
      %1634 = vmatpush1.msra.mxu0 0.0
      %1635 = vmatprep.subr.mxu0 0.0
      %1636 = vmatpush1.msra.mxu0 0.0
      %1637 = vmatprep.subr.mxu0 0.0
      %1638 = vmatpush1.msra.mxu0 0.0
      %1639 = vmatprep.subr.mxu0 0.0
      %1640 = vmatpush1.msra.mxu0 0.0
      %1641 = vmatprep.subr.mxu0 0.0
      %1642 = vmatpush1.msra.mxu0 0.0
      %1643 = vmatprep.subr.mxu0 0.0
      %1644 = vmatpush1.msra.mxu0 0.0
      %1645 = vmatprep.subr.mxu0 0.0
      %1646 = vmatpush1.msra.mxu0 %v1615
      %1647 = vmatprep.subr.mxu0 0.0
      %1648 = vmatpush1.msra.mxu0 %v1608
      %1649 = vmatprep.subr.mxu0 0.0
      %1650 = vmatpush2.msra.mxu0 0.0
      %1651 = vmatprep.subr.mxu0 0.0
      %1652 = vmatpush2.msra.mxu0 0.0
      %1653 = vmatprep.subr.mxu0 0.0
      %1654 = vmatpush2.msra.mxu0 0.0
      %1655 = vmatprep.subr.mxu0 0.0
      %1656 = vmatpush2.msra.mxu0 0.0
      %1657 = vmatprep.subr.mxu0 0.0
      %1658 = vmatpush2.msra.mxu0 0.0
      %1659 = vmatprep.subr.mxu0 0.0
      %1660 = vmatpush2.msra.mxu0 0.0
      %1661 = vmatprep.subr.mxu0 0.0
      %1662 = vmatpush2.msra.mxu0 0.0
      %1663 = vmatprep.subr.mxu0 0.0
      %1664 = vmatpush2.msra.mxu0 0.0
      %1665 = vmatprep.subr.mxu0 0.0
      %1666 = vmatpush2.msra.mxu0 0.0
      %1667 = vmatprep.subr.mxu0 0.0
      %1668 = vmatpush2.msra.mxu0 0.0
      %1669 = vmatprep.subr.mxu0 0.0
      %1670 = vmatpush2.msra.mxu0 0.0
      %1671 = vmatprep.subr.mxu0 0.0
      %1672 = vmatpush2.msra.mxu0 0.0
      %1673 = vmatprep.subr.mxu0 0.0
      %1674 = vmatpush2.msra.mxu0 0.0
      %1675 = vmatprep.subr.mxu0 0.0
      %1676 = vmatpush2.msra.mxu0 0.0
      %1677 = vmatprep.subr.mxu0 0.0
      %1678 = vmatpush2.msra.mxu0 0.0
      %1679 = vmatprep.subr.mxu0 0.0
      %1680 = vmatpush2.msra.mxu0 0.0
      %1681 = vmatprep.mubr.f32.mxu0 0.0
      %1682 = vmatmul.mubr.f32.gmra.mxu0 %v1613
      %v1683 = vpop.f32.mrf.mxu0
      %v1684 = vadd.f32 0.0, %v1683
      %v1685 = vpop.f32.mrf.mxu0
      %1686 = vdwg.mxu0
      %v1687 = vld [vmem:[%s7 + $0x3] sm:$0x1]
      %v1688 = vld [vmem:[%s8 + $0x3] sm:$0x1]
      %v1689 = vlaneseq
      %v1690 = vshrl.u32 %v1689, 7
      %v1691 = vsub.s32 0, %v1690
      %v1692 = vrot.slane %v1687, %v1691
      %1694 = vrot.lane.b32.xlu0 %v1692, 24
      %v1695 = vpop.permute.xlu0 %1694
      %v1697 = vadd.f32 %v582, %v1695
      %v1698 = vlaneseq
      %v1699 = vshrl.u32 %v1698, 7
      %v1700 = vsub.s32 0, %v1699
      %v1701 = vrot.slane %v1688, %v1700
      %1703 = vrot.lane.b32.xlu0 %v1701, 24
      %v1704 = vpop.permute.xlu0 %1703
      %v1706 = vadd.f32 %v582, %v1704
      %1708 = vrot.lane.b32.xlu0 %v1706, 104
      %v1709 = vpop.permute.xlu0 %1708
      %1710 = vrot.lane.b32.xlu0 %v664, 104
      %v1711 = vpop.permute.xlu0 %1710
      %1712 = vrot.lane.b32.xlu0 %v669, 104
      %v1713 = vpop.permute.xlu0 %1712
      %v1714 = vsel %vm684, %v1709, 0
      %v1716 = vsel %vm684, %v1711, 0
      %v1718 = vsel %vm684, %v1713, 0
      %1720 = vmatprep.subr.mxu0 0.0
      %1721 = vmatpush1.xpose.msra.mxu0 0.0
      %1722 = vmatprep.subr.mxu0 0.0
      %1723 = vmatpush1.xpose.msra.mxu0 0.0
      %1724 = vmatprep.subr.mxu0 0.0
      %1725 = vmatpush1.xpose.msra.mxu0 0.0
      %1726 = vmatprep.subr.mxu0 0.0
      %1727 = vmatpush1.xpose.msra.mxu0 0.0
      %1728 = vmatprep.subr.mxu0 0.0
      %1729 = vmatpush1.xpose.msra.mxu0 0.0
      %1730 = vmatprep.subr.mxu0 0.0
      %1731 = vmatpush1.xpose.msra.mxu0 0.0
      %1732 = vmatprep.subr.mxu0 0.0
      %1733 = vmatpush1.xpose.msra.mxu0 0.0
      %1734 = vmatprep.subr.mxu0 0.0
      %1735 = vmatpush1.xpose.msra.mxu0 0.0
      %1736 = vmatprep.subr.mxu0 0.0
      %1737 = vmatpush1.xpose.msra.mxu0 0.0
      %1738 = vmatprep.subr.mxu0 0.0
      %1739 = vmatpush1.xpose.msra.mxu0 0.0
      %1740 = vmatprep.subr.mxu0 0.0
      %1741 = vmatpush1.xpose.msra.mxu0 0.0
      %1742 = vmatprep.subr.mxu0 0.0
      %1743 = vmatpush1.xpose.msra.mxu0 0.0
      %1744 = vmatprep.subr.mxu0 0.0
      %1745 = vmatpush1.xpose.msra.mxu0 0.0
      %1746 = vmatprep.subr.mxu0 0.0
      %1747 = vmatpush1.xpose.msra.mxu0 0.0
      %1748 = vmatprep.subr.mxu0 0.0
      %1749 = vmatpush1.xpose.msra.mxu0 %v1718
      %1750 = vmatprep.subr.mxu0 0.0
      %1751 = vmatpush1.xpose.msra.mxu0 %v1716
      %1752 = vmatprep.subr.mxu0 0.0
      %1753 = vmatpush2.xpose.msra.mxu0 0.0
      %1754 = vmatprep.subr.mxu0 0.0
      %1755 = vmatpush2.xpose.msra.mxu0 0.0
      %1756 = vmatprep.subr.mxu0 0.0
      %1757 = vmatpush2.xpose.msra.mxu0 0.0
      %1758 = vmatprep.subr.mxu0 0.0
      %1759 = vmatpush2.xpose.msra.mxu0 0.0
      %1760 = vmatprep.subr.mxu0 0.0
      %1761 = vmatpush2.xpose.msra.mxu0 0.0
      %1762 = vmatprep.subr.mxu0 0.0
      %1763 = vmatpush2.xpose.msra.mxu0 0.0
      %1764 = vmatprep.subr.mxu0 0.0
      %1765 = vmatpush2.xpose.msra.mxu0 0.0
      %1766 = vmatprep.subr.mxu0 0.0
      %1767 = vmatpush2.xpose.msra.mxu0 0.0
      %1768 = vmatprep.subr.mxu0 0.0
      %1769 = vmatpush2.xpose.msra.mxu0 0.0
      %1770 = vmatprep.subr.mxu0 0.0
      %1771 = vmatpush2.xpose.msra.mxu0 0.0
      %1772 = vmatprep.subr.mxu0 0.0
      %1773 = vmatpush2.xpose.msra.mxu0 0.0
      %1774 = vmatprep.subr.mxu0 0.0
      %1775 = vmatpush2.xpose.msra.mxu0 0.0
      %1776 = vmatprep.subr.mxu0 0.0
      %1777 = vmatpush2.xpose.msra.mxu0 0.0
      %1778 = vmatprep.subr.mxu0 0.0
      %1779 = vmatpush2.xpose.msra.mxu0 0.0
      %1780 = vmatprep.subr.mxu0 0.0
      %1781 = vmatpush2.xpose.msra.mxu0 0.0
      %1782 = vmatprep.subr.mxu0 0.0
      %1783 = vmatpush2.xpose.msra.mxu0 0.0
      %1784 = vmatprep.mubr.f32.mxu0 0.0
      %1785 = vmatmul.mubr.f32.gmra.mxu0 %v1714
      %v1786 = vpop.f32.mrf.mxu0
      %v1787 = vadd.f32 0.0, %v1786
      %v1788 = vpop.f32.mrf.mxu0
      %1789 = vdwg.mxu0
      %1791 = vrot.lane.b32.xlu0 %v1787, 121
      %v1792 = vpop.permute.xlu0 %1791
      %v1794 = vrot.slane %v1787, 1
      %1795 = vrot.lane.b32.xlu0 %v1794, 6
      %v1796 = vpop.permute.xlu0 %1795
      %v1798 = vsel %vm772, %v1792, 0.0
      %v1799 = vsel %vm774, %v1798, %v1796
      %1800 = vrot.lane.b32.xlu0 %v1787, 122
      %v1801 = vpop.permute.xlu0 %1800
      %1803 = vrot.lane.b32.xlu0 %v1794, 7
      %v1804 = vpop.permute.xlu0 %1803
      %v1806 = vsel %vm774, %v1801, 0.0
      %v1807 = vsel %vm783, %v1806, %v1804
      %1808 = vrot.lane.b32.xlu0 %v1787, 123
      %v1809 = vpop.permute.xlu0 %1808
      %1811 = vrot.lane.b32.xlu0 %v1794, 8
      %v1812 = vpop.permute.xlu0 %1811
      %v1814 = vsel %vm783, %v1809, 0.0
      %v1815 = vsel %vm684, %v1814, %v1812
      %1816 = vrot.lane.b32.xlu0 %v1787, 124
      %v1817 = vpop.permute.xlu0 %1816
      %1819 = vrot.lane.b32.xlu0 %v1794, 9
      %v1820 = vpop.permute.xlu0 %1819
      %v1822 = vsel %vm684, %v1817, 0.0
      %v1823 = vsel %vm800, %v1822, %v1820
      %1824 = vrot.lane.b32.xlu0 %v1787, 125
      %v1825 = vpop.permute.xlu0 %1824
      %1827 = vrot.lane.b32.xlu0 %v1794, 10
      %v1828 = vpop.permute.xlu0 %1827
      %v1830 = vsel %vm800, %v1825, 0.0
      %v1831 = vsel %vm809, %v1830, %v1828
      %1832 = vrot.lane.b32.xlu0 %v1787, 126
      %v1833 = vpop.permute.xlu0 %1832
      %1835 = vrot.lane.b32.xlu0 %v1794, 11
      %v1836 = vpop.permute.xlu0 %1835
      %v1838 = vsel %vm809, %v1833, 0.0
      %v1839 = vsel %vm818, %v1838, %v1836
      %1840 = vrot.lane.b32.xlu0 %v1787, 127
      %v1841 = vpop.permute.xlu0 %1840
      %v1843 = vsel %vm818, %v1841, 0.0
      %v1844 = vsel %vm824, %v1799, %v1807
      %v1845 = vsel %vm826, %v1844, %v1815
      %v1846 = vsel %vm828, %v1845, %v1823
      %v1847 = vsel %vm509, %v1846, %v1831
      %v1848 = vsel %vm831, %v1847, %v1839
      %v1849 = vsel %vm833, %v1848, %v1843
      %v1850 = vsel %vm835, %v1849, %v1787
      %1852 = vrot.lane.b32.xlu0 %v1697, 104
      %v1853 = vpop.permute.xlu0 %1852
      %1854 = vrot.lane.b32.xlu0 %v495, 104
      %v1855 = vpop.permute.xlu0 %1854
      %1856 = vrot.lane.b32.xlu0 %v500, 104
      %v1857 = vpop.permute.xlu0 %1856
      %v1858 = vsel %vm684, %v1853, 0
      %v1860 = vsel %vm684, %v1855, 0
      %v1862 = vsel %vm684, %v1857, 0
      %1864 = vmatprep.subr.mxu0 0.0
      %1865 = vmatpush1.xpose.msra.mxu0 0.0
      %1866 = vmatprep.subr.mxu0 0.0
      %1867 = vmatpush1.xpose.msra.mxu0 0.0
      %1868 = vmatprep.subr.mxu0 0.0
      %1869 = vmatpush1.xpose.msra.mxu0 0.0
      %1870 = vmatprep.subr.mxu0 0.0
      %1871 = vmatpush1.xpose.msra.mxu0 0.0
      %1872 = vmatprep.subr.mxu0 0.0
      %1873 = vmatpush1.xpose.msra.mxu0 0.0
      %1874 = vmatprep.subr.mxu0 0.0
      %1875 = vmatpush1.xpose.msra.mxu0 0.0
      %1876 = vmatprep.subr.mxu0 0.0
      %1877 = vmatpush1.xpose.msra.mxu0 0.0
      %1878 = vmatprep.subr.mxu0 0.0
      %1879 = vmatpush1.xpose.msra.mxu0 0.0
      %1880 = vmatprep.subr.mxu0 0.0
      %1881 = vmatpush1.xpose.msra.mxu0 0.0
      %1882 = vmatprep.subr.mxu0 0.0
      %1883 = vmatpush1.xpose.msra.mxu0 0.0
      %1884 = vmatprep.subr.mxu0 0.0
      %1885 = vmatpush1.xpose.msra.mxu0 0.0
      %1886 = vmatprep.subr.mxu0 0.0
      %1887 = vmatpush1.xpose.msra.mxu0 0.0
      %1888 = vmatprep.subr.mxu0 0.0
      %1889 = vmatpush1.xpose.msra.mxu0 0.0
      %1890 = vmatprep.subr.mxu0 0.0
      %1891 = vmatpush1.xpose.msra.mxu0 0.0
      %1892 = vmatprep.subr.mxu0 0.0
      %1893 = vmatpush1.xpose.msra.mxu0 %v1862
      %1894 = vmatprep.subr.mxu0 0.0
      %1895 = vmatpush1.xpose.msra.mxu0 %v1860
      %1896 = vmatprep.subr.mxu0 0.0
      %1897 = vmatpush2.xpose.msra.mxu0 0.0
      %1898 = vmatprep.subr.mxu0 0.0
      %1899 = vmatpush2.xpose.msra.mxu0 0.0
      %1900 = vmatprep.subr.mxu0 0.0
      %1901 = vmatpush2.xpose.msra.mxu0 0.0
      %1902 = vmatprep.subr.mxu0 0.0
      %1903 = vmatpush2.xpose.msra.mxu0 0.0
      %1904 = vmatprep.subr.mxu0 0.0
      %1905 = vmatpush2.xpose.msra.mxu0 0.0
      %1906 = vmatprep.subr.mxu0 0.0
      %1907 = vmatpush2.xpose.msra.mxu0 0.0
      %1908 = vmatprep.subr.mxu0 0.0
      %1909 = vmatpush2.xpose.msra.mxu0 0.0
      %1910 = vmatprep.subr.mxu0 0.0
      %1911 = vmatpush2.xpose.msra.mxu0 0.0
      %1912 = vmatprep.subr.mxu0 0.0
      %1913 = vmatpush2.xpose.msra.mxu0 0.0
      %1914 = vmatprep.subr.mxu0 0.0
      %1915 = vmatpush2.xpose.msra.mxu0 0.0
      %1916 = vmatprep.subr.mxu0 0.0
      %1917 = vmatpush2.xpose.msra.mxu0 0.0
      %1918 = vmatprep.subr.mxu0 0.0
      %1919 = vmatpush2.xpose.msra.mxu0 0.0
      %1920 = vmatprep.subr.mxu0 0.0
      %1921 = vmatpush2.xpose.msra.mxu0 0.0
      %1922 = vmatprep.subr.mxu0 0.0
      %1923 = vmatpush2.xpose.msra.mxu0 0.0
      %1924 = vmatprep.subr.mxu0 0.0
      %1925 = vmatpush2.xpose.msra.mxu0 0.0
      %1926 = vmatprep.subr.mxu0 0.0
      %1927 = vmatpush2.xpose.msra.mxu0 0.0
      %1928 = vmatprep.mubr.f32.mxu0 0.0
      %1929 = vmatmul.mubr.f32.gmra.mxu0 %v1858
      %v1930 = vpop.f32.mrf.mxu0
      %v1931 = vadd.f32 %v1850, %v1930
      %v1932 = vpop.f32.mrf.mxu0
      %1933 = vdwg.mxu0
      %v1934 = vmul.f32 %v1931, 0.35355338
      %v1935 = vsel %vm917, %v1934, -inf
      %1936 = vmax.xlane.f32.xlu0 %v1935
      %v1937 = vpop.xlane.xlu0 %1936
      %v1938 = vsub.f32 %v1934, %v1937
      %v1939 = vmul.f32 %v1938, 1.442695
      %v1940 = vpow.pop %v1939
      %v1941 = vsel %vm917, %v1940, 0.0
      %1942 = vadd.xlane.f32.xlu0 %v1941
      %v1943 = vpop.xlane.xlu0 %1942
      %v1944 = vrcp.pop %v1943
      %v1945 = vmul.f32 %v1940, %v1944
      %1946 = vrot.lane.b32.xlu0 %v495, 72
      %v1947 = vpop.permute.xlu0 %1946
      %1948 = vrot.lane.b32.xlu0 %v500, 72
      %v1949 = vpop.permute.xlu0 %1948
      %v1952 = vsel %vm917, %v1945, 0
      %v1954 = vsel %vm509, %v1949, 0
      %1956 = vmatprep.subr.mxu0 0.0
      %1957 = vmatpush1.msra.mxu0 0.0
      %1958 = vmatprep.subr.mxu0 0.0
      %1959 = vmatpush1.msra.mxu0 0.0
      %1960 = vmatprep.subr.mxu0 0.0
      %1961 = vmatpush1.msra.mxu0 0.0
      %1962 = vmatprep.subr.mxu0 0.0
      %1963 = vmatpush1.msra.mxu0 0.0
      %1964 = vmatprep.subr.mxu0 0.0
      %1965 = vmatpush1.msra.mxu0 0.0
      %1966 = vmatprep.subr.mxu0 0.0
      %1967 = vmatpush1.msra.mxu0 0.0
      %1968 = vmatprep.subr.mxu0 0.0
      %1969 = vmatpush1.msra.mxu0 0.0
      %1970 = vmatprep.subr.mxu0 0.0
      %1971 = vmatpush1.msra.mxu0 0.0
      %1972 = vmatprep.subr.mxu0 0.0
      %1973 = vmatpush1.msra.mxu0 0.0
      %1974 = vmatprep.subr.mxu0 0.0
      %1975 = vmatpush1.msra.mxu0 0.0
      %1976 = vmatprep.subr.mxu0 0.0
      %1977 = vmatpush1.msra.mxu0 0.0
      %1978 = vmatprep.subr.mxu0 0.0
      %1979 = vmatpush1.msra.mxu0 0.0
      %1980 = vmatprep.subr.mxu0 0.0
      %1981 = vmatpush1.msra.mxu0 0.0
      %1982 = vmatprep.subr.mxu0 0.0
      %1983 = vmatpush1.msra.mxu0 0.0
      %1984 = vmatprep.subr.mxu0 0.0
      %1985 = vmatpush1.msra.mxu0 %v1954
      %1986 = vmatprep.subr.mxu0 0.0
      %1987 = vmatpush1.msra.mxu0 %v1947
      %1988 = vmatprep.subr.mxu0 0.0
      %1989 = vmatpush2.msra.mxu0 0.0
      %1990 = vmatprep.subr.mxu0 0.0
      %1991 = vmatpush2.msra.mxu0 0.0
      %1992 = vmatprep.subr.mxu0 0.0
      %1993 = vmatpush2.msra.mxu0 0.0
      %1994 = vmatprep.subr.mxu0 0.0
      %1995 = vmatpush2.msra.mxu0 0.0
      %1996 = vmatprep.subr.mxu0 0.0
      %1997 = vmatpush2.msra.mxu0 0.0
      %1998 = vmatprep.subr.mxu0 0.0
      %1999 = vmatpush2.msra.mxu0 0.0
      %2000 = vmatprep.subr.mxu0 0.0
      %2001 = vmatpush2.msra.mxu0 0.0
      %2002 = vmatprep.subr.mxu0 0.0
      %2003 = vmatpush2.msra.mxu0 0.0
      %2004 = vmatprep.subr.mxu0 0.0
      %2005 = vmatpush2.msra.mxu0 0.0
      %2006 = vmatprep.subr.mxu0 0.0
      %2007 = vmatpush2.msra.mxu0 0.0
      %2008 = vmatprep.subr.mxu0 0.0
      %2009 = vmatpush2.msra.mxu0 0.0
      %2010 = vmatprep.subr.mxu0 0.0
      %2011 = vmatpush2.msra.mxu0 0.0
      %2012 = vmatprep.subr.mxu0 0.0
      %2013 = vmatpush2.msra.mxu0 0.0
      %2014 = vmatprep.subr.mxu0 0.0
      %2015 = vmatpush2.msra.mxu0 0.0
      %2016 = vmatprep.subr.mxu0 0.0
      %2017 = vmatpush2.msra.mxu0 0.0
      %2018 = vmatprep.subr.mxu0 0.0
      %2019 = vmatpush2.msra.mxu0 0.0
      %2020 = vmatprep.mubr.f32.mxu0 0.0
      %2021 = vmatmul.mubr.f32.gmra.mxu0 %v1952
      %v2022 = vpop.f32.mrf.mxu0
      %v2023 = vadd.f32 0.0, %v2022
      %v2024 = vpop.f32.mrf.mxu0
      %2025 = vdwg.mxu0
      %2027 = vrot.lane.b32.xlu0 %v1345, 8
      %v2028 = vpop.permute.xlu0 %2027
      %2031 = vrot.lane.b32.xlu0 %v1684, 16
      %v2032 = vpop.permute.xlu0 %2031
      %2035 = vrot.lane.b32.xlu0 %v2023, 24
      %v2036 = vpop.permute.xlu0 %2035
      %v2038 = vsel %vm684, %v1006, %v2028
      %vm2039 = vcmask 130048
      %v2040 = vsel %vm2039, %v2038, %v2032
      %vm2041 = vcmask 195584
      %v2042 = vsel %vm2041, %v2040, %v2036
      %v2043 = vld [vmem:[%s9] sm:$0xff]
      %v2044 = vld [vmem:[%s9 + $0x8] sm:$0xff]
      %v2045 = vld [vmem:[%s9 + $0x10] sm:$0xff]
      %v2046 = vld [vmem:[%s9 + $0x18] sm:$0xff]
      %v2048 = vsel %vm360, %v2042, 0
      %2050 = vmatprep.subr.mxu0 0.0
      %2051 = vmatpush1.msra.mxu0 0.0
      %2052 = vmatprep.subr.mxu0 0.0
      %2053 = vmatpush1.msra.mxu0 0.0
      %2054 = vmatprep.subr.mxu0 0.0
      %2055 = vmatpush1.msra.mxu0 0.0
      %2056 = vmatprep.subr.mxu0 0.0
      %2057 = vmatpush1.msra.mxu0 0.0
      %2058 = vmatprep.subr.mxu0 0.0
      %2059 = vmatpush1.msra.mxu0 0.0
      %2060 = vmatprep.subr.mxu0 0.0
      %2061 = vmatpush1.msra.mxu0 0.0
      %2062 = vmatprep.subr.mxu0 0.0
      %2063 = vmatpush1.msra.mxu0 0.0
      %2064 = vmatprep.subr.mxu0 0.0
      %2065 = vmatpush1.msra.mxu0 0.0
      %2066 = vmatprep.subr.mxu0 0.0
      %2067 = vmatpush1.msra.mxu0 0.0
      %2068 = vmatprep.subr.mxu0 0.0
      %2069 = vmatpush1.msra.mxu0 0.0
      %2070 = vmatprep.subr.mxu0 0.0
      %2071 = vmatpush1.msra.mxu0 0.0
      %2072 = vmatprep.subr.mxu0 0.0
      %2073 = vmatpush1.msra.mxu0 0.0
      %2074 = vmatprep.subr.mxu0 0.0
      %2075 = vmatpush1.msra.mxu0 %v2046
      %2076 = vmatprep.subr.mxu0 0.0
      %2077 = vmatpush1.msra.mxu0 %v2045
      %2078 = vmatprep.subr.mxu0 0.0
      %2079 = vmatpush1.msra.mxu0 %v2044
      %2080 = vmatprep.subr.mxu0 0.0
      %2081 = vmatpush1.msra.mxu0 %v2043
      %2082 = vmatprep.subr.mxu0 0.0
      %2083 = vmatpush2.msra.mxu0 0.0
      %2084 = vmatprep.subr.mxu0 0.0
      %2085 = vmatpush2.msra.mxu0 0.0
      %2086 = vmatprep.subr.mxu0 0.0
      %2087 = vmatpush2.msra.mxu0 0.0
      %2088 = vmatprep.subr.mxu0 0.0
      %2089 = vmatpush2.msra.mxu0 0.0
      %2090 = vmatprep.subr.mxu0 0.0
      %2091 = vmatpush2.msra.mxu0 0.0
      %2092 = vmatprep.subr.mxu0 0.0
      %2093 = vmatpush2.msra.mxu0 0.0
      %2094 = vmatprep.subr.mxu0 0.0
      %2095 = vmatpush2.msra.mxu0 0.0
      %2096 = vmatprep.subr.mxu0 0.0
      %2097 = vmatpush2.msra.mxu0 0.0
      %2098 = vmatprep.subr.mxu0 0.0
      %2099 = vmatpush2.msra.mxu0 0.0
      %2100 = vmatprep.subr.mxu0 0.0
      %2101 = vmatpush2.msra.mxu0 0.0
      %2102 = vmatprep.subr.mxu0 0.0
      %2103 = vmatpush2.msra.mxu0 0.0
      %2104 = vmatprep.subr.mxu0 0.0
      %2105 = vmatpush2.msra.mxu0 0.0
      %2106 = vmatprep.subr.mxu0 0.0
      %2107 = vmatpush2.msra.mxu0 0.0
      %2108 = vmatprep.subr.mxu0 0.0
      %2109 = vmatpush2.msra.mxu0 0.0
      %2110 = vmatprep.subr.mxu0 0.0
      %2111 = vmatpush2.msra.mxu0 0.0
      %2112 = vmatprep.subr.mxu0 0.0
      %2113 = vmatpush2.msra.mxu0 0.0
      %2114 = vmatprep.mubr.f32.mxu0 0.0
      %2115 = vmatmul.mubr.f32.gmra.mxu0 %v2048
      %v2116 = vpop.f32.mrf.mxu0
      %v2117 = vadd.f32 0.0, %v2116
      %v2118 = vpop.f32.mrf.mxu0
      %2119 = vdwg.mxu0
      %2120 = vst.msk [vmem:[%s357] sm:$0xff] %vm360, %v2117
      %p2121 = scmp.lt.s32.totalorder %s21, 1
      %s2122 = scalar_select %p2121, %s21, 1
      %s2123 = smul.addr %s2122, 8
      %s2124 = scalar_lea.vmem %s10, %s2123
      // Predicated region
      $region61: #{stable_transformer_layer.2} parent=59 // pred_check
        %p2125 = pneg %p254
      $region62: #{stable_transformer_layer.2} parent=59 // pred_check_branch
        %2127 = sbr.rel (%p2125) target = $region64
      $region63: #{stable_transformer_layer.2} parent=59 // pred_region
        _
      $region64: #{stable_transformer_layer.2} parent=59 // pred_fallthru
        _
    $region60: #{stable_transformer_layer.2} parent=5 // pred_fallthru
      _
    %p2128 = scmp.le.s32.totalorder 2, %s16
    // Predicated region
    $region65: #{stable_transformer_layer.2} parent=5 // pred_check
      %p2129 = pneg %p2128
    $region66: #{stable_transformer_layer.2} parent=5 // pred_check_branch
      %2131 = sbr.rel (%p2129) target = $region68
    $region67: #{stable_transformer_layer.2} parent=5 // pred_region
      %s2132 = ssub.s32 %s16, 2
      // Predicated region
      $region69: #{stable_transformer_layer.2} parent=67 // pred_check
        %p2133 = pneg %p260
      $region70: #{stable_transformer_layer.2} parent=67 // pred_check_branch
        %2135 = sbr.rel (%p2133) target = $region72
      $region71: #{stable_transformer_layer.2} parent=67 // pred_region
        %p2136 = scmp.lt.s32.totalorder %s22, 1
        %s2137 = scalar_select %p2136, %s22, 1
        %s2138 = smul.addr %s2137, 8
        %s2139 = scalar_lea.vmem %s10, %s2138
      $region72: #{stable_transformer_layer.2} parent=67 // pred_fallthru
        _
    $region68: #{stable_transformer_layer.2} parent=5 // pred_fallthru
      _
  $region6: #{stable_transformer_layer.2} parent=0 // loop_footer
    %s20 = sadd.s32 1, %s16
  $region7: #{stable_transformer_layer.2} parent=0 // loop_footer_branch
    %15 = sbr.rel target = $region3
  $region8: #{stable_transformer_layer.2} parent=0 // loop_exit
    _

</llo_original>
